<compile_context>
chip_gen: v7x
topology: tpu7x:2x2x1
jax: 0.10.0
libtpu: 0.0.40
codegen_flags: <defaults>
</compile_context>

<pallas_src>
import functools

import jax
import jax.numpy as jnp
from jax.experimental import pallas as pl
from jax.experimental.pallas import tpu as pltpu

_VMEM_LIMIT = 32 * 1024 * 1024
_NEG_SLOPE = 0.01          # nn.LeakyReLU default
_EPS = 1e-5                # nn.InstanceNorm3d default (biased variance)


def _round_up(x, m):
    return (x + m - 1) // m * m


def _lrelu(v):
    return jnp.where(v >= 0.0, v, _NEG_SLOPE * v)


# ---------------------------------------------------------------------------
# Kernel 1: conv1 (k=2, s=2) as one lane-dense matmul, fused with IN1 + LReLU.
#   out(Cout, L) = W(Cout, 8*Cin) @ patches(8*Cin, L) + b, then normalize over
#   the valid L columns, affine, LeakyReLU.
# ---------------------------------------------------------------------------
def _conv1_in_lrelu_kernel(p_ref, w_ref, b_ref, g_ref, be_ref, o_ref, *, valid_l):
    acc = jnp.dot(w_ref[...], p_ref[0], preferred_element_type=jnp.float32)
    acc = acc + b_ref[...]
    l_pad = acc.shape[-1]
    if valid_l == l_pad:
        mean = jnp.mean(acc, axis=-1, keepdims=True)
        var = jnp.mean(jnp.square(acc - mean), axis=-1, keepdims=True)
    else:
        mask = (jax.lax.broadcasted_iota(jnp.int32, (1, l_pad), 1) < valid_l
                ).astype(jnp.float32)
        inv = 1.0 / valid_l
        mean = jnp.sum(acc * mask, axis=-1, keepdims=True) * inv
        var = jnp.sum(jnp.square(acc - mean) * mask, axis=-1, keepdims=True) * inv
    y = (acc - mean) * jax.lax.rsqrt(var + _EPS) * g_ref[...] + be_ref[...]
    o_ref[0] = _lrelu(y).astype(o_ref.dtype)


def conv1_in_lrelu(patches, w_mat, bias, gamma, beta, valid_l):
    """patches: (N, 8*Cin, L_pad) -> (N, Cout, L_pad), IN over the valid_l columns."""
    N, K, L_pad = patches.shape
    Cout = w_mat.shape[0]
    kern = functools.partial(_conv1_in_lrelu_kernel, valid_l=valid_l)
    return pl.pallas_call(
        kern,
        out_shape=jax.ShapeDtypeStruct((N, Cout, L_pad), patches.dtype),
        grid=(N,),
        in_specs=[
            pl.BlockSpec((1, K, L_pad), lambda n: (n, 0, 0)),
            pl.BlockSpec((Cout, K), lambda n: (0, 0)),     # weights resident
            pl.BlockSpec((Cout, 1), lambda n: (0, 0)),     # bias
            pl.BlockSpec((Cout, 1), lambda n: (0, 0)),     # gamma
            pl.BlockSpec((Cout, 1), lambda n: (0, 0)),     # beta
        ],
        out_specs=pl.BlockSpec((1, Cout, L_pad), lambda n: (n, 0, 0)),
        compiler_params=pltpu.CompilerParams(
            dimension_semantics=("parallel",),
            vmem_limit_bytes=_VMEM_LIMIT,
        ),
    )(patches, w_mat, bias.reshape(Cout, 1), gamma.reshape(Cout, 1),
      beta.reshape(Cout, 1))


# ---------------------------------------------------------------------------
# Kernel 2: conv2 (3x3x3, stride 1, pad 1) as ONE stacked-window matmul,
# fused with IN2 + LReLU.  The 27 shifted lane windows of the flat padded
# activation are written into a (27*C, Lp_pad) VMEM scratch, then
# acc = W(Cout, 27C) @ win(27C, Lp_pad) + b.
# ---------------------------------------------------------------------------
def _conv2_in_lrelu_kernel(x_ref, w_ref, b_ref, g_ref, be_ref, m_ref,
                           o_ref, win_ref, *, offsets, lp_pad, c_in, inv_count):
    for t, off in enumerate(offsets):                      # 27 static shifts
        win_ref[pl.ds(t * c_in, c_in), :] = x_ref[0, :, pl.ds(off, lp_pad)]
    acc = jnp.dot(w_ref[...], win_ref[...], preferred_element_type=jnp.float32)
    acc = acc + b_ref[...]
    mask = m_ref[...]                                      # (1, Lp_pad) validity
    mean = jnp.sum(acc * mask, axis=-1, keepdims=True) * inv_count
    var = jnp.sum(jnp.square(acc - mean) * mask, axis=-1, keepdims=True) * inv_count
    y = (acc - mean) * jax.lax.rsqrt(var + _EPS) * g_ref[...] + be_ref[...]
    o_ref[0] = _lrelu(y).astype(o_ref.dtype)


def conv2_in_lrelu(y, w, b, gamma, beta):
    """y: (N, C, D2, H2, W2) -> (N, Cout, D2, H2, W2); 3x3x3 conv + IN + LReLU."""
    N, C, D2, H2, W2 = y.shape
    Cout = w.shape[0]
    Dp, Hp, Wp = D2 + 2, H2 + 2, W2 + 2
    Lp = Dp * Hp * Wp
    Lp_pad = _round_up(Lp, 128)                      # lane-dense output stores
    max_off = 2 * Hp * Wp + 2 * Wp + 2
    Lext = _round_up(Lp_pad + max_off, 128)          # shifted reads stay in-bounds

    yp = jnp.pad(y, ((0, 0), (0, 0), (1, 1), (1, 1), (1, 1)))
    flat = jnp.pad(yp.reshape(N, C, Lp), ((0, 0), (0, 0), (0, Lext - Lp)))

    offsets = tuple(kd * Hp * Wp + kh * Wp + kw
                    for kd in range(3) for kh in range(3) for kw in range(3))
    # W_stk[cout, t*C + c] = w[cout, c, kd, kh, kw] with t = kd*9 + kh*3 + kw
    w_stk = w.reshape(Cout, C, 27).transpose(0, 2, 1).reshape(Cout, 27 * C)

    # validity mask over the padded flat layout (valid outputs are d<D2, h<H2, w<W2)
    l = jnp.arange(Lp_pad)
    mask = ((l // (Hp * Wp) < D2) & ((l // Wp) % Hp < H2) & (l % Wp < W2))
    mask = mask.astype(flat.dtype).reshape(1, Lp_pad)

    kern = functools.partial(_conv2_in_lrelu_kernel, offsets=offsets,
                             lp_pad=Lp_pad, c_in=C,
                             inv_count=1.0 / (D2 * H2 * W2))
    out = pl.pallas_call(
        kern,
        out_shape=jax.ShapeDtypeStruct((N, Cout, Lp_pad), y.dtype),
        grid=(N,),
        in_specs=[
            pl.BlockSpec((1, C, Lext), lambda n: (n, 0, 0)),
            pl.BlockSpec((Cout, 27 * C), lambda n: (0, 0)),  # stacked weights resident
            pl.BlockSpec((Cout, 1), lambda n: (0, 0)),       # bias
            pl.BlockSpec((Cout, 1), lambda n: (0, 0)),       # gamma
            pl.BlockSpec((Cout, 1), lambda n: (0, 0)),       # beta
            pl.BlockSpec((1, Lp_pad), lambda n: (0, 0)),     # validity mask resident
        ],
        out_specs=pl.BlockSpec((1, Cout, Lp_pad), lambda n: (n, 0, 0)),
        scratch_shapes=[pltpu.VMEM((27 * C, Lp_pad), y.dtype)],
        compiler_params=pltpu.CompilerParams(
            dimension_semantics=("parallel",),
            vmem_limit_bytes=_VMEM_LIMIT,
        ),
    )(flat, w_stk, b.reshape(Cout, 1), gamma.reshape(Cout, 1),
      beta.reshape(Cout, 1), mask)
    return out[:, :, :Lp].reshape(N, Cout, Dp, Hp, Wp)[:, :, :D2, :H2, :W2]


# ---------------------------------------------------------------------------
# Bottleneck forward
# ---------------------------------------------------------------------------
def bottleneck_forward(x, params):
    w1, b1, g1, be1, w2, b2, g2, be2 = params
    N, Cin, D, H, W = x.shape
    Cout = w1.shape[0]

    # conv1 patch extraction (k=2, s=2 -> non-overlapping blocks).
    # PyTorch floors odd spatial dims for stride-2 conv -> crop to even first.
    D2, H2, W2 = D // 2, H // 2, W // 2
    x = x[:, :, :2 * D2, :2 * H2, :2 * W2]
    # TODO(synk): the stride-2 tap gather stays as an XLA reshape+transpose; folding
    # it into the kernel would need strided lane gathers with uncertain lowering.
    xr = x.reshape(N, Cin, D2, 2, H2, 2, W2, 2)
    xr = xr.transpose(0, 1, 3, 5, 7, 2, 4, 6)        # (N, C, kd, kh, kw, D2, H2, W2)
    L = D2 * H2 * W2
    L_pad = _round_up(L, 128)
    patches = xr.reshape(N, Cin * 8, L)
    if L_pad != L:
        patches = jnp.pad(patches, ((0, 0), (0, 0), (0, L_pad - L)))

    # conv1 + IN1 + LReLU (one kernel, lane-dense (N, Cout, L) output)
    y = conv1_in_lrelu(patches, w1.reshape(Cout, Cin * 8), b1, g1, be1, L)
    y = y[:, :, :L].reshape(N, Cout, D2, H2, W2)

    # conv2 + IN2 + LReLU (one kernel, single stacked K=27*C matmul)
    return conv2_in_lrelu(y, w2, b2, g2, be2)


# ---------------------------------------------------------------------------
# Pure-JAX reference (for verification)
# ---------------------------------------------------------------------------
def reference(x, params):
    w1, b1, g1, be1, w2, b2, g2, be2 = params
    dn = ("NCDHW", "OIDHW", "NCDHW")
    prec = jax.lax.Precision.HIGHEST

    def inorm(v, g, b):
        m = jnp.mean(v, axis=(2, 3, 4), keepdims=True)
        var = jnp.mean(jnp.square(v - m), axis=(2, 3, 4), keepdims=True)
        h = (v - m) * jax.lax.rsqrt(var + _EPS)
        return h * g.reshape(1, -1, 1, 1, 1) + b.reshape(1, -1, 1, 1, 1)

    y = jax.lax.conv_general_dilated(x, w1, (2, 2, 2), "VALID",
                                     dimension_numbers=dn, precision=prec)
    y = _lrelu(inorm(y + b1.reshape(1, -1, 1, 1, 1), g1, be1))
    z = jax.lax.conv_general_dilated(y, w2, (1, 1, 1), [(1, 1)] * 3,
                                     dimension_numbers=dn, precision=prec)
    return _lrelu(inorm(z + b2.reshape(1, -1, 1, 1, 1), g2, be2))


# ---------------------------------------------------------------------------
if __name__ == "__main__":
    N, chn, S = 2, 8, 16  # Bottleneck(chn): Cin == Cout == chn; spatial 16 -> 8
    key = jax.random.PRNGKey(0)
    ks = jax.random.split(key, 9)

    w1 = jax.random.normal(ks[0], (chn, chn, 2, 2, 2), jnp.float32) * 0.2
    b1 = jax.random.normal(ks[1], (chn,), jnp.float32) * 0.1
    g1 = 1.0 + 0.1 * jax.random.normal(ks[2], (chn,), jnp.float32)
    be1 = 0.1 * jax.random.normal(ks[3], (chn,), jnp.float32)
    w2 = jax.random.normal(ks[4], (chn, chn, 3, 3, 3), jnp.float32) * 0.1
    b2 = jax.random.normal(ks[5], (chn,), jnp.float32) * 0.1
    g2 = 1.0 + 0.1 * jax.random.normal(ks[6], (chn,), jnp.float32)
    be2 = 0.1 * jax.random.normal(ks[7], (chn,), jnp.float32)
    params = (w1, b1, g1, be1, w2, b2, g2, be2)

    x = jax.random.normal(ks[8], (N, chn, S, S, S), jnp.float32)

    out = jax.block_until_ready(jax.jit(bottleneck_forward)(x, params))
    ref = jax.block_until_ready(reference(x, params))

    assert out.shape == (N, chn, S // 2, S // 2, S // 2), out.shape
    err = float(jnp.max(jnp.abs(out - ref)))
    # tolerance covers TPU default-vs-highest matmul precision; structural errors are O(1)
    assert jnp.allclose(out, ref, atol=2e-2, rtol=2e-2), err
    print("KERNEL_OK")
</pallas_src>

<mosaic_0001>
module attributes {stable_mosaic.version = 11 : i64} {
  func.func @_conv1_in_lrelu_kernel(%arg0: i32, %arg1: memref<1x64x512xf32, #tpu.memory_space<vmem>>, %arg2: memref<8x64xf32, #tpu.memory_space<vmem>>, %arg3: memref<8x1xf32, #tpu.memory_space<vmem>>, %arg4: memref<8x1xf32, #tpu.memory_space<vmem>>, %arg5: memref<8x1xf32, #tpu.memory_space<vmem>>, %arg6: memref<1x8x512xf32, #tpu.memory_space<vmem>>) attributes {dimension_semantics = [#tpu.dimension_semantics<parallel>], iteration_bounds = array<i64: 2>, scalar_prefetch = 0 : i64, scratch_operands = 0 : i64, tpu.core_type = #tpu.core_type<tc>, window_params = [{transform_indices = @transform_0, window_bounds = array<i64: 1, 64, 512>}, {pipeline_mode = #tpu.pipeline_mode<synchronous>, transform_indices = @transform_1, window_bounds = array<i64: 8, 64>}, {pipeline_mode = #tpu.pipeline_mode<synchronous>, transform_indices = @transform_2, window_bounds = array<i64: 8, 1>}, {pipeline_mode = #tpu.pipeline_mode<synchronous>, transform_indices = @transform_3, window_bounds = array<i64: 8, 1>}, {pipeline_mode = #tpu.pipeline_mode<synchronous>, transform_indices = @transform_4, window_bounds = array<i64: 8, 1>}, {transform_indices = @transform_5, window_bounds = array<i64: 1, 8, 512>}]} {
    %c0 = arith.constant 0 : index
    %c0_0 = arith.constant 0 : index
    %0 = vector.load %arg2[%c0, %c0_0] : memref<8x64xf32, #tpu.memory_space<vmem>>, vector<8x64xf32>
    %c0_1 = arith.constant 0 : index
    %c0_2 = arith.constant 0 : index
    %c0_3 = arith.constant 0 : index
    %1 = vector.load %arg1[%c0_1, %c0_2, %c0_3] : memref<1x64x512xf32, #tpu.memory_space<vmem>>, vector<1x64x512xf32>
    %2 = vector.shape_cast %1 : vector<1x64x512xf32> to vector<64x512xf32>
    %cst = arith.constant dense<0.000000e+00> : vector<8x512xf32>
    %3 = tpu.matmul %0, %2, %cst {dimension_numbers = #tpu.dot_dimension_numbers<[1], [0], [0], [1], [0, 0, 1, 1], [], []>} : vector<8x64xf32>, vector<64x512xf32>, vector<8x512xf32> -> vector<8x512xf32>
    %c0_4 = arith.constant 0 : index
    %c0_5 = arith.constant 0 : index
    %4 = vector.load %arg3[%c0_4, %c0_5] : memref<8x1xf32, #tpu.memory_space<vmem>>, vector<8x1xf32>
    %5 = vector.broadcast %4 : vector<8x1xf32> to vector<8x512xf32>
    %6 = arith.addf %3, %5 : vector<8x512xf32>
    %cst_6 = arith.constant dense<0.000000e+00> : vector<8xf32>
    %7 = vector.multi_reduction <add>, %6, %cst_6 [1] : vector<8x512xf32> to vector<8xf32>
    %8 = vector.shape_cast %7 : vector<8xf32> to vector<8x1xf32>
    %cst_7 = arith.constant 5.120000e+02 : f32
    %9 = vector.broadcast %cst_7 : f32 to vector<8x1xf32>
    %10 = arith.divf %8, %9 : vector<8x1xf32>
    %11 = vector.broadcast %10 : vector<8x1xf32> to vector<8x512xf32>
    %12 = arith.subf %6, %11 : vector<8x512xf32>
    %13 = arith.mulf %12, %12 : vector<8x512xf32>
    %cst_8 = arith.constant dense<0.000000e+00> : vector<8xf32>
    %14 = vector.multi_reduction <add>, %13, %cst_8 [1] : vector<8x512xf32> to vector<8xf32>
    %15 = vector.shape_cast %14 : vector<8xf32> to vector<8x1xf32>
    %cst_9 = arith.constant 5.120000e+02 : f32
    %16 = vector.broadcast %cst_9 : f32 to vector<8x1xf32>
    %17 = arith.divf %15, %16 : vector<8x1xf32>
    %18 = vector.broadcast %10 : vector<8x1xf32> to vector<8x512xf32>
    %19 = arith.subf %6, %18 : vector<8x512xf32>
    %cst_10 = arith.constant 9.99999974E-6 : f32
    %20 = vector.broadcast %cst_10 : f32 to vector<8x1xf32>
    %21 = arith.addf %17, %20 : vector<8x1xf32>
    %22 = math.rsqrt %21 : vector<8x1xf32>
    %23 = vector.broadcast %22 : vector<8x1xf32> to vector<8x512xf32>
    %24 = arith.mulf %19, %23 : vector<8x512xf32>
    %c0_11 = arith.constant 0 : index
    %c0_12 = arith.constant 0 : index
    %25 = vector.load %arg4[%c0_11, %c0_12] : memref<8x1xf32, #tpu.memory_space<vmem>>, vector<8x1xf32>
    %26 = vector.broadcast %25 : vector<8x1xf32> to vector<8x512xf32>
    %27 = arith.mulf %24, %26 : vector<8x512xf32>
    %c0_13 = arith.constant 0 : index
    %c0_14 = arith.constant 0 : index
    %28 = vector.load %arg5[%c0_13, %c0_14] : memref<8x1xf32, #tpu.memory_space<vmem>>, vector<8x1xf32>
    %29 = vector.broadcast %28 : vector<8x1xf32> to vector<8x512xf32>
    %30 = arith.addf %27, %29 : vector<8x512xf32>
    %cst_15 = arith.constant 0.000000e+00 : f32
    %31 = vector.broadcast %cst_15 : f32 to vector<8x512xf32>
    %32 = arith.cmpf oge, %30, %31 : vector<8x512xf32>
    %cst_16 = arith.constant 0.00999999977 : f32
    %33 = vector.broadcast %cst_16 : f32 to vector<8x512xf32>
    %34 = arith.mulf %33, %30 : vector<8x512xf32>
    %35 = arith.select %32, %30, %34 : vector<8x512xi1>, vector<8x512xf32>
    %c0_17 = arith.constant 0 : index
    %c0_18 = arith.constant 0 : index
    %c0_19 = arith.constant 0 : index
    %36 = vector.load %arg6[%c0_17, %c0_18, %c0_19] : memref<1x8x512xf32, #tpu.memory_space<vmem>>, vector<1x8x512xf32>
    %37 = vector.shape_cast %36 : vector<1x8x512xf32> to vector<8x512xf32>
    %38 = vector.shape_cast %35 : vector<8x512xf32> to vector<1x8x512xf32>
    tpu.vector_store %arg6[%c0_17, %c0_18, %c0_19], %38 {strides = array<i32>} : memref<1x8x512xf32, #tpu.memory_space<vmem>>, vector<1x8x512xf32>,
    return
  }
  func.func @transform_0(%arg0: i32) -> (i32, i32, i32) {
    %c0_i32 = arith.constant 0 : i32
    %c0_i32_0 = arith.constant 0 : i32
    %c0_i32_1 = arith.constant 0 : i32
    return %arg0, %c0_i32, %c0_i32_0 : i32, i32, i32
  }
  func.func @transform_1(%arg0: i32) -> (i32, i32) {
    %c0_i32 = arith.constant 0 : i32
    %c0_i32_0 = arith.constant 0 : i32
    %c0_i32_1 = arith.constant 0 : i32
    return %c0_i32, %c0_i32_0 : i32, i32
  }
  func.func @transform_2(%arg0: i32) -> (i32, i32) {
    %c0_i32 = arith.constant 0 : i32
    %c0_i32_0 = arith.constant 0 : i32
    %c0_i32_1 = arith.constant 0 : i32
    return %c0_i32, %c0_i32_0 : i32, i32
  }
  func.func @transform_3(%arg0: i32) -> (i32, i32) {
    %c0_i32 = arith.constant 0 : i32
    %c0_i32_0 = arith.constant 0 : i32
    %c0_i32_1 = arith.constant 0 : i32
    return %c0_i32, %c0_i32_0 : i32, i32
  }
  func.func @transform_4(%arg0: i32) -> (i32, i32) {
    %c0_i32 = arith.constant 0 : i32
    %c0_i32_0 = arith.constant 0 : i32
    %c0_i32_1 = arith.constant 0 : i32
    return %c0_i32, %c0_i32_0 : i32, i32
  }
  func.func @transform_5(%arg0: i32) -> (i32, i32, i32) {
    %c0_i32 = arith.constant 0 : i32
    %c0_i32_0 = arith.constant 0 : i32
    %c0_i32_1 = arith.constant 0 : i32
    return %arg0, %c0_i32, %c0_i32_0 : i32, i32, i32
  }
}

module attributes {stable_mosaic.version = 11 : i64} {
  func.func @_conv2_in_lrelu_kernel(%arg0: i32, %arg1: memref<1x8x1280xf32, #tpu.memory_space<vmem>>, %arg2: memref<8x216xf32, #tpu.memory_space<vmem>>, %arg3: memref<8x1xf32, #tpu.memory_space<vmem>>, %arg4: memref<8x1xf32, #tpu.memory_space<vmem>>, %arg5: memref<8x1xf32, #tpu.memory_space<vmem>>, %arg6: memref<1x1024xf32, #tpu.memory_space<vmem>>, %arg7: memref<1x8x1024xf32, #tpu.memory_space<vmem>>, %arg8: memref<216x1024xf32, #tpu.memory_space<vmem>>) attributes {dimension_semantics = [#tpu.dimension_semantics<parallel>], iteration_bounds = array<i64: 2>, scalar_prefetch = 0 : i64, scratch_operands = 1 : i64, tpu.core_type = #tpu.core_type<tc>, window_params = [{transform_indices = @transform_0, window_bounds = array<i64: 1, 8, 1280>}, {pipeline_mode = #tpu.pipeline_mode<synchronous>, transform_indices = @transform_1, window_bounds = array<i64: 8, 216>}, {pipeline_mode = #tpu.pipeline_mode<synchronous>, transform_indices = @transform_2, window_bounds = array<i64: 8, 1>}, {pipeline_mode = #tpu.pipeline_mode<synchronous>, transform_indices = @transform_3, window_bounds = array<i64: 8, 1>}, {pipeline_mode = #tpu.pipeline_mode<synchronous>, transform_indices = @transform_4, window_bounds = array<i64: 8, 1>}, {pipeline_mode = #tpu.pipeline_mode<synchronous>, transform_indices = @transform_5, window_bounds = array<i64: 1, 1024>}, {transform_indices = @transform_6, window_bounds = array<i64: 1, 8, 1024>}]} {
    %c0 = arith.constant 0 : index
    %c0_0 = arith.constant 0 : index
    %c0_1 = arith.constant 0 : index
    %0 = vector.load %arg1[%c0, %c0_0, %c0_1] : memref<1x8x1280xf32, #tpu.memory_space<vmem>>, vector<1x8x1024xf32>
    %1 = vector.shape_cast %0 : vector<1x8x1024xf32> to vector<8x1024xf32>
    %c0_2 = arith.constant 0 : index
    %c0_3 = arith.constant 0 : index
    %2 = vector.load %arg8[%c0_2, %c0_3] : memref<216x1024xf32, #tpu.memory_space<vmem>>, vector<8x1024xf32>
    tpu.vector_store %arg8[%c0_2, %c0_3], %1 {strides = array<i32>} : memref<216x1024xf32, #tpu.memory_space<vmem>>, vector<8x1024xf32>,
    %c0_4 = arith.constant 0 : index
    %c0_5 = arith.constant 0 : index
    %c1 = arith.constant 1 : index
    %3 = vector.load %arg1[%c0_4, %c0_5, %c1] : memref<1x8x1280xf32, #tpu.memory_space<vmem>>, vector<1x8x1024xf32>
    %4 = vector.shape_cast %3 : vector<1x8x1024xf32> to vector<8x1024xf32>
    %c8 = arith.constant 8 : index
    %c0_6 = arith.constant 0 : index
    %5 = vector.load %arg8[%c8, %c0_6] : memref<216x1024xf32, #tpu.memory_space<vmem>>, vector<8x1024xf32>
    tpu.vector_store %arg8[%c8, %c0_6], %4 {strides = array<i32>} : memref<216x1024xf32, #tpu.memory_space<vmem>>, vector<8x1024xf32>,
    %c0_7 = arith.constant 0 : index
    %c0_8 = arith.constant 0 : index
    %c2 = arith.constant 2 : index
    %6 = vector.load %arg1[%c0_7, %c0_8, %c2] : memref<1x8x1280xf32, #tpu.memory_space<vmem>>, vector<1x8x1024xf32>
    %7 = vector.shape_cast %6 : vector<1x8x1024xf32> to vector<8x1024xf32>
    %c16 = arith.constant 16 : index
    %c0_9 = arith.constant 0 : index
    %8 = vector.load %arg8[%c16, %c0_9] : memref<216x1024xf32, #tpu.memory_space<vmem>>, vector<8x1024xf32>
    tpu.vector_store %arg8[%c16, %c0_9], %7 {strides = array<i32>} : memref<216x1024xf32, #tpu.memory_space<vmem>>, vector<8x1024xf32>,
    %c0_10 = arith.constant 0 : index
    %c0_11 = arith.constant 0 : index
    %c10 = arith.constant 10 : index
    %9 = vector.load %arg1[%c0_10, %c0_11, %c10] : memref<1x8x1280xf32, #tpu.memory_space<vmem>>, vector<1x8x1024xf32>
    %10 = vector.shape_cast %9 : vector<1x8x1024xf32> to vector<8x1024xf32>
    %c24 = arith.constant 24 : index
    %c0_12 = arith.constant 0 : index
    %11 = vector.load %arg8[%c24, %c0_12] : memref<216x1024xf32, #tpu.memory_space<vmem>>, vector<8x1024xf32>
    tpu.vector_store %arg8[%c24, %c0_12], %10 {strides = array<i32>} : memref<216x1024xf32, #tpu.memory_space<vmem>>, vector<8x1024xf32>,
    %c0_13 = arith.constant 0 : index
    %c0_14 = arith.constant 0 : index
    %c11 = arith.constant 11 : index
    %12 = vector.load %arg1[%c0_13, %c0_14, %c11] : memref<1x8x1280xf32, #tpu.memory_space<vmem>>, vector<1x8x1024xf32>
    %13 = vector.shape_cast %12 : vector<1x8x1024xf32> to vector<8x1024xf32>
    %c32 = arith.constant 32 : index
    %c0_15 = arith.constant 0 : index
    %14 = vector.load %arg8[%c32, %c0_15] : memref<216x1024xf32, #tpu.memory_space<vmem>>, vector<8x1024xf32>
    tpu.vector_store %arg8[%c32, %c0_15], %13 {strides = array<i32>} : memref<216x1024xf32, #tpu.memory_space<vmem>>, vector<8x1024xf32>,
    %c0_16 = arith.constant 0 : index
    %c0_17 = arith.constant 0 : index
    %c12 = arith.constant 12 : index
    %15 = vector.load %arg1[%c0_16, %c0_17, %c12] : memref<1x8x1280xf32, #tpu.memory_space<vmem>>, vector<1x8x1024xf32>
    %16 = vector.shape_cast %15 : vector<1x8x1024xf32> to vector<8x1024xf32>
    %c40 = arith.constant 40 : index
    %c0_18 = arith.constant 0 : index
    %17 = vector.load %arg8[%c40, %c0_18] : memref<216x1024xf32, #tpu.memory_space<vmem>>, vector<8x1024xf32>
    tpu.vector_store %arg8[%c40, %c0_18], %16 {strides = array<i32>} : memref<216x1024xf32, #tpu.memory_space<vmem>>, vector<8x1024xf32>,
    %c0_19 = arith.constant 0 : index
    %c0_20 = arith.constant 0 : index
    %c20 = arith.constant 20 : index
    %18 = vector.load %arg1[%c0_19, %c0_20, %c20] : memref<1x8x1280xf32, #tpu.memory_space<vmem>>, vector<1x8x1024xf32>
    %19 = vector.shape_cast %18 : vector<1x8x1024xf32> to vector<8x1024xf32>
    %c48 = arith.constant 48 : index
    %c0_21 = arith.constant 0 : index
    %20 = vector.load %arg8[%c48, %c0_21] : memref<216x1024xf32, #tpu.memory_space<vmem>>, vector<8x1024xf32>
    tpu.vector_store %arg8[%c48, %c0_21], %19 {strides = array<i32>} : memref<216x1024xf32, #tpu.memory_space<vmem>>, vector<8x1024xf32>,
    %c0_22 = arith.constant 0 : index
    %c0_23 = arith.constant 0 : index
    %c21 = arith.constant 21 : index
    %21 = vector.load %arg1[%c0_22, %c0_23, %c21] : memref<1x8x1280xf32, #tpu.memory_space<vmem>>, vector<1x8x1024xf32>
    %22 = vector.shape_cast %21 : vector<1x8x1024xf32> to vector<8x1024xf32>
    %c56 = arith.constant 56 : index
    %c0_24 = arith.constant 0 : index
    %23 = vector.load %arg8[%c56, %c0_24] : memref<216x1024xf32, #tpu.memory_space<vmem>>, vector<8x1024xf32>
    tpu.vector_store %arg8[%c56, %c0_24], %22 {strides = array<i32>} : memref<216x1024xf32, #tpu.memory_space<vmem>>, vector<8x1024xf32>,
    %c0_25 = arith.constant 0 : index
    %c0_26 = arith.constant 0 : index
    %c22 = arith.constant 22 : index
    %24 = vector.load %arg1[%c0_25, %c0_26, %c22] : memref<1x8x1280xf32, #tpu.memory_space<vmem>>, vector<1x8x1024xf32>
    %25 = vector.shape_cast %24 : vector<1x8x1024xf32> to vector<8x1024xf32>
    %c64 = arith.constant 64 : index
    %c0_27 = arith.constant 0 : index
    %26 = vector.load %arg8[%c64, %c0_27] : memref<216x1024xf32, #tpu.memory_space<vmem>>, vector<8x1024xf32>
    tpu.vector_store %arg8[%c64, %c0_27], %25 {strides = array<i32>} : memref<216x1024xf32, #tpu.memory_space<vmem>>, vector<8x1024xf32>,
    %c0_28 = arith.constant 0 : index
    %c0_29 = arith.constant 0 : index
    %c100 = arith.constant 100 : index
    %27 = vector.load %arg1[%c0_28, %c0_29, %c100] : memref<1x8x1280xf32, #tpu.memory_space<vmem>>, vector<1x8x1024xf32>
    %28 = vector.shape_cast %27 : vector<1x8x1024xf32> to vector<8x1024xf32>
    %c72 = arith.constant 72 : index
    %c0_30 = arith.constant 0 : index
    %29 = vector.load %arg8[%c72, %c0_30] : memref<216x1024xf32, #tpu.memory_space<vmem>>, vector<8x1024xf32>
    tpu.vector_store %arg8[%c72, %c0_30], %28 {strides = array<i32>} : memref<216x1024xf32, #tpu.memory_space<vmem>>, vector<8x1024xf32>,
    %c0_31 = arith.constant 0 : index
    %c0_32 = arith.constant 0 : index
    %c101 = arith.constant 101 : index
    %30 = vector.load %arg1[%c0_31, %c0_32, %c101] : memref<1x8x1280xf32, #tpu.memory_space<vmem>>, vector<1x8x1024xf32>
    %31 = vector.shape_cast %30 : vector<1x8x1024xf32> to vector<8x1024xf32>
    %c80 = arith.constant 80 : index
    %c0_33 = arith.constant 0 : index
    %32 = vector.load %arg8[%c80, %c0_33] : memref<216x1024xf32, #tpu.memory_space<vmem>>, vector<8x1024xf32>
    tpu.vector_store %arg8[%c80, %c0_33], %31 {strides = array<i32>} : memref<216x1024xf32, #tpu.memory_space<vmem>>, vector<8x1024xf32>,
    %c0_34 = arith.constant 0 : index
    %c0_35 = arith.constant 0 : index
    %c102 = arith.constant 102 : index
    %33 = vector.load %arg1[%c0_34, %c0_35, %c102] : memref<1x8x1280xf32, #tpu.memory_space<vmem>>, vector<1x8x1024xf32>
    %34 = vector.shape_cast %33 : vector<1x8x1024xf32> to vector<8x1024xf32>
    %c88 = arith.constant 88 : index
    %c0_36 = arith.constant 0 : index
    %35 = vector.load %arg8[%c88, %c0_36] : memref<216x1024xf32, #tpu.memory_space<vmem>>, vector<8x1024xf32>
    tpu.vector_store %arg8[%c88, %c0_36], %34 {strides = array<i32>} : memref<216x1024xf32, #tpu.memory_space<vmem>>, vector<8x1024xf32>,
    %c0_37 = arith.constant 0 : index
    %c0_38 = arith.constant 0 : index
    %c110 = arith.constant 110 : index
    %36 = vector.load %arg1[%c0_37, %c0_38, %c110] : memref<1x8x1280xf32, #tpu.memory_space<vmem>>, vector<1x8x1024xf32>
    %37 = vector.shape_cast %36 : vector<1x8x1024xf32> to vector<8x1024xf32>
    %c96 = arith.constant 96 : index
    %c0_39 = arith.constant 0 : index
    %38 = vector.load %arg8[%c96, %c0_39] : memref<216x1024xf32, #tpu.memory_space<vmem>>, vector<8x1024xf32>
    tpu.vector_store %arg8[%c96, %c0_39], %37 {strides = array<i32>} : memref<216x1024xf32, #tpu.memory_space<vmem>>, vector<8x1024xf32>,
    %c0_40 = arith.constant 0 : index
    %c0_41 = arith.constant 0 : index
    %c111 = arith.constant 111 : index
    %39 = vector.load %arg1[%c0_40, %c0_41, %c111] : memref<1x8x1280xf32, #tpu.memory_space<vmem>>, vector<1x8x1024xf32>
    %40 = vector.shape_cast %39 : vector<1x8x1024xf32> to vector<8x1024xf32>
    %c104 = arith.constant 104 : index
    %c0_42 = arith.constant 0 : index
    %41 = vector.load %arg8[%c104, %c0_42] : memref<216x1024xf32, #tpu.memory_space<vmem>>, vector<8x1024xf32>
    tpu.vector_store %arg8[%c104, %c0_42], %40 {strides = array<i32>} : memref<216x1024xf32, #tpu.memory_space<vmem>>, vector<8x1024xf32>,
    %c0_43 = arith.constant 0 : index
    %c0_44 = arith.constant 0 : index
    %c112 = arith.constant 112 : index
    %42 = vector.load %arg1[%c0_43, %c0_44, %c112] : memref<1x8x1280xf32, #tpu.memory_space<vmem>>, vector<1x8x1024xf32>
    %43 = vector.shape_cast %42 : vector<1x8x1024xf32> to vector<8x1024xf32>
    %c112_45 = arith.constant 112 : index
    %c0_46 = arith.constant 0 : index
    %44 = vector.load %arg8[%c112_45, %c0_46] : memref<216x1024xf32, #tpu.memory_space<vmem>>, vector<8x1024xf32>
    tpu.vector_store %arg8[%c112_45, %c0_46], %43 {strides = array<i32>} : memref<216x1024xf32, #tpu.memory_space<vmem>>, vector<8x1024xf32>,
    %c0_47 = arith.constant 0 : index
    %c0_48 = arith.constant 0 : index
    %c120 = arith.constant 120 : index
    %45 = vector.load %arg1[%c0_47, %c0_48, %c120] : memref<1x8x1280xf32, #tpu.memory_space<vmem>>, vector<1x8x1024xf32>
    %46 = vector.shape_cast %45 : vector<1x8x1024xf32> to vector<8x1024xf32>
    %c120_49 = arith.constant 120 : index
    %c0_50 = arith.constant 0 : index
    %47 = vector.load %arg8[%c120_49, %c0_50] : memref<216x1024xf32, #tpu.memory_space<vmem>>, vector<8x1024xf32>
    tpu.vector_store %arg8[%c120_49, %c0_50], %46 {strides = array<i32>} : memref<216x1024xf32, #tpu.memory_space<vmem>>, vector<8x1024xf32>,
    %c0_51 = arith.constant 0 : index
    %c0_52 = arith.constant 0 : index
    %c121 = arith.constant 121 : index
    %48 = vector.load %arg1[%c0_51, %c0_52, %c121] : memref<1x8x1280xf32, #tpu.memory_space<vmem>>, vector<1x8x1024xf32>
    %49 = vector.shape_cast %48 : vector<1x8x1024xf32> to vector<8x1024xf32>
    %c128 = arith.constant 128 : index
    %c0_53 = arith.constant 0 : index
    %50 = vector.load %arg8[%c128, %c0_53] : memref<216x1024xf32, #tpu.memory_space<vmem>>, vector<8x1024xf32>
    tpu.vector_store %arg8[%c128, %c0_53], %49 {strides = array<i32>} : memref<216x1024xf32, #tpu.memory_space<vmem>>, vector<8x1024xf32>,
    %c0_54 = arith.constant 0 : index
    %c0_55 = arith.constant 0 : index
    %c122 = arith.constant 122 : index
    %51 = vector.load %arg1[%c0_54, %c0_55, %c122] : memref<1x8x1280xf32, #tpu.memory_space<vmem>>, vector<1x8x1024xf32>
    %52 = vector.shape_cast %51 : vector<1x8x1024xf32> to vector<8x1024xf32>
    %c136 = arith.constant 136 : index
    %c0_56 = arith.constant 0 : index
    %53 = vector.load %arg8[%c136, %c0_56] : memref<216x1024xf32, #tpu.memory_space<vmem>>, vector<8x1024xf32>
    tpu.vector_store %arg8[%c136, %c0_56], %52 {strides = array<i32>} : memref<216x1024xf32, #tpu.memory_space<vmem>>, vector<8x1024xf32>,
    %c0_57 = arith.constant 0 : index
    %c0_58 = arith.constant 0 : index
    %c200 = arith.constant 200 : index
    %54 = vector.load %arg1[%c0_57, %c0_58, %c200] : memref<1x8x1280xf32, #tpu.memory_space<vmem>>, vector<1x8x1024xf32>
    %55 = vector.shape_cast %54 : vector<1x8x1024xf32> to vector<8x1024xf32>
    %c144 = arith.constant 144 : index
    %c0_59 = arith.constant 0 : index
    %56 = vector.load %arg8[%c144, %c0_59] : memref<216x1024xf32, #tpu.memory_space<vmem>>, vector<8x1024xf32>
    tpu.vector_store %arg8[%c144, %c0_59], %55 {strides = array<i32>} : memref<216x1024xf32, #tpu.memory_space<vmem>>, vector<8x1024xf32>,
    %c0_60 = arith.constant 0 : index
    %c0_61 = arith.constant 0 : index
    %c201 = arith.constant 201 : index
    %57 = vector.load %arg1[%c0_60, %c0_61, %c201] : memref<1x8x1280xf32, #tpu.memory_space<vmem>>, vector<1x8x1024xf32>
    %58 = vector.shape_cast %57 : vector<1x8x1024xf32> to vector<8x1024xf32>
    %c152 = arith.constant 152 : index
    %c0_62 = arith.constant 0 : index
    %59 = vector.load %arg8[%c152, %c0_62] : memref<216x1024xf32, #tpu.memory_space<vmem>>, vector<8x1024xf32>
    tpu.vector_store %arg8[%c152, %c0_62], %58 {strides = array<i32>} : memref<216x1024xf32, #tpu.memory_space<vmem>>, vector<8x1024xf32>,
    %c0_63 = arith.constant 0 : index
    %c0_64 = arith.constant 0 : index
    %c202 = arith.constant 202 : index
    %60 = vector.load %arg1[%c0_63, %c0_64, %c202] : memref<1x8x1280xf32, #tpu.memory_space<vmem>>, vector<1x8x1024xf32>
    %61 = vector.shape_cast %60 : vector<1x8x1024xf32> to vector<8x1024xf32>
    %c160 = arith.constant 160 : index
    %c0_65 = arith.constant 0 : index
    %62 = vector.load %arg8[%c160, %c0_65] : memref<216x1024xf32, #tpu.memory_space<vmem>>, vector<8x1024xf32>
    tpu.vector_store %arg8[%c160, %c0_65], %61 {strides = array<i32>} : memref<216x1024xf32, #tpu.memory_space<vmem>>, vector<8x1024xf32>,
    %c0_66 = arith.constant 0 : index
    %c0_67 = arith.constant 0 : index
    %c210 = arith.constant 210 : index
    %63 = vector.load %arg1[%c0_66, %c0_67, %c210] : memref<1x8x1280xf32, #tpu.memory_space<vmem>>, vector<1x8x1024xf32>
    %64 = vector.shape_cast %63 : vector<1x8x1024xf32> to vector<8x1024xf32>
    %c168 = arith.constant 168 : index
    %c0_68 = arith.constant 0 : index
    %65 = vector.load %arg8[%c168, %c0_68] : memref<216x1024xf32, #tpu.memory_space<vmem>>, vector<8x1024xf32>
    tpu.vector_store %arg8[%c168, %c0_68], %64 {strides = array<i32>} : memref<216x1024xf32, #tpu.memory_space<vmem>>, vector<8x1024xf32>,
    %c0_69 = arith.constant 0 : index
    %c0_70 = arith.constant 0 : index
    %c211 = arith.constant 211 : index
    %66 = vector.load %arg1[%c0_69, %c0_70, %c211] : memref<1x8x1280xf32, #tpu.memory_space<vmem>>, vector<1x8x1024xf32>
    %67 = vector.shape_cast %66 : vector<1x8x1024xf32> to vector<8x1024xf32>
    %c176 = arith.constant 176 : index
    %c0_71 = arith.constant 0 : index
    %68 = vector.load %arg8[%c176, %c0_71] : memref<216x1024xf32, #tpu.memory_space<vmem>>, vector<8x1024xf32>
    tpu.vector_store %arg8[%c176, %c0_71], %67 {strides = array<i32>} : memref<216x1024xf32, #tpu.memory_space<vmem>>, vector<8x1024xf32>,
    %c0_72 = arith.constant 0 : index
    %c0_73 = arith.constant 0 : index
    %c212 = arith.constant 212 : index
    %69 = vector.load %arg1[%c0_72, %c0_73, %c212] : memref<1x8x1280xf32, #tpu.memory_space<vmem>>, vector<1x8x1024xf32>
    %70 = vector.shape_cast %69 : vector<1x8x1024xf32> to vector<8x1024xf32>
    %c184 = arith.constant 184 : index
    %c0_74 = arith.constant 0 : index
    %71 = vector.load %arg8[%c184, %c0_74] : memref<216x1024xf32, #tpu.memory_space<vmem>>, vector<8x1024xf32>
    tpu.vector_store %arg8[%c184, %c0_74], %70 {strides = array<i32>} : memref<216x1024xf32, #tpu.memory_space<vmem>>, vector<8x1024xf32>,
    %c0_75 = arith.constant 0 : index
    %c0_76 = arith.constant 0 : index
    %c220 = arith.constant 220 : index
    %72 = vector.load %arg1[%c0_75, %c0_76, %c220] : memref<1x8x1280xf32, #tpu.memory_space<vmem>>, vector<1x8x1024xf32>
    %73 = vector.shape_cast %72 : vector<1x8x1024xf32> to vector<8x1024xf32>
    %c192 = arith.constant 192 : index
    %c0_77 = arith.constant 0 : index
    %74 = vector.load %arg8[%c192, %c0_77] : memref<216x1024xf32, #tpu.memory_space<vmem>>, vector<8x1024xf32>
    tpu.vector_store %arg8[%c192, %c0_77], %73 {strides = array<i32>} : memref<216x1024xf32, #tpu.memory_space<vmem>>, vector<8x1024xf32>,
    %c0_78 = arith.constant 0 : index
    %c0_79 = arith.constant 0 : index
    %c221 = arith.constant 221 : index
    %75 = vector.load %arg1[%c0_78, %c0_79, %c221] : memref<1x8x1280xf32, #tpu.memory_space<vmem>>, vector<1x8x1024xf32>
    %76 = vector.shape_cast %75 : vector<1x8x1024xf32> to vector<8x1024xf32>
    %c200_80 = arith.constant 200 : index
    %c0_81 = arith.constant 0 : index
    %77 = vector.load %arg8[%c200_80, %c0_81] : memref<216x1024xf32, #tpu.memory_space<vmem>>, vector<8x1024xf32>
    tpu.vector_store %arg8[%c200_80, %c0_81], %76 {strides = array<i32>} : memref<216x1024xf32, #tpu.memory_space<vmem>>, vector<8x1024xf32>,
    %c0_82 = arith.constant 0 : index
    %c0_83 = arith.constant 0 : index
    %c222 = arith.constant 222 : index
    %78 = vector.load %arg1[%c0_82, %c0_83, %c222] : memref<1x8x1280xf32, #tpu.memory_space<vmem>>, vector<1x8x1024xf32>
    %79 = vector.shape_cast %78 : vector<1x8x1024xf32> to vector<8x1024xf32>
    %c208 = arith.constant 208 : index
    %c0_84 = arith.constant 0 : index
    %80 = vector.load %arg8[%c208, %c0_84] : memref<216x1024xf32, #tpu.memory_space<vmem>>, vector<8x1024xf32>
    tpu.vector_store %arg8[%c208, %c0_84], %79 {strides = array<i32>} : memref<216x1024xf32, #tpu.memory_space<vmem>>, vector<8x1024xf32>,
    %c0_85 = arith.constant 0 : index
    %c0_86 = arith.constant 0 : index
    %81 = vector.load %arg2[%c0_85, %c0_86] : memref<8x216xf32, #tpu.memory_space<vmem>>, vector<8x216xf32>
    %c0_87 = arith.constant 0 : index
    %c0_88 = arith.constant 0 : index
    %82 = vector.load %arg8[%c0_87, %c0_88] : memref<216x1024xf32, #tpu.memory_space<vmem>>, vector<216x1024xf32>
    %cst = arith.constant dense<0.000000e+00> : vector<8x1024xf32>
    %83 = tpu.matmul %81, %82, %cst {dimension_numbers = #tpu.dot_dimension_numbers<[1], [0], [0], [1], [0, 0, 1, 1], [], []>} : vector<8x216xf32>, vector<216x1024xf32>, vector<8x1024xf32> -> vector<8x1024xf32>
    %c0_89 = arith.constant 0 : index
    %c0_90 = arith.constant 0 : index
    %84 = vector.load %arg3[%c0_89, %c0_90] : memref<8x1xf32, #tpu.memory_space<vmem>>, vector<8x1xf32>
    %85 = vector.broadcast %84 : vector<8x1xf32> to vector<8x1024xf32>
    %86 = arith.addf %83, %85 : vector<8x1024xf32>
    %c0_91 = arith.constant 0 : index
    %c0_92 = arith.constant 0 : index
    %87 = vector.load %arg6[%c0_91, %c0_92] : memref<1x1024xf32, #tpu.memory_space<vmem>>, vector<1x1024xf32>
    %88 = vector.broadcast %87 : vector<1x1024xf32> to vector<8x1024xf32>
    %89 = arith.mulf %86, %88 : vector<8x1024xf32>
    %cst_93 = arith.constant dense<0.000000e+00> : vector<8xf32>
    %90 = vector.multi_reduction <add>, %89, %cst_93 [1] : vector<8x1024xf32> to vector<8xf32>
    %91 = vector.shape_cast %90 : vector<8xf32> to vector<8x1xf32>
    %cst_94 = arith.constant 0.001953125 : f32
    %92 = vector.broadcast %cst_94 : f32 to vector<8x1xf32>
    %93 = arith.mulf %91, %92 : vector<8x1xf32>
    %94 = vector.broadcast %93 : vector<8x1xf32> to vector<8x1024xf32>
    %95 = arith.subf %86, %94 : vector<8x1024xf32>
    %96 = arith.mulf %95, %95 : vector<8x1024xf32>
    %97 = vector.broadcast %87 : vector<1x1024xf32> to vector<8x1024xf32>
    %98 = arith.mulf %96, %97 : vector<8x1024xf32>
    %cst_95 = arith.constant dense<0.000000e+00> : vector<8xf32>
    %99 = vector.multi_reduction <add>, %98, %cst_95 [1] : vector<8x1024xf32> to vector<8xf32>
    %100 = vector.shape_cast %99 : vector<8xf32> to vector<8x1xf32>
    %cst_96 = arith.constant 0.001953125 : f32
    %101 = vector.broadcast %cst_96 : f32 to vector<8x1xf32>
    %102 = arith.mulf %100, %101 : vector<8x1xf32>
    %103 = vector.broadcast %93 : vector<8x1xf32> to vector<8x1024xf32>
    %104 = arith.subf %86, %103 : vector<8x1024xf32>
    %cst_97 = arith.constant 9.99999974E-6 : f32
    %105 = vector.broadcast %cst_97 : f32 to vector<8x1xf32>
    %106 = arith.addf %102, %105 : vector<8x1xf32>
    %107 = math.rsqrt %106 : vector<8x1xf32>
    %108 = vector.broadcast %107 : vector<8x1xf32> to vector<8x1024xf32>
    %109 = arith.mulf %104, %108 : vector<8x1024xf32>
    %c0_98 = arith.constant 0 : index
    %c0_99 = arith.constant 0 : index
    %110 = vector.load %arg4[%c0_98, %c0_99] : memref<8x1xf32, #tpu.memory_space<vmem>>, vector<8x1xf32>
    %111 = vector.broadcast %110 : vector<8x1xf32> to vector<8x1024xf32>
    %112 = arith.mulf %109, %111 : vector<8x1024xf32>
    %c0_100 = arith.constant 0 : index
    %c0_101 = arith.constant 0 : index
    %113 = vector.load %arg5[%c0_100, %c0_101] : memref<8x1xf32, #tpu.memory_space<vmem>>, vector<8x1xf32>
    %114 = vector.broadcast %113 : vector<8x1xf32> to vector<8x1024xf32>
    %115 = arith.addf %112, %114 : vector<8x1024xf32>
    %cst_102 = arith.constant 0.000000e+00 : f32
    %116 = vector.broadcast %cst_102 : f32 to vector<8x1024xf32>
    %117 = arith.cmpf oge, %115, %116 : vector<8x1024xf32>
    %cst_103 = arith.constant 0.00999999977 : f32
    %118 = vector.broadcast %cst_103 : f32 to vector<8x1024xf32>
    %119 = arith.mulf %118, %115 : vector<8x1024xf32>
    %120 = arith.select %117, %115, %119 : vector<8x1024xi1>, vector<8x1024xf32>
    %c0_104 = arith.constant 0 : index
    %c0_105 = arith.constant 0 : index
    %c0_106 = arith.constant 0 : index
    %121 = vector.load %arg7[%c0_104, %c0_105, %c0_106] : memref<1x8x1024xf32, #tpu.memory_space<vmem>>, vector<1x8x1024xf32>
    %122 = vector.shape_cast %121 : vector<1x8x1024xf32> to vector<8x1024xf32>
    %123 = vector.shape_cast %120 : vector<8x1024xf32> to vector<1x8x1024xf32>
    tpu.vector_store %arg7[%c0_104, %c0_105, %c0_106], %123 {strides = array<i32>} : memref<1x8x1024xf32, #tpu.memory_space<vmem>>, vector<1x8x1024xf32>,
    return
  }
  func.func @transform_0(%arg0: i32) -> (i32, i32, i32) {
    %c0_i32 = arith.constant 0 : i32
    %c0_i32_0 = arith.constant 0 : i32
    %c0_i32_1 = arith.constant 0 : i32
    return %arg0, %c0_i32, %c0_i32_0 : i32, i32, i32
  }
  func.func @transform_1(%arg0: i32) -> (i32, i32) {
    %c0_i32 = arith.constant 0 : i32
    %c0_i32_0 = arith.constant 0 : i32
    %c0_i32_1 = arith.constant 0 : i32
    return %c0_i32, %c0_i32_0 : i32, i32
  }
  func.func @transform_2(%arg0: i32) -> (i32, i32) {
    %c0_i32 = arith.constant 0 : i32
    %c0_i32_0 = arith.constant 0 : i32
    %c0_i32_1 = arith.constant 0 : i32
    return %c0_i32, %c0_i32_0 : i32, i32
  }
  func.func @transform_3(%arg0: i32) -> (i32, i32) {
    %c0_i32 = arith.constant 0 : i32
    %c0_i32_0 = arith.constant 0 : i32
    %c0_i32_1 = arith.constant 0 : i32
    return %c0_i32, %c0_i32_0 : i32, i32
  }
  func.func @transform_4(%arg0: i32) -> (i32, i32) {
    %c0_i32 = arith.constant 0 : i32
    %c0_i32_0 = arith.constant 0 : i32
    %c0_i32_1 = arith.constant 0 : i32
    return %c0_i32, %c0_i32_0 : i32, i32
  }
  func.func @transform_5(%arg0: i32) -> (i32, i32) {
    %c0_i32 = arith.constant 0 : i32
    %c0_i32_0 = arith.constant 0 : i32
    %c0_i32_1 = arith.constant 0 : i32
    return %c0_i32, %c0_i32_0 : i32, i32
  }
  func.func @transform_6(%arg0: i32) -> (i32, i32, i32) {
    %c0_i32 = arith.constant 0 : i32
    %c0_i32_0 = arith.constant 0 : i32
    %c0_i32_1 = arith.constant 0 : i32
    return %arg0, %c0_i32, %c0_i32_0 : i32, i32, i32
  }
}

</mosaic_0001>

<llo_original>
// kernel: bottleneck_forward.2
$region0: #{bottleneck_forward.2}
  #allocation0 [shape = 'u32[]', space=smem, size = 0x4, offset = 0x4, fixed_abs, tag = 'smem constant byte address 0x4 - core index']
  #allocation1 [shape = 'u32[144,128]{1,0:T(1,128)}', space=vmem, size = 0x12000, scoped, tag = 'internal scratch']
  %s0 = inlined_call_operand.vmem [shape: f32[2,64,512], index: 0, kind: input, shape index: {}]
  %s1 = inlined_call_operand.vmem [shape: f32[8,64], index: 1, kind: input, shape index: {}]
  %s2 = inlined_call_operand.vmem [shape: f32[8,1], index: 2, kind: input, shape index: {}]
  %s3 = inlined_call_operand.vmem [shape: f32[8,1], index: 3, kind: input, shape index: {}]
  %s4 = inlined_call_operand.vmem [shape: f32[8,1], index: 4, kind: input, shape index: {}]
  %s5 = inlined_call_operand.vmem [shape: f32[2,8,512], index: 5, kind: output, shape index: {}]
  %s6 = sld [smem:[#allocation0]]
  $region53: #{bottleneck_forward.2} parent=0
    _
  %s8 = ssub.s32 1, %s6
  %s9 = scalar_select 0, %s8, %s6
  loop: start=0, step=1, limit=4
  $region2: #{bottleneck_forward.2} parent=0 // loop_pre_header
    _
  $region3: #{bottleneck_forward.2} parent=0 // loop_header
    %s11 = sphi 0, %s15
    %p12 = scmp.ge.s32.totalorder %s11, 4
    %s21 = sphi 0, %s23
    %s24 = sphi 0, %s21
    %s25 = sphi 0, %s24
    %s41 = sphi 0, %s25
    %s45 = sphi 0, %s45
    %s47 = sphi 0, %s45
    %s48 = sphi 0, %s47
    %s62 = sphi 0, %s48
    %s66 = sphi 0, %s66
    %s68 = sphi 0, %s66
    %s69 = sphi 0, %s68
    %s83 = sphi 0, %s69
    %s87 = sphi 0, %s87
    %s89 = sphi 0, %s87
    %s90 = sphi 0, %s89
    %s104 = sphi 0, %s90
    %s108 = sphi 0, %s108
    %s110 = sphi 0, %s108
    %s111 = sphi 0, %s110
    %s125 = sphi 0, %s111
    %s131 = sphi 0, %s133
    %s134 = sphi 0, %s131
    %s135 = sphi 0, %s134
    %s151 = sphi 0, %s135
  $region4: #{bottleneck_forward.2} parent=0 // loop_header_branch
    %14 = sbr.rel (%p12) target = $region8
  $region5: #{bottleneck_forward.2} parent=0 // loop_body
    %s16 = ssub.s32 %s11, 1
    %s17 = ssub.s32 %s11, 2
    %s18 = sadd.s32 %s11, 1
    %s19 = ssub.s32 %s11, %s18
    %p20 = scmp.eq.s32.totalorder %s19, 0
    %s22 = sadd.s32 %s21, 1
    %s23 = scalar_select %p20, %s21, %s22
    %p26 = pneg %p20
    %p27 = scmp.eq.s32.totalorder %s11, 1
    %p28 = por %p26, %p27
    %p29 = scmp.ne.s32.totalorder %s21, %s24
    %p30 = scmp.eq.s32.totalorder %s11, 0
    %p31 = por %p29, %p30
    %p32 = scmp.ne.s32.totalorder %s21, %s24
    %p33 = scmp.eq.s32.totalorder %s16, 1
    %p34 = por %p32, %p33
    %p35 = scmp.ne.s32.totalorder %s24, %s25
    %p36 = scmp.eq.s32.totalorder %s16, 0
    %p37 = por %p35, %p36
    %p38 = scmp.ne.s32.totalorder %s24, %s25
    %p39 = scmp.eq.s32.totalorder %s17, 1
    %p40 = por %p38, %p39
    %p42 = scmp.ne.s32.totalorder %s25, %s41
    %p43 = scmp.eq.s32.totalorder %s17, 0
    %p44 = por %p42, %p43
    %s46 = sadd.s32 %s45, 1
    %p49 = scmp.eq.s32.totalorder %s11, 1
    %p50 = scmp.ne.s32.totalorder %s45, %s47
    %p51 = scmp.eq.s32.totalorder %s11, 0
    %p52 = por %p50, %p51
    %p53 = scmp.ne.s32.totalorder %s45, %s47
    %p54 = scmp.eq.s32.totalorder %s16, 1
    %p55 = por %p53, %p54
    %p56 = scmp.ne.s32.totalorder %s47, %s48
    %p57 = scmp.eq.s32.totalorder %s16, 0
    %p58 = por %p56, %p57
    %p59 = scmp.ne.s32.totalorder %s47, %s48
    %p60 = scmp.eq.s32.totalorder %s17, 1
    %p61 = por %p59, %p60
    %p63 = scmp.ne.s32.totalorder %s48, %s62
    %p64 = scmp.eq.s32.totalorder %s17, 0
    %p65 = por %p63, %p64
    %s67 = sadd.s32 %s66, 1
    %p70 = scmp.eq.s32.totalorder %s11, 1
    %p71 = scmp.ne.s32.totalorder %s66, %s68
    %p72 = scmp.eq.s32.totalorder %s11, 0
    %p73 = por %p71, %p72
    %p74 = scmp.ne.s32.totalorder %s66, %s68
    %p75 = scmp.eq.s32.totalorder %s16, 1
    %p76 = por %p74, %p75
    %p77 = scmp.ne.s32.totalorder %s68, %s69
    %p78 = scmp.eq.s32.totalorder %s16, 0
    %p79 = por %p77, %p78
    %p80 = scmp.ne.s32.totalorder %s68, %s69
    %p81 = scmp.eq.s32.totalorder %s17, 1
    %p82 = por %p80, %p81
    %p84 = scmp.ne.s32.totalorder %s69, %s83
    %p85 = scmp.eq.s32.totalorder %s17, 0
    %p86 = por %p84, %p85
    %s88 = sadd.s32 %s87, 1
    %p91 = scmp.eq.s32.totalorder %s11, 1
    %p92 = scmp.ne.s32.totalorder %s87, %s89
    %p93 = scmp.eq.s32.totalorder %s11, 0
    %p94 = por %p92, %p93
    %p95 = scmp.ne.s32.totalorder %s87, %s89
    %p96 = scmp.eq.s32.totalorder %s16, 1
    %p97 = por %p95, %p96
    %p98 = scmp.ne.s32.totalorder %s89, %s90
    %p99 = scmp.eq.s32.totalorder %s16, 0
    %p100 = por %p98, %p99
    %p101 = scmp.ne.s32.totalorder %s89, %s90
    %p102 = scmp.eq.s32.totalorder %s17, 1
    %p103 = por %p101, %p102
    %p105 = scmp.ne.s32.totalorder %s90, %s104
    %p106 = scmp.eq.s32.totalorder %s17, 0
    %p107 = por %p105, %p106
    %s109 = sadd.s32 %s108, 1
    %p112 = scmp.eq.s32.totalorder %s11, 1
    %p113 = scmp.ne.s32.totalorder %s108, %s110
    %p114 = scmp.eq.s32.totalorder %s11, 0
    %p115 = por %p113, %p114
    %p116 = scmp.ne.s32.totalorder %s108, %s110
    %p117 = scmp.eq.s32.totalorder %s16, 1
    %p118 = por %p116, %p117
    %p119 = scmp.ne.s32.totalorder %s110, %s111
    %p120 = scmp.eq.s32.totalorder %s16, 0
    %p121 = por %p119, %p120
    %p122 = scmp.ne.s32.totalorder %s110, %s111
    %p123 = scmp.eq.s32.totalorder %s17, 1
    %p124 = por %p122, %p123
    %p126 = scmp.ne.s32.totalorder %s111, %s125
    %p127 = scmp.eq.s32.totalorder %s17, 0
    %p128 = por %p126, %p127
    %s129 = ssub.s32 %s11, %s18
    %p130 = scmp.eq.s32.totalorder %s129, 0
    %s132 = sadd.s32 %s131, 1
    %s133 = scalar_select %p130, %s131, %s132
    %p136 = pneg %p130
    %p137 = scmp.eq.s32.totalorder %s11, 1
    %p138 = por %p136, %p137
    %p139 = scmp.ne.s32.totalorder %s131, %s134
    %p140 = scmp.eq.s32.totalorder %s11, 0
    %p141 = por %p139, %p140
    %p142 = scmp.ne.s32.totalorder %s131, %s134
    %p143 = scmp.eq.s32.totalorder %s16, 1
    %p144 = por %p142, %p143
    %p145 = scmp.ne.s32.totalorder %s134, %s135
    %p146 = scmp.eq.s32.totalorder %s16, 0
    %p147 = por %p145, %p146
    %p148 = scmp.ne.s32.totalorder %s134, %s135
    %p149 = scmp.eq.s32.totalorder %s17, 1
    %p150 = por %p148, %p149
    %p152 = scmp.ne.s32.totalorder %s135, %s151
    %p153 = scmp.eq.s32.totalorder %s17, 0
    %p154 = por %p152, %p153
    %p155 = scmp.le.s32.totalorder 1, %s11
    %p156 = scmp.lt.s32.totalorder %s11, 3
    %p157 = pnand %p155, %p156
    %p158 = pneg %p157
    // Predicated region
    $region9: #{bottleneck_forward.2} parent=5 // pred_check
      _
    $region10: #{bottleneck_forward.2} parent=5 // pred_check_branch
      %160 = sbr.rel (%p157) target = $region12
    $region11: #{bottleneck_forward.2} parent=5 // pred_region
      %s161 = ssub.s32 %s11, 1
      // Predicated region
      $region13: #{bottleneck_forward.2} parent=11 // pred_check
        %p162 = pneg %p58
      $region14: #{bottleneck_forward.2} parent=11 // pred_check_branch
        %164 = sbr.rel (%p162) target = $region16
      $region15: #{bottleneck_forward.2} parent=11 // pred_region
        _
      $region16: #{bottleneck_forward.2} parent=11 // pred_fallthru
        _
      // Predicated region
      $region17: #{bottleneck_forward.2} parent=11 // pred_check
        %p165 = pneg %p79
      $region18: #{bottleneck_forward.2} parent=11 // pred_check_branch
        %167 = sbr.rel (%p165) target = $region20
      $region19: #{bottleneck_forward.2} parent=11 // pred_region
        _
      $region20: #{bottleneck_forward.2} parent=11 // pred_fallthru
        _
      // Predicated region
      $region21: #{bottleneck_forward.2} parent=11 // pred_check
        %p168 = pneg %p100
      $region22: #{bottleneck_forward.2} parent=11 // pred_check_branch
        %170 = sbr.rel (%p168) target = $region24
      $region23: #{bottleneck_forward.2} parent=11 // pred_region
        _
      $region24: #{bottleneck_forward.2} parent=11 // pred_fallthru
        _
      // Predicated region
      $region25: #{bottleneck_forward.2} parent=11 // pred_check
        %p171 = pneg %p121
      $region26: #{bottleneck_forward.2} parent=11 // pred_check_branch
        %173 = sbr.rel (%p171) target = $region28
      $region27: #{bottleneck_forward.2} parent=11 // pred_region
        _
      $region28: #{bottleneck_forward.2} parent=11 // pred_fallthru
        _
    $region12: #{bottleneck_forward.2} parent=5 // pred_fallthru
      _
    %p174 = scmp.lt.s32.totalorder %s11, 2
    // Predicated region
    $region29: #{bottleneck_forward.2} parent=5 // pred_check
      %p175 = pneg %p174
    $region30: #{bottleneck_forward.2} parent=5 // pred_check_branch
      %177 = sbr.rel (%p175) target = $region32
    $region31: #{bottleneck_forward.2} parent=5 // pred_region
      // Predicated region
      $region33: #{bottleneck_forward.2} parent=31 // pred_check
        %p178 = pneg %p31
      $region34: #{bottleneck_forward.2} parent=31 // pred_check_branch
        %180 = sbr.rel (%p178) target = $region36
      $region35: #{bottleneck_forward.2} parent=31 // pred_region
        %p181 = scmp.lt.s32.totalorder %s11, 1
        %s182 = scalar_select %p181, %s11, 1
        %s183 = smul.addr %s182, 32
        %s184 = smul.addr %s183, 8
        %s185 = scalar_lea.vmem %s0, %s184
      $region36: #{bottleneck_forward.2} parent=31 // pred_fallthru
        _
    $region32: #{bottleneck_forward.2} parent=5 // pred_fallthru
      _
    %p186 = scmp.le.s32.totalorder 1, %s11
    %p187 = scmp.lt.s32.totalorder %s11, 3
    %p188 = pnand %p186, %p187
    %p189 = pneg %p188
    // Predicated region
    $region37: #{bottleneck_forward.2} parent=5 // pred_check
      _
    $region38: #{bottleneck_forward.2} parent=5 // pred_check_branch
      %191 = sbr.rel (%p188) target = $region40
    $region39: #{bottleneck_forward.2} parent=5 // pred_region
      %s192 = ssub.s32 %s11, 1
      %p193 = scmp.lt.s32.totalorder %s16, 1
      %s194 = scalar_select %p193, %s16, 1
      %s195 = smul.addr %s194, 32
      %s196 = smul.addr %s195, 8
      %s197 = scalar_lea.vmem %s0, %s196
      %p198 = pneg %p37
      %p199 = pneg %p34
      %p200 = pneg %p58
      %p201 = pneg %p55
      %p202 = pneg %p79
      %p203 = pneg %p76
      %p204 = pneg %p100
      %p205 = pneg %p97
      %p206 = pneg %p121
      %p207 = pneg %p118
      %p208 = pneg %p147
      %p209 = pneg %p144
      %p210 = scmp.lt.s32.totalorder %s16, 1
      %s211 = scalar_select %p210, %s16, 1
      %s212 = smul.addr %s211, 4
      %s213 = smul.addr %s212, 8
      %s214 = scalar_lea.vmem %s5, %s213
      %p215 = scmp.lt.s32.totalorder %s16, 1
      %s216 = scalar_select %p215, %s16, 1
      %s217 = smul.addr %s216, 32
      %s218 = smul.addr %s217, 8
      %s219 = scalar_lea.vmem %s0, %s218
      %p220 = scmp.lt.s32.totalorder %s16, 1
      %s221 = scalar_select %p220, %s16, 1
      %s222 = smul.addr %s221, 4
      %s223 = smul.addr %s222, 8
      %s224 = scalar_lea.vmem %s5, %s223
      %v225 = vld [vmem:[%s1] sm:$0xff]
      %v226 = vld [vmem:[%s219] sm:$0xff]
      %v227 = vld [vmem:[%s219 + $0x8] sm:$0xff]
      %v228 = vld [vmem:[%s219 + $0x10] sm:$0xff]
      %v229 = vld [vmem:[%s219 + $0x18] sm:$0xff]
      %v230 = vld [vmem:[%s219 + $0x20] sm:$0xff]
      %v231 = vld [vmem:[%s219 + $0x28] sm:$0xff]
      %v232 = vld [vmem:[%s219 + $0x30] sm:$0xff]
      %v233 = vld [vmem:[%s219 + $0x38] sm:$0xff]
      %v234 = vld [vmem:[%s219 + $0x40] sm:$0xff]
      %v235 = vld [vmem:[%s219 + $0x48] sm:$0xff]
      %v236 = vld [vmem:[%s219 + $0x50] sm:$0xff]
      %v237 = vld [vmem:[%s219 + $0x58] sm:$0xff]
      %v238 = vld [vmem:[%s219 + $0x60] sm:$0xff]
      %v239 = vld [vmem:[%s219 + $0x68] sm:$0xff]
      %v240 = vld [vmem:[%s219 + $0x70] sm:$0xff]
      %v241 = vld [vmem:[%s219 + $0x78] sm:$0xff]
      %v242 = vld [vmem:[%s219 + $0x80] sm:$0xff]
      %v243 = vld [vmem:[%s219 + $0x88] sm:$0xff]
      %v244 = vld [vmem:[%s219 + $0x90] sm:$0xff]
      %v245 = vld [vmem:[%s219 + $0x98] sm:$0xff]
      %v246 = vld [vmem:[%s219 + $0xa0] sm:$0xff]
      %v247 = vld [vmem:[%s219 + $0xa8] sm:$0xff]
      %v248 = vld [vmem:[%s219 + $0xb0] sm:$0xff]
      %v249 = vld [vmem:[%s219 + $0xb8] sm:$0xff]
      %v250 = vld [vmem:[%s219 + $0xc0] sm:$0xff]
      %v251 = vld [vmem:[%s219 + $0xc8] sm:$0xff]
      %v252 = vld [vmem:[%s219 + $0xd0] sm:$0xff]
      %v253 = vld [vmem:[%s219 + $0xd8] sm:$0xff]
      %v254 = vld [vmem:[%s219 + $0xe0] sm:$0xff]
      %v255 = vld [vmem:[%s219 + $0xe8] sm:$0xff]
      %v256 = vld [vmem:[%s219 + $0xf0] sm:$0xff]
      %v257 = vld [vmem:[%s219 + $0xf8] sm:$0xff]
      %v258 = vld [vmem:[%s2] sm:$0xff]
      %260 = vset.pattern.permute.xlu0 0
      %261 = vperm.xlu0 %260, %v258
      %v262 = vpop.permute.xlu0 %261
      %vm264 = vcmask 523264
      %v266 = vsel %vm264, %v225, 0
      %268 = vmatprep.subr.mxu0 %v227
      %269 = vmatpush1.msra.mxu0 %v226
      %270 = vmatprep.subr.mxu0 %v231
      %271 = vmatpush1.msra.mxu0 %v230
      %272 = vmatprep.subr.mxu0 %v235
      %273 = vmatpush1.msra.mxu0 %v234
      %274 = vmatprep.subr.mxu0 %v239
      %275 = vmatpush1.msra.mxu0 %v238
      %276 = vmatprep.subr.mxu0 %v243
      %277 = vmatpush1.msra.mxu0 %v242
      %278 = vmatprep.subr.mxu0 %v247
      %279 = vmatpush1.msra.mxu0 %v246
      %280 = vmatprep.subr.mxu0 %v251
      %281 = vmatpush1.msra.mxu0 %v250
      %282 = vmatprep.subr.mxu0 %v255
      %283 = vmatpush1.msra.mxu0 %v254
      %284 = vmatprep.subr.mxu0 0.0
      %285 = vmatpush1.msra.mxu0 0.0
      %286 = vmatprep.subr.mxu0 0.0
      %287 = vmatpush1.msra.mxu0 0.0
      %288 = vmatprep.subr.mxu0 0.0
      %289 = vmatpush1.msra.mxu0 0.0
      %290 = vmatprep.subr.mxu0 0.0
      %291 = vmatpush1.msra.mxu0 0.0
      %292 = vmatprep.subr.mxu0 0.0
      %293 = vmatpush1.msra.mxu0 0.0
      %294 = vmatprep.subr.mxu0 0.0
      %295 = vmatpush1.msra.mxu0 0.0
      %296 = vmatprep.subr.mxu0 0.0
      %297 = vmatpush1.msra.mxu0 0.0
      %298 = vmatprep.subr.mxu0 0.0
      %299 = vmatpush1.msra.mxu0 0.0
      %300 = vmatprep.subr.mxu0 0.0
      %301 = vmatpush1.msra.mxu0 0.0
      %302 = vmatprep.subr.mxu0 0.0
      %303 = vmatpush1.msra.mxu0 0.0
      %304 = vmatprep.subr.mxu0 0.0
      %305 = vmatpush1.msra.mxu0 0.0
      %306 = vmatprep.subr.mxu0 0.0
      %307 = vmatpush1.msra.mxu0 0.0
      %308 = vmatprep.subr.mxu0 0.0
      %309 = vmatpush1.msra.mxu0 0.0
      %310 = vmatprep.subr.mxu0 0.0
      %311 = vmatpush1.msra.mxu0 0.0
      %312 = vmatprep.subr.mxu0 0.0
      %313 = vmatpush1.msra.mxu0 0.0
      %314 = vmatprep.subr.mxu0 0.0
      %315 = vmatpush1.msra.mxu0 0.0
      %316 = vmatprep.subr.mxu0 0.0
      %317 = vmatpush1.msra.mxu0 0.0
      %318 = vmatprep.subr.mxu0 0.0
      %319 = vmatpush1.msra.mxu0 0.0
      %320 = vmatprep.subr.mxu0 0.0
      %321 = vmatpush1.msra.mxu0 0.0
      %322 = vmatprep.subr.mxu0 0.0
      %323 = vmatpush1.msra.mxu0 0.0
      %324 = vmatprep.subr.mxu0 0.0
      %325 = vmatpush1.msra.mxu0 0.0
      %326 = vmatprep.subr.mxu0 0.0
      %327 = vmatpush1.msra.mxu0 0.0
      %328 = vmatprep.subr.mxu0 0.0
      %329 = vmatpush1.msra.mxu0 0.0
      %330 = vmatprep.subr.mxu0 0.0
      %331 = vmatpush1.msra.mxu0 0.0
      %332 = vmatprep.mubr.f32.mxu0 0.0
      %333 = vmatmul.mubr.f32.gmra.mrb[0].mxu0 %v266
      %v334 = vpop.f32.mrb[0].mxu0
      %v335 = vadd.f32 %v262, %v334
      %v336 = vpop.f32.mrb[0].mxu0
      %v337 = vadd.f32 %v262, %v336
      %338 = vdwg.mxu0
      %339 = vmatprep.subr.mxu0 %v229
      %340 = vmatpush1.msra.mxu0 %v228
      %341 = vmatprep.subr.mxu0 %v233
      %342 = vmatpush1.msra.mxu0 %v232
      %343 = vmatprep.subr.mxu0 %v237
      %344 = vmatpush1.msra.mxu0 %v236
      %345 = vmatprep.subr.mxu0 %v241
      %346 = vmatpush1.msra.mxu0 %v240
      %347 = vmatprep.subr.mxu0 %v245
      %348 = vmatpush1.msra.mxu0 %v244
      %349 = vmatprep.subr.mxu0 %v249
      %350 = vmatpush1.msra.mxu0 %v248
      %351 = vmatprep.subr.mxu0 %v253
      %352 = vmatpush1.msra.mxu0 %v252
      %353 = vmatprep.subr.mxu0 %v257
      %354 = vmatpush1.msra.mxu0 %v256
      %355 = vmatprep.subr.mxu0 0.0
      %356 = vmatpush1.msra.mxu0 0.0
      %357 = vmatprep.subr.mxu0 0.0
      %358 = vmatpush1.msra.mxu0 0.0
      %359 = vmatprep.subr.mxu0 0.0
      %360 = vmatpush1.msra.mxu0 0.0
      %361 = vmatprep.subr.mxu0 0.0
      %362 = vmatpush1.msra.mxu0 0.0
      %363 = vmatprep.subr.mxu0 0.0
      %364 = vmatpush1.msra.mxu0 0.0
      %365 = vmatprep.subr.mxu0 0.0
      %366 = vmatpush1.msra.mxu0 0.0
      %367 = vmatprep.subr.mxu0 0.0
      %368 = vmatpush1.msra.mxu0 0.0
      %369 = vmatprep.subr.mxu0 0.0
      %370 = vmatpush1.msra.mxu0 0.0
      %371 = vmatprep.subr.mxu0 0.0
      %372 = vmatpush1.msra.mxu0 0.0
      %373 = vmatprep.subr.mxu0 0.0
      %374 = vmatpush1.msra.mxu0 0.0
      %375 = vmatprep.subr.mxu0 0.0
      %376 = vmatpush1.msra.mxu0 0.0
      %377 = vmatprep.subr.mxu0 0.0
      %378 = vmatpush1.msra.mxu0 0.0
      %379 = vmatprep.subr.mxu0 0.0
      %380 = vmatpush1.msra.mxu0 0.0
      %381 = vmatprep.subr.mxu0 0.0
      %382 = vmatpush1.msra.mxu0 0.0
      %383 = vmatprep.subr.mxu0 0.0
      %384 = vmatpush1.msra.mxu0 0.0
      %385 = vmatprep.subr.mxu0 0.0
      %386 = vmatpush1.msra.mxu0 0.0
      %387 = vmatprep.subr.mxu0 0.0
      %388 = vmatpush1.msra.mxu0 0.0
      %389 = vmatprep.subr.mxu0 0.0
      %390 = vmatpush1.msra.mxu0 0.0
      %391 = vmatprep.subr.mxu0 0.0
      %392 = vmatpush1.msra.mxu0 0.0
      %393 = vmatprep.subr.mxu0 0.0
      %394 = vmatpush1.msra.mxu0 0.0
      %395 = vmatprep.subr.mxu0 0.0
      %396 = vmatpush1.msra.mxu0 0.0
      %397 = vmatprep.subr.mxu0 0.0
      %398 = vmatpush1.msra.mxu0 0.0
      %399 = vmatprep.subr.mxu0 0.0
      %400 = vmatpush1.msra.mxu0 0.0
      %401 = vmatprep.subr.mxu0 0.0
      %402 = vmatpush1.msra.mxu0 0.0
      %403 = vmatprep.mubr.f32.mxu0 0.0
      %404 = vmatmul.mubr.f32.gmra.mrb[0].mxu0 %v266
      %v405 = vpop.f32.mrb[0].mxu0
      %v406 = vadd.f32 %v262, %v405
      %v407 = vpop.f32.mrb[0].mxu0
      %v408 = vadd.f32 %v262, %v407
      %409 = vdwg.mxu0
      %v410 = vadd.f32 %v335, %v337
      %v411 = vadd.f32 %v410, %v406
      %v412 = vadd.f32 %v411, %v408
      %413 = vadd.xlane.f32.xlu0 %v412
      %v414 = vpop.xlane.xlu0 %413
      %v415 = vrcp.pop 512.0
      %v416 = vmul.f32 %v414, %v415
      %v417 = vsub.f32 %v335, %v416
      %v418 = vsub.f32 %v337, %v416
      %v419 = vsub.f32 %v406, %v416
      %v420 = vsub.f32 %v408, %v416
      %v421 = vmul.f32 %v417, %v417
      %v422 = vmul.f32 %v418, %v418
      %v423 = vmul.f32 %v419, %v419
      %v424 = vmul.f32 %v420, %v420
      %v425 = vadd.f32 %v421, %v422
      %v426 = vadd.f32 %v425, %v423
      %v427 = vadd.f32 %v426, %v424
      %428 = vadd.xlane.f32.xlu0 %v427
      %v429 = vpop.xlane.xlu0 %428
      %v430 = vmul.f32 %v429, %v415
      %v431 = vadd.f32 %v430, 1e-05
      %v432 = vrsqrt.pop %v431
      %v433 = vmul.f32 %v417, %v432
      %v434 = vmul.f32 %v418, %v432
      %v435 = vmul.f32 %v419, %v432
      %v436 = vmul.f32 %v420, %v432
      %v437 = vld [vmem:[%s3] sm:$0xff]
      %439 = vset.pattern.permute.xlu0 0
      %440 = vperm.xlu0 %439, %v437
      %v441 = vpop.permute.xlu0 %440
      %v443 = vmul.f32 %v433, %v441
      %v444 = vmul.f32 %v434, %v441
      %v445 = vmul.f32 %v435, %v441
      %v446 = vmul.f32 %v436, %v441
      %v447 = vld [vmem:[%s4] sm:$0xff]
      %449 = vset.pattern.permute.xlu0 0
      %450 = vperm.xlu0 %449, %v447
      %v451 = vpop.permute.xlu0 %450
      %v453 = vadd.f32 %v443, %v451
      %v454 = vadd.f32 %v444, %v451
      %v455 = vadd.f32 %v445, %v451
      %v456 = vadd.f32 %v446, %v451
      %vm457 = vcmp.ge.f32.partialorder %v453, 0.0
      %vm458 = vcmp.ge.f32.partialorder %v454, 0.0
      %vm459 = vcmp.ge.f32.partialorder %v455, 0.0
      %vm460 = vcmp.ge.f32.partialorder %v456, 0.0
      %v461 = vmul.f32 %v453, 0.01
      %v462 = vmul.f32 %v454, 0.01
      %v463 = vmul.f32 %v455, 0.01
      %v464 = vmul.f32 %v456, 0.01
      %v465 = vsel %vm457, %v453, %v461
      %v466 = vsel %vm458, %v454, %v462
      %v467 = vsel %vm459, %v455, %v463
      %v468 = vsel %vm460, %v456, %v464
      %469 = vst [vmem:[%s224] sm:$0xff] %v465
      %470 = vst [vmem:[%s224 + $0x8] sm:$0xff] %v466
      %471 = vst [vmem:[%s224 + $0x10] sm:$0xff] %v467
      %472 = vst [vmem:[%s224 + $0x18] sm:$0xff] %v468
      %p473 = scmp.lt.s32.totalorder %s16, 1
      %s474 = scalar_select %p473, %s16, 1
      %s475 = smul.addr %s474, 4
      %s476 = smul.addr %s475, 8
      %s477 = scalar_lea.vmem %s5, %s476
      // Predicated region
      $region41: #{bottleneck_forward.2} parent=39 // pred_check
        %p478 = pneg %p144
      $region42: #{bottleneck_forward.2} parent=39 // pred_check_branch
        %480 = sbr.rel (%p478) target = $region44
      $region43: #{bottleneck_forward.2} parent=39 // pred_region
        _
      $region44: #{bottleneck_forward.2} parent=39 // pred_fallthru
        _
    $region40: #{bottleneck_forward.2} parent=5 // pred_fallthru
      _
    %p481 = scmp.le.s32.totalorder 2, %s11
    // Predicated region
    $region45: #{bottleneck_forward.2} parent=5 // pred_check
      %p482 = pneg %p481
    $region46: #{bottleneck_forward.2} parent=5 // pred_check_branch
      %484 = sbr.rel (%p482) target = $region48
    $region47: #{bottleneck_forward.2} parent=5 // pred_region
      %s485 = ssub.s32 %s11, 2
      // Predicated region
      $region49: #{bottleneck_forward.2} parent=47 // pred_check
        %p486 = pneg %p150
      $region50: #{bottleneck_forward.2} parent=47 // pred_check_branch
        %488 = sbr.rel (%p486) target = $region52
      $region51: #{bottleneck_forward.2} parent=47 // pred_region
        %p489 = scmp.lt.s32.totalorder %s17, 1
        %s490 = scalar_select %p489, %s17, 1
        %s491 = smul.addr %s490, 4
        %s492 = smul.addr %s491, 8
        %s493 = scalar_lea.vmem %s5, %s492
      $region52: #{bottleneck_forward.2} parent=47 // pred_fallthru
        _
    $region48: #{bottleneck_forward.2} parent=5 // pred_fallthru
      _
  $region6: #{bottleneck_forward.2} parent=0 // loop_footer
    %s15 = sadd.s32 1, %s11
  $region7: #{bottleneck_forward.2} parent=0 // loop_footer_branch
    %10 = sbr.rel target = $region3
  $region8: #{bottleneck_forward.2} parent=0 // loop_exit
    _

// kernel: bottleneck_forward.3
$region0: #{bottleneck_forward.3}
  #allocation0 [shape = 'u32[]', space=smem, size = 0x4, offset = 0x4, fixed_abs, tag = 'smem constant byte address 0x4 - core index']
  #allocation1 [shape = 'u32[144,128]{1,0:T(1,128)}', space=vmem, size = 0x12000, scoped, tag = 'internal scratch']
  #allocation2 [shape = 'f32[216,1024]{1,0:T(8,128)}', space=vmem, size = 0xd8000, scoped, tag = 'scratch operand']
  %s0 = inlined_call_operand.vmem [shape: f32[2,8,1280], index: 0, kind: input, shape index: {}]
  %s1 = inlined_call_operand.vmem [shape: f32[8,216], index: 1, kind: input, shape index: {}]
  %s2 = inlined_call_operand.vmem [shape: f32[8,1], index: 2, kind: input, shape index: {}]
  %s3 = inlined_call_operand.vmem [shape: f32[8,1], index: 3, kind: input, shape index: {}]
  %s4 = inlined_call_operand.vmem [shape: f32[8,1], index: 4, kind: input, shape index: {}]
  %s5 = inlined_call_operand.vmem [shape: f32[1,1024], index: 5, kind: input, shape index: {}]
  %s6 = inlined_call_operand.vmem [shape: f32[2,8,1024], index: 6, kind: output, shape index: {}]
  %s7 = sld [smem:[#allocation0]]
  $region57: #{bottleneck_forward.3} parent=0
    _
  %s9 = ssub.s32 1, %s7
  %s10 = scalar_select 0, %s9, %s7
  loop: start=0, step=1, limit=4
  $region2: #{bottleneck_forward.3} parent=0 // loop_pre_header
    _
  $region3: #{bottleneck_forward.3} parent=0 // loop_header
    %s12 = sphi 0, %s16
    %p13 = scmp.ge.s32.totalorder %s12, 4
    %s22 = sphi 0, %s24
    %s25 = sphi 0, %s22
    %s26 = sphi 0, %s25
    %s42 = sphi 0, %s26
    %s46 = sphi 0, %s46
    %s48 = sphi 0, %s46
    %s49 = sphi 0, %s48
    %s63 = sphi 0, %s49
    %s67 = sphi 0, %s67
    %s69 = sphi 0, %s67
    %s70 = sphi 0, %s69
    %s84 = sphi 0, %s70
    %s88 = sphi 0, %s88
    %s90 = sphi 0, %s88
    %s91 = sphi 0, %s90
    %s105 = sphi 0, %s91
    %s109 = sphi 0, %s109
    %s111 = sphi 0, %s109
    %s112 = sphi 0, %s111
    %s126 = sphi 0, %s112
    %s130 = sphi 0, %s130
    %s132 = sphi 0, %s130
    %s133 = sphi 0, %s132
    %s147 = sphi 0, %s133
    %s153 = sphi 0, %s155
    %s156 = sphi 0, %s153
    %s157 = sphi 0, %s156
    %s173 = sphi 0, %s157
  $region4: #{bottleneck_forward.3} parent=0 // loop_header_branch
    %15 = sbr.rel (%p13) target = $region8
  $region5: #{bottleneck_forward.3} parent=0 // loop_body
    %s17 = ssub.s32 %s12, 1
    %s18 = ssub.s32 %s12, 2
    %s19 = sadd.s32 %s12, 1
    %s20 = ssub.s32 %s12, %s19
    %p21 = scmp.eq.s32.totalorder %s20, 0
    %s23 = sadd.s32 %s22, 1
    %s24 = scalar_select %p21, %s22, %s23
    %p27 = pneg %p21
    %p28 = scmp.eq.s32.totalorder %s12, 1
    %p29 = por %p27, %p28
    %p30 = scmp.ne.s32.totalorder %s22, %s25
    %p31 = scmp.eq.s32.totalorder %s12, 0
    %p32 = por %p30, %p31
    %p33 = scmp.ne.s32.totalorder %s22, %s25
    %p34 = scmp.eq.s32.totalorder %s17, 1
    %p35 = por %p33, %p34
    %p36 = scmp.ne.s32.totalorder %s25, %s26
    %p37 = scmp.eq.s32.totalorder %s17, 0
    %p38 = por %p36, %p37
    %p39 = scmp.ne.s32.totalorder %s25, %s26
    %p40 = scmp.eq.s32.totalorder %s18, 1
    %p41 = por %p39, %p40
    %p43 = scmp.ne.s32.totalorder %s26, %s42
    %p44 = scmp.eq.s32.totalorder %s18, 0
    %p45 = por %p43, %p44
    %s47 = sadd.s32 %s46, 1
    %p50 = scmp.eq.s32.totalorder %s12, 1
    %p51 = scmp.ne.s32.totalorder %s46, %s48
    %p52 = scmp.eq.s32.totalorder %s12, 0
    %p53 = por %p51, %p52
    %p54 = scmp.ne.s32.totalorder %s46, %s48
    %p55 = scmp.eq.s32.totalorder %s17, 1
    %p56 = por %p54, %p55
    %p57 = scmp.ne.s32.totalorder %s48, %s49
    %p58 = scmp.eq.s32.totalorder %s17, 0
    %p59 = por %p57, %p58
    %p60 = scmp.ne.s32.totalorder %s48, %s49
    %p61 = scmp.eq.s32.totalorder %s18, 1
    %p62 = por %p60, %p61
    %p64 = scmp.ne.s32.totalorder %s49, %s63
    %p65 = scmp.eq.s32.totalorder %s18, 0
    %p66 = por %p64, %p65
    %s68 = sadd.s32 %s67, 1
    %p71 = scmp.eq.s32.totalorder %s12, 1
    %p72 = scmp.ne.s32.totalorder %s67, %s69
    %p73 = scmp.eq.s32.totalorder %s12, 0
    %p74 = por %p72, %p73
    %p75 = scmp.ne.s32.totalorder %s67, %s69
    %p76 = scmp.eq.s32.totalorder %s17, 1
    %p77 = por %p75, %p76
    %p78 = scmp.ne.s32.totalorder %s69, %s70
    %p79 = scmp.eq.s32.totalorder %s17, 0
    %p80 = por %p78, %p79
    %p81 = scmp.ne.s32.totalorder %s69, %s70
    %p82 = scmp.eq.s32.totalorder %s18, 1
    %p83 = por %p81, %p82
    %p85 = scmp.ne.s32.totalorder %s70, %s84
    %p86 = scmp.eq.s32.totalorder %s18, 0
    %p87 = por %p85, %p86
    %s89 = sadd.s32 %s88, 1
    %p92 = scmp.eq.s32.totalorder %s12, 1
    %p93 = scmp.ne.s32.totalorder %s88, %s90
    %p94 = scmp.eq.s32.totalorder %s12, 0
    %p95 = por %p93, %p94
    %p96 = scmp.ne.s32.totalorder %s88, %s90
    %p97 = scmp.eq.s32.totalorder %s17, 1
    %p98 = por %p96, %p97
    %p99 = scmp.ne.s32.totalorder %s90, %s91
    %p100 = scmp.eq.s32.totalorder %s17, 0
    %p101 = por %p99, %p100
    %p102 = scmp.ne.s32.totalorder %s90, %s91
    %p103 = scmp.eq.s32.totalorder %s18, 1
    %p104 = por %p102, %p103
    %p106 = scmp.ne.s32.totalorder %s91, %s105
    %p107 = scmp.eq.s32.totalorder %s18, 0
    %p108 = por %p106, %p107
    %s110 = sadd.s32 %s109, 1
    %p113 = scmp.eq.s32.totalorder %s12, 1
    %p114 = scmp.ne.s32.totalorder %s109, %s111
    %p115 = scmp.eq.s32.totalorder %s12, 0
    %p116 = por %p114, %p115
    %p117 = scmp.ne.s32.totalorder %s109, %s111
    %p118 = scmp.eq.s32.totalorder %s17, 1
    %p119 = por %p117, %p118
    %p120 = scmp.ne.s32.totalorder %s111, %s112
    %p121 = scmp.eq.s32.totalorder %s17, 0
    %p122 = por %p120, %p121
    %p123 = scmp.ne.s32.totalorder %s111, %s112
    %p124 = scmp.eq.s32.totalorder %s18, 1
    %p125 = por %p123, %p124
    %p127 = scmp.ne.s32.totalorder %s112, %s126
    %p128 = scmp.eq.s32.totalorder %s18, 0
    %p129 = por %p127, %p128
    %s131 = sadd.s32 %s130, 1
    %p134 = scmp.eq.s32.totalorder %s12, 1
    %p135 = scmp.ne.s32.totalorder %s130, %s132
    %p136 = scmp.eq.s32.totalorder %s12, 0
    %p137 = por %p135, %p136
    %p138 = scmp.ne.s32.totalorder %s130, %s132
    %p139 = scmp.eq.s32.totalorder %s17, 1
    %p140 = por %p138, %p139
    %p141 = scmp.ne.s32.totalorder %s132, %s133
    %p142 = scmp.eq.s32.totalorder %s17, 0
    %p143 = por %p141, %p142
    %p144 = scmp.ne.s32.totalorder %s132, %s133
    %p145 = scmp.eq.s32.totalorder %s18, 1
    %p146 = por %p144, %p145
    %p148 = scmp.ne.s32.totalorder %s133, %s147
    %p149 = scmp.eq.s32.totalorder %s18, 0
    %p150 = por %p148, %p149
    %s151 = ssub.s32 %s12, %s19
    %p152 = scmp.eq.s32.totalorder %s151, 0
    %s154 = sadd.s32 %s153, 1
    %s155 = scalar_select %p152, %s153, %s154
    %p158 = pneg %p152
    %p159 = scmp.eq.s32.totalorder %s12, 1
    %p160 = por %p158, %p159
    %p161 = scmp.ne.s32.totalorder %s153, %s156
    %p162 = scmp.eq.s32.totalorder %s12, 0
    %p163 = por %p161, %p162
    %p164 = scmp.ne.s32.totalorder %s153, %s156
    %p165 = scmp.eq.s32.totalorder %s17, 1
    %p166 = por %p164, %p165
    %p167 = scmp.ne.s32.totalorder %s156, %s157
    %p168 = scmp.eq.s32.totalorder %s17, 0
    %p169 = por %p167, %p168
    %p170 = scmp.ne.s32.totalorder %s156, %s157
    %p171 = scmp.eq.s32.totalorder %s18, 1
    %p172 = por %p170, %p171
    %p174 = scmp.ne.s32.totalorder %s157, %s173
    %p175 = scmp.eq.s32.totalorder %s18, 0
    %p176 = por %p174, %p175
    %p177 = scmp.le.s32.totalorder 1, %s12
    %p178 = scmp.lt.s32.totalorder %s12, 3
    %p179 = pnand %p177, %p178
    %p180 = pneg %p179
    // Predicated region
    $region9: #{bottleneck_forward.3} parent=5 // pred_check
      _
    $region10: #{bottleneck_forward.3} parent=5 // pred_check_branch
      %182 = sbr.rel (%p179) target = $region12
    $region11: #{bottleneck_forward.3} parent=5 // pred_region
      %s183 = ssub.s32 %s12, 1
      // Predicated region
      $region13: #{bottleneck_forward.3} parent=11 // pred_check
        %p184 = pneg %p59
      $region14: #{bottleneck_forward.3} parent=11 // pred_check_branch
        %186 = sbr.rel (%p184) target = $region16
      $region15: #{bottleneck_forward.3} parent=11 // pred_region
        _
      $region16: #{bottleneck_forward.3} parent=11 // pred_fallthru
        _
      // Predicated region
      $region17: #{bottleneck_forward.3} parent=11 // pred_check
        %p187 = pneg %p80
      $region18: #{bottleneck_forward.3} parent=11 // pred_check_branch
        %189 = sbr.rel (%p187) target = $region20
      $region19: #{bottleneck_forward.3} parent=11 // pred_region
        _
      $region20: #{bottleneck_forward.3} parent=11 // pred_fallthru
        _
      // Predicated region
      $region21: #{bottleneck_forward.3} parent=11 // pred_check
        %p190 = pneg %p101
      $region22: #{bottleneck_forward.3} parent=11 // pred_check_branch
        %192 = sbr.rel (%p190) target = $region24
      $region23: #{bottleneck_forward.3} parent=11 // pred_region
        _
      $region24: #{bottleneck_forward.3} parent=11 // pred_fallthru
        _
      // Predicated region
      $region25: #{bottleneck_forward.3} parent=11 // pred_check
        %p193 = pneg %p122
      $region26: #{bottleneck_forward.3} parent=11 // pred_check_branch
        %195 = sbr.rel (%p193) target = $region28
      $region27: #{bottleneck_forward.3} parent=11 // pred_region
        _
      $region28: #{bottleneck_forward.3} parent=11 // pred_fallthru
        _
      // Predicated region
      $region29: #{bottleneck_forward.3} parent=11 // pred_check
        %p196 = pneg %p143
      $region30: #{bottleneck_forward.3} parent=11 // pred_check_branch
        %198 = sbr.rel (%p196) target = $region32
      $region31: #{bottleneck_forward.3} parent=11 // pred_region
        _
      $region32: #{bottleneck_forward.3} parent=11 // pred_fallthru
        _
    $region12: #{bottleneck_forward.3} parent=5 // pred_fallthru
      _
    %p199 = scmp.lt.s32.totalorder %s12, 2
    // Predicated region
    $region33: #{bottleneck_forward.3} parent=5 // pred_check
      %p200 = pneg %p199
    $region34: #{bottleneck_forward.3} parent=5 // pred_check_branch
      %202 = sbr.rel (%p200) target = $region36
    $region35: #{bottleneck_forward.3} parent=5 // pred_region
      // Predicated region
      $region37: #{bottleneck_forward.3} parent=35 // pred_check
        %p203 = pneg %p32
      $region38: #{bottleneck_forward.3} parent=35 // pred_check_branch
        %205 = sbr.rel (%p203) target = $region40
      $region39: #{bottleneck_forward.3} parent=35 // pred_region
        %p206 = scmp.lt.s32.totalorder %s12, 1
        %s207 = scalar_select %p206, %s12, 1
        %s208 = smul.addr %s207, 10
        %s209 = smul.addr %s208, 8
        %s210 = scalar_lea.vmem %s0, %s209
      $region40: #{bottleneck_forward.3} parent=35 // pred_fallthru
        _
    $region36: #{bottleneck_forward.3} parent=5 // pred_fallthru
      _
    %p211 = scmp.le.s32.totalorder 1, %s12
    %p212 = scmp.lt.s32.totalorder %s12, 3
    %p213 = pnand %p211, %p212
    %p214 = pneg %p213
    // Predicated region
    $region41: #{bottleneck_forward.3} parent=5 // pred_check
      _
    $region42: #{bottleneck_forward.3} parent=5 // pred_check_branch
      %216 = sbr.rel (%p213) target = $region44
    $region43: #{bottleneck_forward.3} parent=5 // pred_region
      %s217 = ssub.s32 %s12, 1
      %p218 = scmp.lt.s32.totalorder %s17, 1
      %s219 = scalar_select %p218, %s17, 1
      %s220 = smul.addr %s219, 10
      %s221 = smul.addr %s220, 8
      %s222 = scalar_lea.vmem %s0, %s221
      %p223 = pneg %p38
      %p224 = pneg %p35
      %p225 = pneg %p59
      %p226 = pneg %p56
      %p227 = pneg %p80
      %p228 = pneg %p77
      %p229 = pneg %p101
      %p230 = pneg %p98
      %p231 = pneg %p122
      %p232 = pneg %p119
      %p233 = pneg %p143
      %p234 = pneg %p140
      %p235 = pneg %p169
      %p236 = pneg %p166
      %p237 = scmp.lt.s32.totalorder %s17, 1
      %s238 = scalar_select %p237, %s17, 1
      %s239 = smul.addr %s238, 8
      %s240 = smul.addr %s239, 8
      %s241 = scalar_lea.vmem %s6, %s240
      %p242 = scmp.lt.s32.totalorder %s17, 1
      %s243 = scalar_select %p242, %s17, 1
      %s244 = smul.addr %s243, 10
      %s245 = smul.addr %s244, 8
      %s246 = scalar_lea.vmem %s0, %s245
      %p247 = scmp.lt.s32.totalorder %s17, 1
      %s248 = scalar_select %p247, %s17, 1
      %s249 = smul.addr %s248, 8
      %s250 = smul.addr %s249, 8
      %s251 = scalar_lea.vmem %s6, %s250
      %v252 = vld [vmem:[%s246] sm:$0xff]
      %v253 = vld [vmem:[%s246 + $0x8] sm:$0xff]
      %v254 = vld [vmem:[%s246 + $0x10] sm:$0xff]
      %v255 = vld [vmem:[%s246 + $0x18] sm:$0xff]
      %v256 = vld [vmem:[%s246 + $0x20] sm:$0xff]
      %v257 = vld [vmem:[%s246 + $0x28] sm:$0xff]
      %v258 = vld [vmem:[%s246 + $0x30] sm:$0xff]
      %v259 = vld [vmem:[%s246 + $0x38] sm:$0xff]
      %260 = vst [vmem:[#allocation2] sm:$0xff] %v252
      %261 = vst [vmem:[#allocation2 + $0x8] sm:$0xff] %v253
      %262 = vst [vmem:[#allocation2 + $0x10] sm:$0xff] %v254
      %263 = vst [vmem:[#allocation2 + $0x18] sm:$0xff] %v255
      %264 = vst [vmem:[#allocation2 + $0x20] sm:$0xff] %v256
      %265 = vst [vmem:[#allocation2 + $0x28] sm:$0xff] %v257
      %266 = vst [vmem:[#allocation2 + $0x30] sm:$0xff] %v258
      %267 = vst [vmem:[#allocation2 + $0x38] sm:$0xff] %v259
      %v268 = vld [vmem:[%s246] sm:$0xff]
      %v269 = vld [vmem:[%s246 + $0x8] sm:$0xff]
      %v270 = vld [vmem:[%s246 + $0x10] sm:$0xff]
      %v271 = vld [vmem:[%s246 + $0x18] sm:$0xff]
      %v272 = vld [vmem:[%s246 + $0x20] sm:$0xff]
      %v273 = vld [vmem:[%s246 + $0x28] sm:$0xff]
      %v274 = vld [vmem:[%s246 + $0x30] sm:$0xff]
      %v275 = vld [vmem:[%s246 + $0x38] sm:$0xff]
      %v276 = vld [vmem:[%s246 + $0x40] sm:$0xff]
      %286 = vrot.lane.b32.xlu0 %v268, 127
      %v287 = vpop.permute.xlu0 %286
      %288 = vrot.lane.b32.xlu0 %v269, 127
      %v289 = vpop.permute.xlu0 %288
      %290 = vrot.lane.b32.xlu0 %v270, 127
      %v291 = vpop.permute.xlu0 %290
      %292 = vrot.lane.b32.xlu0 %v271, 127
      %v293 = vpop.permute.xlu0 %292
      %294 = vrot.lane.b32.xlu0 %v272, 127
      %v295 = vpop.permute.xlu0 %294
      %296 = vrot.lane.b32.xlu0 %v273, 127
      %v297 = vpop.permute.xlu0 %296
      %298 = vrot.lane.b32.xlu0 %v274, 127
      %v299 = vpop.permute.xlu0 %298
      %300 = vrot.lane.b32.xlu0 %v275, 127
      %v301 = vpop.permute.xlu0 %300
      %302 = vrot.lane.b32.xlu0 %v276, 127
      %v303 = vpop.permute.xlu0 %302
      %vm304 = vcmask 1039360
      %v305 = vsel %vm304, %v287, %v289
      %v306 = vsel %vm304, %v289, %v291
      %v307 = vsel %vm304, %v291, %v293
      %v308 = vsel %vm304, %v293, %v295
      %v309 = vsel %vm304, %v295, %v297
      %v310 = vsel %vm304, %v297, %v299
      %v311 = vsel %vm304, %v299, %v301
      %v312 = vsel %vm304, %v301, %v303
      %321 = vst [vmem:[#allocation2 + $0x40] sm:$0xff] %v305
      %322 = vst [vmem:[#allocation2 + $0x48] sm:$0xff] %v306
      %323 = vst [vmem:[#allocation2 + $0x50] sm:$0xff] %v307
      %324 = vst [vmem:[#allocation2 + $0x58] sm:$0xff] %v308
      %325 = vst [vmem:[#allocation2 + $0x60] sm:$0xff] %v309
      %326 = vst [vmem:[#allocation2 + $0x68] sm:$0xff] %v310
      %327 = vst [vmem:[#allocation2 + $0x70] sm:$0xff] %v311
      %328 = vst [vmem:[#allocation2 + $0x78] sm:$0xff] %v312
      %v329 = vld [vmem:[%s246] sm:$0xff]
      %v330 = vld [vmem:[%s246 + $0x8] sm:$0xff]
      %v331 = vld [vmem:[%s246 + $0x10] sm:$0xff]
      %v332 = vld [vmem:[%s246 + $0x18] sm:$0xff]
      %v333 = vld [vmem:[%s246 + $0x20] sm:$0xff]
      %v334 = vld [vmem:[%s246 + $0x28] sm:$0xff]
      %v335 = vld [vmem:[%s246 + $0x30] sm:$0xff]
      %v336 = vld [vmem:[%s246 + $0x38] sm:$0xff]
      %v337 = vld [vmem:[%s246 + $0x40] sm:$0xff]
      %347 = vrot.lane.b32.xlu0 %v329, 126
      %v348 = vpop.permute.xlu0 %347
      %349 = vrot.lane.b32.xlu0 %v330, 126
      %v350 = vpop.permute.xlu0 %349
      %351 = vrot.lane.b32.xlu0 %v331, 126
      %v352 = vpop.permute.xlu0 %351
      %353 = vrot.lane.b32.xlu0 %v332, 126
      %v354 = vpop.permute.xlu0 %353
      %355 = vrot.lane.b32.xlu0 %v333, 126
      %v356 = vpop.permute.xlu0 %355
      %357 = vrot.lane.b32.xlu0 %v334, 126
      %v358 = vpop.permute.xlu0 %357
      %359 = vrot.lane.b32.xlu0 %v335, 126
      %v360 = vpop.permute.xlu0 %359
      %361 = vrot.lane.b32.xlu0 %v336, 126
      %v362 = vpop.permute.xlu0 %361
      %363 = vrot.lane.b32.xlu0 %v337, 126
      %v364 = vpop.permute.xlu0 %363
      %vm365 = vcmask 1031168
      %v366 = vsel %vm365, %v348, %v350
      %v367 = vsel %vm365, %v350, %v352
      %v368 = vsel %vm365, %v352, %v354
      %v369 = vsel %vm365, %v354, %v356
      %v370 = vsel %vm365, %v356, %v358
      %v371 = vsel %vm365, %v358, %v360
      %v372 = vsel %vm365, %v360, %v362
      %v373 = vsel %vm365, %v362, %v364
      %382 = vst [vmem:[#allocation2 + $0x80] sm:$0xff] %v366
      %383 = vst [vmem:[#allocation2 + $0x88] sm:$0xff] %v367
      %384 = vst [vmem:[#allocation2 + $0x90] sm:$0xff] %v368
      %385 = vst [vmem:[#allocation2 + $0x98] sm:$0xff] %v369
      %386 = vst [vmem:[#allocation2 + $0xa0] sm:$0xff] %v370
      %387 = vst [vmem:[#allocation2 + $0xa8] sm:$0xff] %v371
      %388 = vst [vmem:[#allocation2 + $0xb0] sm:$0xff] %v372
      %389 = vst [vmem:[#allocation2 + $0xb8] sm:$0xff] %v373
      %v390 = vld [vmem:[%s246] sm:$0xff]
      %v391 = vld [vmem:[%s246 + $0x8] sm:$0xff]
      %v392 = vld [vmem:[%s246 + $0x10] sm:$0xff]
      %v393 = vld [vmem:[%s246 + $0x18] sm:$0xff]
      %v394 = vld [vmem:[%s246 + $0x20] sm:$0xff]
      %v395 = vld [vmem:[%s246 + $0x28] sm:$0xff]
      %v396 = vld [vmem:[%s246 + $0x30] sm:$0xff]
      %v397 = vld [vmem:[%s246 + $0x38] sm:$0xff]
      %v398 = vld [vmem:[%s246 + $0x40] sm:$0xff]
      %408 = vrot.lane.b32.xlu0 %v390, 118
      %v409 = vpop.permute.xlu0 %408
      %410 = vrot.lane.b32.xlu0 %v391, 118
      %v411 = vpop.permute.xlu0 %410
      %412 = vrot.lane.b32.xlu0 %v392, 118
      %v413 = vpop.permute.xlu0 %412
      %414 = vrot.lane.b32.xlu0 %v393, 118
      %v415 = vpop.permute.xlu0 %414
      %416 = vrot.lane.b32.xlu0 %v394, 118
      %v417 = vpop.permute.xlu0 %416
      %418 = vrot.lane.b32.xlu0 %v395, 118
      %v419 = vpop.permute.xlu0 %418
      %420 = vrot.lane.b32.xlu0 %v396, 118
      %v421 = vpop.permute.xlu0 %420
      %422 = vrot.lane.b32.xlu0 %v397, 118
      %v423 = vpop.permute.xlu0 %422
      %424 = vrot.lane.b32.xlu0 %v398, 118
      %v425 = vpop.permute.xlu0 %424
      %vm426 = vcmask 965632
      %v427 = vsel %vm426, %v409, %v411
      %v428 = vsel %vm426, %v411, %v413
      %v429 = vsel %vm426, %v413, %v415
      %v430 = vsel %vm426, %v415, %v417
      %v431 = vsel %vm426, %v417, %v419
      %v432 = vsel %vm426, %v419, %v421
      %v433 = vsel %vm426, %v421, %v423
      %v434 = vsel %vm426, %v423, %v425
      %443 = vst [vmem:[#allocation2 + $0xc0] sm:$0xff] %v427
      %444 = vst [vmem:[#allocation2 + $0xc8] sm:$0xff] %v428
      %445 = vst [vmem:[#allocation2 + $0xd0] sm:$0xff] %v429
      %446 = vst [vmem:[#allocation2 + $0xd8] sm:$0xff] %v430
      %447 = vst [vmem:[#allocation2 + $0xe0] sm:$0xff] %v431
      %448 = vst [vmem:[#allocation2 + $0xe8] sm:$0xff] %v432
      %449 = vst [vmem:[#allocation2 + $0xf0] sm:$0xff] %v433
      %450 = vst [vmem:[#allocation2 + $0xf8] sm:$0xff] %v434
      %v451 = vld [vmem:[%s246] sm:$0xff]
      %v452 = vld [vmem:[%s246 + $0x8] sm:$0xff]
      %v453 = vld [vmem:[%s246 + $0x10] sm:$0xff]
      %v454 = vld [vmem:[%s246 + $0x18] sm:$0xff]
      %v455 = vld [vmem:[%s246 + $0x20] sm:$0xff]
      %v456 = vld [vmem:[%s246 + $0x28] sm:$0xff]
      %v457 = vld [vmem:[%s246 + $0x30] sm:$0xff]
      %v458 = vld [vmem:[%s246 + $0x38] sm:$0xff]
      %v459 = vld [vmem:[%s246 + $0x40] sm:$0xff]
      %469 = vrot.lane.b32.xlu0 %v451, 117
      %v470 = vpop.permute.xlu0 %469
      %471 = vrot.lane.b32.xlu0 %v452, 117
      %v472 = vpop.permute.xlu0 %471
      %473 = vrot.lane.b32.xlu0 %v453, 117
      %v474 = vpop.permute.xlu0 %473
      %475 = vrot.lane.b32.xlu0 %v454, 117
      %v476 = vpop.permute.xlu0 %475
      %477 = vrot.lane.b32.xlu0 %v455, 117
      %v478 = vpop.permute.xlu0 %477
      %479 = vrot.lane.b32.xlu0 %v456, 117
      %v480 = vpop.permute.xlu0 %479
      %481 = vrot.lane.b32.xlu0 %v457, 117
      %v482 = vpop.permute.xlu0 %481
      %483 = vrot.lane.b32.xlu0 %v458, 117
      %v484 = vpop.permute.xlu0 %483
      %485 = vrot.lane.b32.xlu0 %v459, 117
      %v486 = vpop.permute.xlu0 %485
      %vm487 = vcmask 957440
      %v488 = vsel %vm487, %v470, %v472
      %v489 = vsel %vm487, %v472, %v474
      %v490 = vsel %vm487, %v474, %v476
      %v491 = vsel %vm487, %v476, %v478
      %v492 = vsel %vm487, %v478, %v480
      %v493 = vsel %vm487, %v480, %v482
      %v494 = vsel %vm487, %v482, %v484
      %v495 = vsel %vm487, %v484, %v486
      %504 = vst [vmem:[#allocation2 + $0x100] sm:$0xff] %v488
      %505 = vst [vmem:[#allocation2 + $0x108] sm:$0xff] %v489
      %506 = vst [vmem:[#allocation2 + $0x110] sm:$0xff] %v490
      %507 = vst [vmem:[#allocation2 + $0x118] sm:$0xff] %v491
      %508 = vst [vmem:[#allocation2 + $0x120] sm:$0xff] %v492
      %509 = vst [vmem:[#allocation2 + $0x128] sm:$0xff] %v493
      %510 = vst [vmem:[#allocation2 + $0x130] sm:$0xff] %v494
      %511 = vst [vmem:[#allocation2 + $0x138] sm:$0xff] %v495
      %v512 = vld [vmem:[%s246] sm:$0xff]
      %v513 = vld [vmem:[%s246 + $0x8] sm:$0xff]
      %v514 = vld [vmem:[%s246 + $0x10] sm:$0xff]
      %v515 = vld [vmem:[%s246 + $0x18] sm:$0xff]
      %v516 = vld [vmem:[%s246 + $0x20] sm:$0xff]
      %v517 = vld [vmem:[%s246 + $0x28] sm:$0xff]
      %v518 = vld [vmem:[%s246 + $0x30] sm:$0xff]
      %v519 = vld [vmem:[%s246 + $0x38] sm:$0xff]
      %v520 = vld [vmem:[%s246 + $0x40] sm:$0xff]
      %530 = vrot.lane.b32.xlu0 %v512, 116
      %v531 = vpop.permute.xlu0 %530
      %532 = vrot.lane.b32.xlu0 %v513, 116
      %v533 = vpop.permute.xlu0 %532
      %534 = vrot.lane.b32.xlu0 %v514, 116
      %v535 = vpop.permute.xlu0 %534
      %536 = vrot.lane.b32.xlu0 %v515, 116
      %v537 = vpop.permute.xlu0 %536
      %538 = vrot.lane.b32.xlu0 %v516, 116
      %v539 = vpop.permute.xlu0 %538
      %540 = vrot.lane.b32.xlu0 %v517, 116
      %v541 = vpop.permute.xlu0 %540
      %542 = vrot.lane.b32.xlu0 %v518, 116
      %v543 = vpop.permute.xlu0 %542
      %544 = vrot.lane.b32.xlu0 %v519, 116
      %v545 = vpop.permute.xlu0 %544
      %546 = vrot.lane.b32.xlu0 %v520, 116
      %v547 = vpop.permute.xlu0 %546
      %vm548 = vcmask 949248
      %v549 = vsel %vm548, %v531, %v533
      %v550 = vsel %vm548, %v533, %v535
      %v551 = vsel %vm548, %v535, %v537
      %v552 = vsel %vm548, %v537, %v539
      %v553 = vsel %vm548, %v539, %v541
      %v554 = vsel %vm548, %v541, %v543
      %v555 = vsel %vm548, %v543, %v545
      %v556 = vsel %vm548, %v545, %v547
      %565 = vst [vmem:[#allocation2 + $0x140] sm:$0xff] %v549
      %566 = vst [vmem:[#allocation2 + $0x148] sm:$0xff] %v550
      %567 = vst [vmem:[#allocation2 + $0x150] sm:$0xff] %v551
      %568 = vst [vmem:[#allocation2 + $0x158] sm:$0xff] %v552
      %569 = vst [vmem:[#allocation2 + $0x160] sm:$0xff] %v553
      %570 = vst [vmem:[#allocation2 + $0x168] sm:$0xff] %v554
      %571 = vst [vmem:[#allocation2 + $0x170] sm:$0xff] %v555
      %572 = vst [vmem:[#allocation2 + $0x178] sm:$0xff] %v556
      %v573 = vld [vmem:[%s246] sm:$0xff]
      %v574 = vld [vmem:[%s246 + $0x8] sm:$0xff]
      %v575 = vld [vmem:[%s246 + $0x10] sm:$0xff]
      %v576 = vld [vmem:[%s246 + $0x18] sm:$0xff]
      %v577 = vld [vmem:[%s246 + $0x20] sm:$0xff]
      %v578 = vld [vmem:[%s246 + $0x28] sm:$0xff]
      %v579 = vld [vmem:[%s246 + $0x30] sm:$0xff]
      %v580 = vld [vmem:[%s246 + $0x38] sm:$0xff]
      %v581 = vld [vmem:[%s246 + $0x40] sm:$0xff]
      %591 = vrot.lane.b32.xlu0 %v573, 108
      %v592 = vpop.permute.xlu0 %591
      %593 = vrot.lane.b32.xlu0 %v574, 108
      %v594 = vpop.permute.xlu0 %593
      %595 = vrot.lane.b32.xlu0 %v575, 108
      %v596 = vpop.permute.xlu0 %595
      %597 = vrot.lane.b32.xlu0 %v576, 108
      %v598 = vpop.permute.xlu0 %597
      %599 = vrot.lane.b32.xlu0 %v577, 108
      %v600 = vpop.permute.xlu0 %599
      %601 = vrot.lane.b32.xlu0 %v578, 108
      %v602 = vpop.permute.xlu0 %601
      %603 = vrot.lane.b32.xlu0 %v579, 108
      %v604 = vpop.permute.xlu0 %603
      %605 = vrot.lane.b32.xlu0 %v580, 108
      %v606 = vpop.permute.xlu0 %605
      %607 = vrot.lane.b32.xlu0 %v581, 108
      %v608 = vpop.permute.xlu0 %607
      %vm609 = vcmask 883712
      %v610 = vsel %vm609, %v592, %v594
      %v611 = vsel %vm609, %v594, %v596
      %v612 = vsel %vm609, %v596, %v598
      %v613 = vsel %vm609, %v598, %v600
      %v614 = vsel %vm609, %v600, %v602
      %v615 = vsel %vm609, %v602, %v604
      %v616 = vsel %vm609, %v604, %v606
      %v617 = vsel %vm609, %v606, %v608
      %626 = vst [vmem:[#allocation2 + $0x180] sm:$0xff] %v610
      %627 = vst [vmem:[#allocation2 + $0x188] sm:$0xff] %v611
      %628 = vst [vmem:[#allocation2 + $0x190] sm:$0xff] %v612
      %629 = vst [vmem:[#allocation2 + $0x198] sm:$0xff] %v613
      %630 = vst [vmem:[#allocation2 + $0x1a0] sm:$0xff] %v614
      %631 = vst [vmem:[#allocation2 + $0x1a8] sm:$0xff] %v615
      %632 = vst [vmem:[#allocation2 + $0x1b0] sm:$0xff] %v616
      %633 = vst [vmem:[#allocation2 + $0x1b8] sm:$0xff] %v617
      %v634 = vld [vmem:[%s246] sm:$0xff]
      %v635 = vld [vmem:[%s246 + $0x8] sm:$0xff]
      %v636 = vld [vmem:[%s246 + $0x10] sm:$0xff]
      %v637 = vld [vmem:[%s246 + $0x18] sm:$0xff]
      %v638 = vld [vmem:[%s246 + $0x20] sm:$0xff]
      %v639 = vld [vmem:[%s246 + $0x28] sm:$0xff]
      %v640 = vld [vmem:[%s246 + $0x30] sm:$0xff]
      %v641 = vld [vmem:[%s246 + $0x38] sm:$0xff]
      %v642 = vld [vmem:[%s246 + $0x40] sm:$0xff]
      %652 = vrot.lane.b32.xlu0 %v634, 107
      %v653 = vpop.permute.xlu0 %652
      %654 = vrot.lane.b32.xlu0 %v635, 107
      %v655 = vpop.permute.xlu0 %654
      %656 = vrot.lane.b32.xlu0 %v636, 107
      %v657 = vpop.permute.xlu0 %656
      %658 = vrot.lane.b32.xlu0 %v637, 107
      %v659 = vpop.permute.xlu0 %658
      %660 = vrot.lane.b32.xlu0 %v638, 107
      %v661 = vpop.permute.xlu0 %660
      %662 = vrot.lane.b32.xlu0 %v639, 107
      %v663 = vpop.permute.xlu0 %662
      %664 = vrot.lane.b32.xlu0 %v640, 107
      %v665 = vpop.permute.xlu0 %664
      %666 = vrot.lane.b32.xlu0 %v641, 107
      %v667 = vpop.permute.xlu0 %666
      %668 = vrot.lane.b32.xlu0 %v642, 107
      %v669 = vpop.permute.xlu0 %668
      %vm670 = vcmask 875520
      %v671 = vsel %vm670, %v653, %v655
      %v672 = vsel %vm670, %v655, %v657
      %v673 = vsel %vm670, %v657, %v659
      %v674 = vsel %vm670, %v659, %v661
      %v675 = vsel %vm670, %v661, %v663
      %v676 = vsel %vm670, %v663, %v665
      %v677 = vsel %vm670, %v665, %v667
      %v678 = vsel %vm670, %v667, %v669
      %687 = vst [vmem:[#allocation2 + $0x1c0] sm:$0xff] %v671
      %688 = vst [vmem:[#allocation2 + $0x1c8] sm:$0xff] %v672
      %689 = vst [vmem:[#allocation2 + $0x1d0] sm:$0xff] %v673
      %690 = vst [vmem:[#allocation2 + $0x1d8] sm:$0xff] %v674
      %691 = vst [vmem:[#allocation2 + $0x1e0] sm:$0xff] %v675
      %692 = vst [vmem:[#allocation2 + $0x1e8] sm:$0xff] %v676
      %693 = vst [vmem:[#allocation2 + $0x1f0] sm:$0xff] %v677
      %694 = vst [vmem:[#allocation2 + $0x1f8] sm:$0xff] %v678
      %v695 = vld [vmem:[%s246] sm:$0xff]
      %v696 = vld [vmem:[%s246 + $0x8] sm:$0xff]
      %v697 = vld [vmem:[%s246 + $0x10] sm:$0xff]
      %v698 = vld [vmem:[%s246 + $0x18] sm:$0xff]
      %v699 = vld [vmem:[%s246 + $0x20] sm:$0xff]
      %v700 = vld [vmem:[%s246 + $0x28] sm:$0xff]
      %v701 = vld [vmem:[%s246 + $0x30] sm:$0xff]
      %v702 = vld [vmem:[%s246 + $0x38] sm:$0xff]
      %v703 = vld [vmem:[%s246 + $0x40] sm:$0xff]
      %713 = vrot.lane.b32.xlu0 %v695, 106
      %v714 = vpop.permute.xlu0 %713
      %715 = vrot.lane.b32.xlu0 %v696, 106
      %v716 = vpop.permute.xlu0 %715
      %717 = vrot.lane.b32.xlu0 %v697, 106
      %v718 = vpop.permute.xlu0 %717
      %719 = vrot.lane.b32.xlu0 %v698, 106
      %v720 = vpop.permute.xlu0 %719
      %721 = vrot.lane.b32.xlu0 %v699, 106
      %v722 = vpop.permute.xlu0 %721
      %723 = vrot.lane.b32.xlu0 %v700, 106
      %v724 = vpop.permute.xlu0 %723
      %725 = vrot.lane.b32.xlu0 %v701, 106
      %v726 = vpop.permute.xlu0 %725
      %727 = vrot.lane.b32.xlu0 %v702, 106
      %v728 = vpop.permute.xlu0 %727
      %729 = vrot.lane.b32.xlu0 %v703, 106
      %v730 = vpop.permute.xlu0 %729
      %vm731 = vcmask 867328
      %v732 = vsel %vm731, %v714, %v716
      %v733 = vsel %vm731, %v716, %v718
      %v734 = vsel %vm731, %v718, %v720
      %v735 = vsel %vm731, %v720, %v722
      %v736 = vsel %vm731, %v722, %v724
      %v737 = vsel %vm731, %v724, %v726
      %v738 = vsel %vm731, %v726, %v728
      %v739 = vsel %vm731, %v728, %v730
      %748 = vst [vmem:[#allocation2 + $0x200] sm:$0xff] %v732
      %749 = vst [vmem:[#allocation2 + $0x208] sm:$0xff] %v733
      %750 = vst [vmem:[#allocation2 + $0x210] sm:$0xff] %v734
      %751 = vst [vmem:[#allocation2 + $0x218] sm:$0xff] %v735
      %752 = vst [vmem:[#allocation2 + $0x220] sm:$0xff] %v736
      %753 = vst [vmem:[#allocation2 + $0x228] sm:$0xff] %v737
      %754 = vst [vmem:[#allocation2 + $0x230] sm:$0xff] %v738
      %755 = vst [vmem:[#allocation2 + $0x238] sm:$0xff] %v739
      %v756 = vld [vmem:[%s246] sm:$0xff]
      %v757 = vld [vmem:[%s246 + $0x8] sm:$0xff]
      %v758 = vld [vmem:[%s246 + $0x10] sm:$0xff]
      %v759 = vld [vmem:[%s246 + $0x18] sm:$0xff]
      %v760 = vld [vmem:[%s246 + $0x20] sm:$0xff]
      %v761 = vld [vmem:[%s246 + $0x28] sm:$0xff]
      %v762 = vld [vmem:[%s246 + $0x30] sm:$0xff]
      %v763 = vld [vmem:[%s246 + $0x38] sm:$0xff]
      %v764 = vld [vmem:[%s246 + $0x40] sm:$0xff]
      %774 = vrot.lane.b32.xlu0 %v756, 28
      %v775 = vpop.permute.xlu0 %774
      %776 = vrot.lane.b32.xlu0 %v757, 28
      %v777 = vpop.permute.xlu0 %776
      %778 = vrot.lane.b32.xlu0 %v758, 28
      %v779 = vpop.permute.xlu0 %778
      %780 = vrot.lane.b32.xlu0 %v759, 28
      %v781 = vpop.permute.xlu0 %780
      %782 = vrot.lane.b32.xlu0 %v760, 28
      %v783 = vpop.permute.xlu0 %782
      %784 = vrot.lane.b32.xlu0 %v761, 28
      %v785 = vpop.permute.xlu0 %784
      %786 = vrot.lane.b32.xlu0 %v762, 28
      %v787 = vpop.permute.xlu0 %786
      %788 = vrot.lane.b32.xlu0 %v763, 28
      %v789 = vpop.permute.xlu0 %788
      %790 = vrot.lane.b32.xlu0 %v764, 28
      %v791 = vpop.permute.xlu0 %790
      %vm792 = vcmask 228352
      %v793 = vsel %vm792, %v775, %v777
      %v794 = vsel %vm792, %v777, %v779
      %v795 = vsel %vm792, %v779, %v781
      %v796 = vsel %vm792, %v781, %v783
      %v797 = vsel %vm792, %v783, %v785
      %v798 = vsel %vm792, %v785, %v787
      %v799 = vsel %vm792, %v787, %v789
      %v800 = vsel %vm792, %v789, %v791
      %809 = vst [vmem:[#allocation2 + $0x240] sm:$0xff] %v793
      %810 = vst [vmem:[#allocation2 + $0x248] sm:$0xff] %v794
      %811 = vst [vmem:[#allocation2 + $0x250] sm:$0xff] %v795
      %812 = vst [vmem:[#allocation2 + $0x258] sm:$0xff] %v796
      %813 = vst [vmem:[#allocation2 + $0x260] sm:$0xff] %v797
      %814 = vst [vmem:[#allocation2 + $0x268] sm:$0xff] %v798
      %815 = vst [vmem:[#allocation2 + $0x270] sm:$0xff] %v799
      %816 = vst [vmem:[#allocation2 + $0x278] sm:$0xff] %v800
      %v817 = vld [vmem:[%s246] sm:$0xff]
      %v818 = vld [vmem:[%s246 + $0x8] sm:$0xff]
      %v819 = vld [vmem:[%s246 + $0x10] sm:$0xff]
      %v820 = vld [vmem:[%s246 + $0x18] sm:$0xff]
      %v821 = vld [vmem:[%s246 + $0x20] sm:$0xff]
      %v822 = vld [vmem:[%s246 + $0x28] sm:$0xff]
      %v823 = vld [vmem:[%s246 + $0x30] sm:$0xff]
      %v824 = vld [vmem:[%s246 + $0x38] sm:$0xff]
      %v825 = vld [vmem:[%s246 + $0x40] sm:$0xff]
      %835 = vrot.lane.b32.xlu0 %v817, 27
      %v836 = vpop.permute.xlu0 %835
      %837 = vrot.lane.b32.xlu0 %v818, 27
      %v838 = vpop.permute.xlu0 %837
      %839 = vrot.lane.b32.xlu0 %v819, 27
      %v840 = vpop.permute.xlu0 %839
      %841 = vrot.lane.b32.xlu0 %v820, 27
      %v842 = vpop.permute.xlu0 %841
      %843 = vrot.lane.b32.xlu0 %v821, 27
      %v844 = vpop.permute.xlu0 %843
      %845 = vrot.lane.b32.xlu0 %v822, 27
      %v846 = vpop.permute.xlu0 %845
      %847 = vrot.lane.b32.xlu0 %v823, 27
      %v848 = vpop.permute.xlu0 %847
      %849 = vrot.lane.b32.xlu0 %v824, 27
      %v850 = vpop.permute.xlu0 %849
      %851 = vrot.lane.b32.xlu0 %v825, 27
      %v852 = vpop.permute.xlu0 %851
      %vm853 = vcmask 220160
      %v854 = vsel %vm853, %v836, %v838
      %v855 = vsel %vm853, %v838, %v840
      %v856 = vsel %vm853, %v840, %v842
      %v857 = vsel %vm853, %v842, %v844
      %v858 = vsel %vm853, %v844, %v846
      %v859 = vsel %vm853, %v846, %v848
      %v860 = vsel %vm853, %v848, %v850
      %v861 = vsel %vm853, %v850, %v852
      %870 = vst [vmem:[#allocation2 + $0x280] sm:$0xff] %v854
      %871 = vst [vmem:[#allocation2 + $0x288] sm:$0xff] %v855
      %872 = vst [vmem:[#allocation2 + $0x290] sm:$0xff] %v856
      %873 = vst [vmem:[#allocation2 + $0x298] sm:$0xff] %v857
      %874 = vst [vmem:[#allocation2 + $0x2a0] sm:$0xff] %v858
      %875 = vst [vmem:[#allocation2 + $0x2a8] sm:$0xff] %v859
      %876 = vst [vmem:[#allocation2 + $0x2b0] sm:$0xff] %v860
      %877 = vst [vmem:[#allocation2 + $0x2b8] sm:$0xff] %v861
      %v878 = vld [vmem:[%s246] sm:$0xff]
      %v879 = vld [vmem:[%s246 + $0x8] sm:$0xff]
      %v880 = vld [vmem:[%s246 + $0x10] sm:$0xff]
      %v881 = vld [vmem:[%s246 + $0x18] sm:$0xff]
      %v882 = vld [vmem:[%s246 + $0x20] sm:$0xff]
      %v883 = vld [vmem:[%s246 + $0x28] sm:$0xff]
      %v884 = vld [vmem:[%s246 + $0x30] sm:$0xff]
      %v885 = vld [vmem:[%s246 + $0x38] sm:$0xff]
      %v886 = vld [vmem:[%s246 + $0x40] sm:$0xff]
      %896 = vrot.lane.b32.xlu0 %v878, 26
      %v897 = vpop.permute.xlu0 %896
      %898 = vrot.lane.b32.xlu0 %v879, 26
      %v899 = vpop.permute.xlu0 %898
      %900 = vrot.lane.b32.xlu0 %v880, 26
      %v901 = vpop.permute.xlu0 %900
      %902 = vrot.lane.b32.xlu0 %v881, 26
      %v903 = vpop.permute.xlu0 %902
      %904 = vrot.lane.b32.xlu0 %v882, 26
      %v905 = vpop.permute.xlu0 %904
      %906 = vrot.lane.b32.xlu0 %v883, 26
      %v907 = vpop.permute.xlu0 %906
      %908 = vrot.lane.b32.xlu0 %v884, 26
      %v909 = vpop.permute.xlu0 %908
      %910 = vrot.lane.b32.xlu0 %v885, 26
      %v911 = vpop.permute.xlu0 %910
      %912 = vrot.lane.b32.xlu0 %v886, 26
      %v913 = vpop.permute.xlu0 %912
      %vm914 = vcmask 211968
      %v915 = vsel %vm914, %v897, %v899
      %v916 = vsel %vm914, %v899, %v901
      %v917 = vsel %vm914, %v901, %v903
      %v918 = vsel %vm914, %v903, %v905
      %v919 = vsel %vm914, %v905, %v907
      %v920 = vsel %vm914, %v907, %v909
      %v921 = vsel %vm914, %v909, %v911
      %v922 = vsel %vm914, %v911, %v913
      %931 = vst [vmem:[#allocation2 + $0x2c0] sm:$0xff] %v915
      %932 = vst [vmem:[#allocation2 + $0x2c8] sm:$0xff] %v916
      %933 = vst [vmem:[#allocation2 + $0x2d0] sm:$0xff] %v917
      %934 = vst [vmem:[#allocation2 + $0x2d8] sm:$0xff] %v918
      %935 = vst [vmem:[#allocation2 + $0x2e0] sm:$0xff] %v919
      %936 = vst [vmem:[#allocation2 + $0x2e8] sm:$0xff] %v920
      %937 = vst [vmem:[#allocation2 + $0x2f0] sm:$0xff] %v921
      %938 = vst [vmem:[#allocation2 + $0x2f8] sm:$0xff] %v922
      %v939 = vld [vmem:[%s246] sm:$0xff]
      %v940 = vld [vmem:[%s246 + $0x8] sm:$0xff]
      %v941 = vld [vmem:[%s246 + $0x10] sm:$0xff]
      %v942 = vld [vmem:[%s246 + $0x18] sm:$0xff]
      %v943 = vld [vmem:[%s246 + $0x20] sm:$0xff]
      %v944 = vld [vmem:[%s246 + $0x28] sm:$0xff]
      %v945 = vld [vmem:[%s246 + $0x30] sm:$0xff]
      %v946 = vld [vmem:[%s246 + $0x38] sm:$0xff]
      %v947 = vld [vmem:[%s246 + $0x40] sm:$0xff]
      %957 = vrot.lane.b32.xlu0 %v939, 18
      %v958 = vpop.permute.xlu0 %957
      %959 = vrot.lane.b32.xlu0 %v940, 18
      %v960 = vpop.permute.xlu0 %959
      %961 = vrot.lane.b32.xlu0 %v941, 18
      %v962 = vpop.permute.xlu0 %961
      %963 = vrot.lane.b32.xlu0 %v942, 18
      %v964 = vpop.permute.xlu0 %963
      %965 = vrot.lane.b32.xlu0 %v943, 18
      %v966 = vpop.permute.xlu0 %965
      %967 = vrot.lane.b32.xlu0 %v944, 18
      %v968 = vpop.permute.xlu0 %967
      %969 = vrot.lane.b32.xlu0 %v945, 18
      %v970 = vpop.permute.xlu0 %969
      %971 = vrot.lane.b32.xlu0 %v946, 18
      %v972 = vpop.permute.xlu0 %971
      %973 = vrot.lane.b32.xlu0 %v947, 18
      %v974 = vpop.permute.xlu0 %973
      %vm975 = vcmask 146432
      %v976 = vsel %vm975, %v958, %v960
      %v977 = vsel %vm975, %v960, %v962
      %v978 = vsel %vm975, %v962, %v964
      %v979 = vsel %vm975, %v964, %v966
      %v980 = vsel %vm975, %v966, %v968
      %v981 = vsel %vm975, %v968, %v970
      %v982 = vsel %vm975, %v970, %v972
      %v983 = vsel %vm975, %v972, %v974
      %992 = vst [vmem:[#allocation2 + $0x300] sm:$0xff] %v976
      %993 = vst [vmem:[#allocation2 + $0x308] sm:$0xff] %v977
      %994 = vst [vmem:[#allocation2 + $0x310] sm:$0xff] %v978
      %995 = vst [vmem:[#allocation2 + $0x318] sm:$0xff] %v979
      %996 = vst [vmem:[#allocation2 + $0x320] sm:$0xff] %v980
      %997 = vst [vmem:[#allocation2 + $0x328] sm:$0xff] %v981
      %998 = vst [vmem:[#allocation2 + $0x330] sm:$0xff] %v982
      %999 = vst [vmem:[#allocation2 + $0x338] sm:$0xff] %v983
      %v1000 = vld [vmem:[%s246] sm:$0xff]
      %v1001 = vld [vmem:[%s246 + $0x8] sm:$0xff]
      %v1002 = vld [vmem:[%s246 + $0x10] sm:$0xff]
      %v1003 = vld [vmem:[%s246 + $0x18] sm:$0xff]
      %v1004 = vld [vmem:[%s246 + $0x20] sm:$0xff]
      %v1005 = vld [vmem:[%s246 + $0x28] sm:$0xff]
      %v1006 = vld [vmem:[%s246 + $0x30] sm:$0xff]
      %v1007 = vld [vmem:[%s246 + $0x38] sm:$0xff]
      %v1008 = vld [vmem:[%s246 + $0x40] sm:$0xff]
      %1018 = vrot.lane.b32.xlu0 %v1000, 17
      %v1019 = vpop.permute.xlu0 %1018
      %1020 = vrot.lane.b32.xlu0 %v1001, 17
      %v1021 = vpop.permute.xlu0 %1020
      %1022 = vrot.lane.b32.xlu0 %v1002, 17
      %v1023 = vpop.permute.xlu0 %1022
      %1024 = vrot.lane.b32.xlu0 %v1003, 17
      %v1025 = vpop.permute.xlu0 %1024
      %1026 = vrot.lane.b32.xlu0 %v1004, 17
      %v1027 = vpop.permute.xlu0 %1026
      %1028 = vrot.lane.b32.xlu0 %v1005, 17
      %v1029 = vpop.permute.xlu0 %1028
      %1030 = vrot.lane.b32.xlu0 %v1006, 17
      %v1031 = vpop.permute.xlu0 %1030
      %1032 = vrot.lane.b32.xlu0 %v1007, 17
      %v1033 = vpop.permute.xlu0 %1032
      %1034 = vrot.lane.b32.xlu0 %v1008, 17
      %v1035 = vpop.permute.xlu0 %1034
      %vm1036 = vcmask 138240
      %v1037 = vsel %vm1036, %v1019, %v1021
      %v1038 = vsel %vm1036, %v1021, %v1023
      %v1039 = vsel %vm1036, %v1023, %v1025
      %v1040 = vsel %vm1036, %v1025, %v1027
      %v1041 = vsel %vm1036, %v1027, %v1029
      %v1042 = vsel %vm1036, %v1029, %v1031
      %v1043 = vsel %vm1036, %v1031, %v1033
      %v1044 = vsel %vm1036, %v1033, %v1035
      %1053 = vst [vmem:[#allocation2 + $0x340] sm:$0xff] %v1037
      %1054 = vst [vmem:[#allocation2 + $0x348] sm:$0xff] %v1038
      %1055 = vst [vmem:[#allocation2 + $0x350] sm:$0xff] %v1039
      %1056 = vst [vmem:[#allocation2 + $0x358] sm:$0xff] %v1040
      %1057 = vst [vmem:[#allocation2 + $0x360] sm:$0xff] %v1041
      %1058 = vst [vmem:[#allocation2 + $0x368] sm:$0xff] %v1042
      %1059 = vst [vmem:[#allocation2 + $0x370] sm:$0xff] %v1043
      %1060 = vst [vmem:[#allocation2 + $0x378] sm:$0xff] %v1044
      %v1061 = vld [vmem:[%s246] sm:$0xff]
      %v1062 = vld [vmem:[%s246 + $0x8] sm:$0xff]
      %v1063 = vld [vmem:[%s246 + $0x10] sm:$0xff]
      %v1064 = vld [vmem:[%s246 + $0x18] sm:$0xff]
      %v1065 = vld [vmem:[%s246 + $0x20] sm:$0xff]
      %v1066 = vld [vmem:[%s246 + $0x28] sm:$0xff]
      %v1067 = vld [vmem:[%s246 + $0x30] sm:$0xff]
      %v1068 = vld [vmem:[%s246 + $0x38] sm:$0xff]
      %v1069 = vld [vmem:[%s246 + $0x40] sm:$0xff]
      %1079 = vrot.lane.b32.xlu0 %v1061, 16
      %v1080 = vpop.permute.xlu0 %1079
      %1081 = vrot.lane.b32.xlu0 %v1062, 16
      %v1082 = vpop.permute.xlu0 %1081
      %1083 = vrot.lane.b32.xlu0 %v1063, 16
      %v1084 = vpop.permute.xlu0 %1083
      %1085 = vrot.lane.b32.xlu0 %v1064, 16
      %v1086 = vpop.permute.xlu0 %1085
      %1087 = vrot.lane.b32.xlu0 %v1065, 16
      %v1088 = vpop.permute.xlu0 %1087
      %1089 = vrot.lane.b32.xlu0 %v1066, 16
      %v1090 = vpop.permute.xlu0 %1089
      %1091 = vrot.lane.b32.xlu0 %v1067, 16
      %v1092 = vpop.permute.xlu0 %1091
      %1093 = vrot.lane.b32.xlu0 %v1068, 16
      %v1094 = vpop.permute.xlu0 %1093
      %1095 = vrot.lane.b32.xlu0 %v1069, 16
      %v1096 = vpop.permute.xlu0 %1095
      %vm1097 = vcmask 130048
      %v1098 = vsel %vm1097, %v1080, %v1082
      %v1099 = vsel %vm1097, %v1082, %v1084
      %v1100 = vsel %vm1097, %v1084, %v1086
      %v1101 = vsel %vm1097, %v1086, %v1088
      %v1102 = vsel %vm1097, %v1088, %v1090
      %v1103 = vsel %vm1097, %v1090, %v1092
      %v1104 = vsel %vm1097, %v1092, %v1094
      %v1105 = vsel %vm1097, %v1094, %v1096
      %1114 = vst [vmem:[#allocation2 + $0x380] sm:$0xff] %v1098
      %1115 = vst [vmem:[#allocation2 + $0x388] sm:$0xff] %v1099
      %1116 = vst [vmem:[#allocation2 + $0x390] sm:$0xff] %v1100
      %1117 = vst [vmem:[#allocation2 + $0x398] sm:$0xff] %v1101
      %1118 = vst [vmem:[#allocation2 + $0x3a0] sm:$0xff] %v1102
      %1119 = vst [vmem:[#allocation2 + $0x3a8] sm:$0xff] %v1103
      %1120 = vst [vmem:[#allocation2 + $0x3b0] sm:$0xff] %v1104
      %1121 = vst [vmem:[#allocation2 + $0x3b8] sm:$0xff] %v1105
      %v1122 = vld [vmem:[%s246] sm:$0xff]
      %v1123 = vld [vmem:[%s246 + $0x8] sm:$0xff]
      %v1124 = vld [vmem:[%s246 + $0x10] sm:$0xff]
      %v1125 = vld [vmem:[%s246 + $0x18] sm:$0xff]
      %v1126 = vld [vmem:[%s246 + $0x20] sm:$0xff]
      %v1127 = vld [vmem:[%s246 + $0x28] sm:$0xff]
      %v1128 = vld [vmem:[%s246 + $0x30] sm:$0xff]
      %v1129 = vld [vmem:[%s246 + $0x38] sm:$0xff]
      %v1130 = vld [vmem:[%s246 + $0x40] sm:$0xff]
      %1140 = vrot.lane.b32.xlu0 %v1122, 8
      %v1141 = vpop.permute.xlu0 %1140
      %1142 = vrot.lane.b32.xlu0 %v1123, 8
      %v1143 = vpop.permute.xlu0 %1142
      %1144 = vrot.lane.b32.xlu0 %v1124, 8
      %v1145 = vpop.permute.xlu0 %1144
      %1146 = vrot.lane.b32.xlu0 %v1125, 8
      %v1147 = vpop.permute.xlu0 %1146
      %1148 = vrot.lane.b32.xlu0 %v1126, 8
      %v1149 = vpop.permute.xlu0 %1148
      %1150 = vrot.lane.b32.xlu0 %v1127, 8
      %v1151 = vpop.permute.xlu0 %1150
      %1152 = vrot.lane.b32.xlu0 %v1128, 8
      %v1153 = vpop.permute.xlu0 %1152
      %1154 = vrot.lane.b32.xlu0 %v1129, 8
      %v1155 = vpop.permute.xlu0 %1154
      %1156 = vrot.lane.b32.xlu0 %v1130, 8
      %v1157 = vpop.permute.xlu0 %1156
      %vm1158 = vcmask 64512
      %v1159 = vsel %vm1158, %v1141, %v1143
      %v1160 = vsel %vm1158, %v1143, %v1145
      %v1161 = vsel %vm1158, %v1145, %v1147
      %v1162 = vsel %vm1158, %v1147, %v1149
      %v1163 = vsel %vm1158, %v1149, %v1151
      %v1164 = vsel %vm1158, %v1151, %v1153
      %v1165 = vsel %vm1158, %v1153, %v1155
      %v1166 = vsel %vm1158, %v1155, %v1157
      %1175 = vst [vmem:[#allocation2 + $0x3c0] sm:$0xff] %v1159
      %1176 = vst [vmem:[#allocation2 + $0x3c8] sm:$0xff] %v1160
      %1177 = vst [vmem:[#allocation2 + $0x3d0] sm:$0xff] %v1161
      %1178 = vst [vmem:[#allocation2 + $0x3d8] sm:$0xff] %v1162
      %1179 = vst [vmem:[#allocation2 + $0x3e0] sm:$0xff] %v1163
      %1180 = vst [vmem:[#allocation2 + $0x3e8] sm:$0xff] %v1164
      %1181 = vst [vmem:[#allocation2 + $0x3f0] sm:$0xff] %v1165
      %1182 = vst [vmem:[#allocation2 + $0x3f8] sm:$0xff] %v1166
      %v1183 = vld [vmem:[%s246] sm:$0xff]
      %v1184 = vld [vmem:[%s246 + $0x8] sm:$0xff]
      %v1185 = vld [vmem:[%s246 + $0x10] sm:$0xff]
      %v1186 = vld [vmem:[%s246 + $0x18] sm:$0xff]
      %v1187 = vld [vmem:[%s246 + $0x20] sm:$0xff]
      %v1188 = vld [vmem:[%s246 + $0x28] sm:$0xff]
      %v1189 = vld [vmem:[%s246 + $0x30] sm:$0xff]
      %v1190 = vld [vmem:[%s246 + $0x38] sm:$0xff]
      %v1191 = vld [vmem:[%s246 + $0x40] sm:$0xff]
      %1201 = vrot.lane.b32.xlu0 %v1183, 7
      %v1202 = vpop.permute.xlu0 %1201
      %1203 = vrot.lane.b32.xlu0 %v1184, 7
      %v1204 = vpop.permute.xlu0 %1203
      %1205 = vrot.lane.b32.xlu0 %v1185, 7
      %v1206 = vpop.permute.xlu0 %1205
      %1207 = vrot.lane.b32.xlu0 %v1186, 7
      %v1208 = vpop.permute.xlu0 %1207
      %1209 = vrot.lane.b32.xlu0 %v1187, 7
      %v1210 = vpop.permute.xlu0 %1209
      %1211 = vrot.lane.b32.xlu0 %v1188, 7
      %v1212 = vpop.permute.xlu0 %1211
      %1213 = vrot.lane.b32.xlu0 %v1189, 7
      %v1214 = vpop.permute.xlu0 %1213
      %1215 = vrot.lane.b32.xlu0 %v1190, 7
      %v1216 = vpop.permute.xlu0 %1215
      %1217 = vrot.lane.b32.xlu0 %v1191, 7
      %v1218 = vpop.permute.xlu0 %1217
      %vm1219 = vcmask 56320
      %v1220 = vsel %vm1219, %v1202, %v1204
      %v1221 = vsel %vm1219, %v1204, %v1206
      %v1222 = vsel %vm1219, %v1206, %v1208
      %v1223 = vsel %vm1219, %v1208, %v1210
      %v1224 = vsel %vm1219, %v1210, %v1212
      %v1225 = vsel %vm1219, %v1212, %v1214
      %v1226 = vsel %vm1219, %v1214, %v1216
      %v1227 = vsel %vm1219, %v1216, %v1218
      %1236 = vst [vmem:[#allocation2 + $0x400] sm:$0xff] %v1220
      %1237 = vst [vmem:[#allocation2 + $0x408] sm:$0xff] %v1221
      %1238 = vst [vmem:[#allocation2 + $0x410] sm:$0xff] %v1222
      %1239 = vst [vmem:[#allocation2 + $0x418] sm:$0xff] %v1223
      %1240 = vst [vmem:[#allocation2 + $0x420] sm:$0xff] %v1224
      %1241 = vst [vmem:[#allocation2 + $0x428] sm:$0xff] %v1225
      %1242 = vst [vmem:[#allocation2 + $0x430] sm:$0xff] %v1226
      %1243 = vst [vmem:[#allocation2 + $0x438] sm:$0xff] %v1227
      %v1244 = vld [vmem:[%s246] sm:$0xff]
      %v1245 = vld [vmem:[%s246 + $0x8] sm:$0xff]
      %v1246 = vld [vmem:[%s246 + $0x10] sm:$0xff]
      %v1247 = vld [vmem:[%s246 + $0x18] sm:$0xff]
      %v1248 = vld [vmem:[%s246 + $0x20] sm:$0xff]
      %v1249 = vld [vmem:[%s246 + $0x28] sm:$0xff]
      %v1250 = vld [vmem:[%s246 + $0x30] sm:$0xff]
      %v1251 = vld [vmem:[%s246 + $0x38] sm:$0xff]
      %v1252 = vld [vmem:[%s246 + $0x40] sm:$0xff]
      %1262 = vrot.lane.b32.xlu0 %v1244, 6
      %v1263 = vpop.permute.xlu0 %1262
      %1264 = vrot.lane.b32.xlu0 %v1245, 6
      %v1265 = vpop.permute.xlu0 %1264
      %1266 = vrot.lane.b32.xlu0 %v1246, 6
      %v1267 = vpop.permute.xlu0 %1266
      %1268 = vrot.lane.b32.xlu0 %v1247, 6
      %v1269 = vpop.permute.xlu0 %1268
      %1270 = vrot.lane.b32.xlu0 %v1248, 6
      %v1271 = vpop.permute.xlu0 %1270
      %1272 = vrot.lane.b32.xlu0 %v1249, 6
      %v1273 = vpop.permute.xlu0 %1272
      %1274 = vrot.lane.b32.xlu0 %v1250, 6
      %v1275 = vpop.permute.xlu0 %1274
      %1276 = vrot.lane.b32.xlu0 %v1251, 6
      %v1277 = vpop.permute.xlu0 %1276
      %1278 = vrot.lane.b32.xlu0 %v1252, 6
      %v1279 = vpop.permute.xlu0 %1278
      %vm1280 = vcmask 48128
      %v1281 = vsel %vm1280, %v1263, %v1265
      %v1282 = vsel %vm1280, %v1265, %v1267
      %v1283 = vsel %vm1280, %v1267, %v1269
      %v1284 = vsel %vm1280, %v1269, %v1271
      %v1285 = vsel %vm1280, %v1271, %v1273
      %v1286 = vsel %vm1280, %v1273, %v1275
      %v1287 = vsel %vm1280, %v1275, %v1277
      %v1288 = vsel %vm1280, %v1277, %v1279
      %1297 = vst [vmem:[#allocation2 + $0x440] sm:$0xff] %v1281
      %1298 = vst [vmem:[#allocation2 + $0x448] sm:$0xff] %v1282
      %1299 = vst [vmem:[#allocation2 + $0x450] sm:$0xff] %v1283
      %1300 = vst [vmem:[#allocation2 + $0x458] sm:$0xff] %v1284
      %1301 = vst [vmem:[#allocation2 + $0x460] sm:$0xff] %v1285
      %1302 = vst [vmem:[#allocation2 + $0x468] sm:$0xff] %v1286
      %1303 = vst [vmem:[#allocation2 + $0x470] sm:$0xff] %v1287
      %1304 = vst [vmem:[#allocation2 + $0x478] sm:$0xff] %v1288
      %v1305 = vld [vmem:[%s246 + $0x8] sm:$0xff]
      %v1306 = vld [vmem:[%s246 + $0x10] sm:$0xff]
      %v1307 = vld [vmem:[%s246 + $0x18] sm:$0xff]
      %v1308 = vld [vmem:[%s246 + $0x20] sm:$0xff]
      %v1309 = vld [vmem:[%s246 + $0x28] sm:$0xff]
      %v1310 = vld [vmem:[%s246 + $0x30] sm:$0xff]
      %v1311 = vld [vmem:[%s246 + $0x38] sm:$0xff]
      %v1312 = vld [vmem:[%s246 + $0x40] sm:$0xff]
      %v1313 = vld [vmem:[%s246 + $0x48] sm:$0xff]
      %1323 = vrot.lane.b32.xlu0 %v1305, 56
      %v1324 = vpop.permute.xlu0 %1323
      %1325 = vrot.lane.b32.xlu0 %v1306, 56
      %v1326 = vpop.permute.xlu0 %1325
      %1327 = vrot.lane.b32.xlu0 %v1307, 56
      %v1328 = vpop.permute.xlu0 %1327
      %1329 = vrot.lane.b32.xlu0 %v1308, 56
      %v1330 = vpop.permute.xlu0 %1329
      %1331 = vrot.lane.b32.xlu0 %v1309, 56
      %v1332 = vpop.permute.xlu0 %1331
      %1333 = vrot.lane.b32.xlu0 %v1310, 56
      %v1334 = vpop.permute.xlu0 %1333
      %1335 = vrot.lane.b32.xlu0 %v1311, 56
      %v1336 = vpop.permute.xlu0 %1335
      %1337 = vrot.lane.b32.xlu0 %v1312, 56
      %v1338 = vpop.permute.xlu0 %1337
      %1339 = vrot.lane.b32.xlu0 %v1313, 56
      %v1340 = vpop.permute.xlu0 %1339
      %vm1341 = vcmask 457728
      %v1342 = vsel %vm1341, %v1324, %v1326
      %v1343 = vsel %vm1341, %v1326, %v1328
      %v1344 = vsel %vm1341, %v1328, %v1330
      %v1345 = vsel %vm1341, %v1330, %v1332
      %v1346 = vsel %vm1341, %v1332, %v1334
      %v1347 = vsel %vm1341, %v1334, %v1336
      %v1348 = vsel %vm1341, %v1336, %v1338
      %v1349 = vsel %vm1341, %v1338, %v1340
      %1358 = vst [vmem:[#allocation2 + $0x480] sm:$0xff] %v1342
      %1359 = vst [vmem:[#allocation2 + $0x488] sm:$0xff] %v1343
      %1360 = vst [vmem:[#allocation2 + $0x490] sm:$0xff] %v1344
      %1361 = vst [vmem:[#allocation2 + $0x498] sm:$0xff] %v1345
      %1362 = vst [vmem:[#allocation2 + $0x4a0] sm:$0xff] %v1346
      %1363 = vst [vmem:[#allocation2 + $0x4a8] sm:$0xff] %v1347
      %1364 = vst [vmem:[#allocation2 + $0x4b0] sm:$0xff] %v1348
      %1365 = vst [vmem:[#allocation2 + $0x4b8] sm:$0xff] %v1349
      %v1366 = vld [vmem:[%s246 + $0x8] sm:$0xff]
      %v1367 = vld [vmem:[%s246 + $0x10] sm:$0xff]
      %v1368 = vld [vmem:[%s246 + $0x18] sm:$0xff]
      %v1369 = vld [vmem:[%s246 + $0x20] sm:$0xff]
      %v1370 = vld [vmem:[%s246 + $0x28] sm:$0xff]
      %v1371 = vld [vmem:[%s246 + $0x30] sm:$0xff]
      %v1372 = vld [vmem:[%s246 + $0x38] sm:$0xff]
      %v1373 = vld [vmem:[%s246 + $0x40] sm:$0xff]
      %v1374 = vld [vmem:[%s246 + $0x48] sm:$0xff]
      %1384 = vrot.lane.b32.xlu0 %v1366, 55
      %v1385 = vpop.permute.xlu0 %1384
      %1386 = vrot.lane.b32.xlu0 %v1367, 55
      %v1387 = vpop.permute.xlu0 %1386
      %1388 = vrot.lane.b32.xlu0 %v1368, 55
      %v1389 = vpop.permute.xlu0 %1388
      %1390 = vrot.lane.b32.xlu0 %v1369, 55
      %v1391 = vpop.permute.xlu0 %1390
      %1392 = vrot.lane.b32.xlu0 %v1370, 55
      %v1393 = vpop.permute.xlu0 %1392
      %1394 = vrot.lane.b32.xlu0 %v1371, 55
      %v1395 = vpop.permute.xlu0 %1394
      %1396 = vrot.lane.b32.xlu0 %v1372, 55
      %v1397 = vpop.permute.xlu0 %1396
      %1398 = vrot.lane.b32.xlu0 %v1373, 55
      %v1399 = vpop.permute.xlu0 %1398
      %1400 = vrot.lane.b32.xlu0 %v1374, 55
      %v1401 = vpop.permute.xlu0 %1400
      %vm1402 = vcmask 449536
      %v1403 = vsel %vm1402, %v1385, %v1387
      %v1404 = vsel %vm1402, %v1387, %v1389
      %v1405 = vsel %vm1402, %v1389, %v1391
      %v1406 = vsel %vm1402, %v1391, %v1393
      %v1407 = vsel %vm1402, %v1393, %v1395
      %v1408 = vsel %vm1402, %v1395, %v1397
      %v1409 = vsel %vm1402, %v1397, %v1399
      %v1410 = vsel %vm1402, %v1399, %v1401
      %1419 = vst [vmem:[#allocation2 + $0x4c0] sm:$0xff] %v1403
      %1420 = vst [vmem:[#allocation2 + $0x4c8] sm:$0xff] %v1404
      %1421 = vst [vmem:[#allocation2 + $0x4d0] sm:$0xff] %v1405
      %1422 = vst [vmem:[#allocation2 + $0x4d8] sm:$0xff] %v1406
      %1423 = vst [vmem:[#allocation2 + $0x4e0] sm:$0xff] %v1407
      %1424 = vst [vmem:[#allocation2 + $0x4e8] sm:$0xff] %v1408
      %1425 = vst [vmem:[#allocation2 + $0x4f0] sm:$0xff] %v1409
      %1426 = vst [vmem:[#allocation2 + $0x4f8] sm:$0xff] %v1410
      %v1427 = vld [vmem:[%s246 + $0x8] sm:$0xff]
      %v1428 = vld [vmem:[%s246 + $0x10] sm:$0xff]
      %v1429 = vld [vmem:[%s246 + $0x18] sm:$0xff]
      %v1430 = vld [vmem:[%s246 + $0x20] sm:$0xff]
      %v1431 = vld [vmem:[%s246 + $0x28] sm:$0xff]
      %v1432 = vld [vmem:[%s246 + $0x30] sm:$0xff]
      %v1433 = vld [vmem:[%s246 + $0x38] sm:$0xff]
      %v1434 = vld [vmem:[%s246 + $0x40] sm:$0xff]
      %v1435 = vld [vmem:[%s246 + $0x48] sm:$0xff]
      %1445 = vrot.lane.b32.xlu0 %v1427, 54
      %v1446 = vpop.permute.xlu0 %1445
      %1447 = vrot.lane.b32.xlu0 %v1428, 54
      %v1448 = vpop.permute.xlu0 %1447
      %1449 = vrot.lane.b32.xlu0 %v1429, 54
      %v1450 = vpop.permute.xlu0 %1449
      %1451 = vrot.lane.b32.xlu0 %v1430, 54
      %v1452 = vpop.permute.xlu0 %1451
      %1453 = vrot.lane.b32.xlu0 %v1431, 54
      %v1454 = vpop.permute.xlu0 %1453
      %1455 = vrot.lane.b32.xlu0 %v1432, 54
      %v1456 = vpop.permute.xlu0 %1455
      %1457 = vrot.lane.b32.xlu0 %v1433, 54
      %v1458 = vpop.permute.xlu0 %1457
      %1459 = vrot.lane.b32.xlu0 %v1434, 54
      %v1460 = vpop.permute.xlu0 %1459
      %1461 = vrot.lane.b32.xlu0 %v1435, 54
      %v1462 = vpop.permute.xlu0 %1461
      %vm1463 = vcmask 441344
      %v1464 = vsel %vm1463, %v1446, %v1448
      %v1465 = vsel %vm1463, %v1448, %v1450
      %v1466 = vsel %vm1463, %v1450, %v1452
      %v1467 = vsel %vm1463, %v1452, %v1454
      %v1468 = vsel %vm1463, %v1454, %v1456
      %v1469 = vsel %vm1463, %v1456, %v1458
      %v1470 = vsel %vm1463, %v1458, %v1460
      %v1471 = vsel %vm1463, %v1460, %v1462
      %1480 = vst [vmem:[#allocation2 + $0x500] sm:$0xff] %v1464
      %1481 = vst [vmem:[#allocation2 + $0x508] sm:$0xff] %v1465
      %1482 = vst [vmem:[#allocation2 + $0x510] sm:$0xff] %v1466
      %1483 = vst [vmem:[#allocation2 + $0x518] sm:$0xff] %v1467
      %1484 = vst [vmem:[#allocation2 + $0x520] sm:$0xff] %v1468
      %1485 = vst [vmem:[#allocation2 + $0x528] sm:$0xff] %v1469
      %1486 = vst [vmem:[#allocation2 + $0x530] sm:$0xff] %v1470
      %1487 = vst [vmem:[#allocation2 + $0x538] sm:$0xff] %v1471
      %v1488 = vld [vmem:[%s246 + $0x8] sm:$0xff]
      %v1489 = vld [vmem:[%s246 + $0x10] sm:$0xff]
      %v1490 = vld [vmem:[%s246 + $0x18] sm:$0xff]
      %v1491 = vld [vmem:[%s246 + $0x20] sm:$0xff]
      %v1492 = vld [vmem:[%s246 + $0x28] sm:$0xff]
      %v1493 = vld [vmem:[%s246 + $0x30] sm:$0xff]
      %v1494 = vld [vmem:[%s246 + $0x38] sm:$0xff]
      %v1495 = vld [vmem:[%s246 + $0x40] sm:$0xff]
      %v1496 = vld [vmem:[%s246 + $0x48] sm:$0xff]
      %1506 = vrot.lane.b32.xlu0 %v1488, 46
      %v1507 = vpop.permute.xlu0 %1506
      %1508 = vrot.lane.b32.xlu0 %v1489, 46
      %v1509 = vpop.permute.xlu0 %1508
      %1510 = vrot.lane.b32.xlu0 %v1490, 46
      %v1511 = vpop.permute.xlu0 %1510
      %1512 = vrot.lane.b32.xlu0 %v1491, 46
      %v1513 = vpop.permute.xlu0 %1512
      %1514 = vrot.lane.b32.xlu0 %v1492, 46
      %v1515 = vpop.permute.xlu0 %1514
      %1516 = vrot.lane.b32.xlu0 %v1493, 46
      %v1517 = vpop.permute.xlu0 %1516
      %1518 = vrot.lane.b32.xlu0 %v1494, 46
      %v1519 = vpop.permute.xlu0 %1518
      %1520 = vrot.lane.b32.xlu0 %v1495, 46
      %v1521 = vpop.permute.xlu0 %1520
      %1522 = vrot.lane.b32.xlu0 %v1496, 46
      %v1523 = vpop.permute.xlu0 %1522
      %vm1524 = vcmask 375808
      %v1525 = vsel %vm1524, %v1507, %v1509
      %v1526 = vsel %vm1524, %v1509, %v1511
      %v1527 = vsel %vm1524, %v1511, %v1513
      %v1528 = vsel %vm1524, %v1513, %v1515
      %v1529 = vsel %vm1524, %v1515, %v1517
      %v1530 = vsel %vm1524, %v1517, %v1519
      %v1531 = vsel %vm1524, %v1519, %v1521
      %v1532 = vsel %vm1524, %v1521, %v1523
      %1541 = vst [vmem:[#allocation2 + $0x540] sm:$0xff] %v1525
      %1542 = vst [vmem:[#allocation2 + $0x548] sm:$0xff] %v1526
      %1543 = vst [vmem:[#allocation2 + $0x550] sm:$0xff] %v1527
      %1544 = vst [vmem:[#allocation2 + $0x558] sm:$0xff] %v1528
      %1545 = vst [vmem:[#allocation2 + $0x560] sm:$0xff] %v1529
      %1546 = vst [vmem:[#allocation2 + $0x568] sm:$0xff] %v1530
      %1547 = vst [vmem:[#allocation2 + $0x570] sm:$0xff] %v1531
      %1548 = vst [vmem:[#allocation2 + $0x578] sm:$0xff] %v1532
      %v1549 = vld [vmem:[%s246 + $0x8] sm:$0xff]
      %v1550 = vld [vmem:[%s246 + $0x10] sm:$0xff]
      %v1551 = vld [vmem:[%s246 + $0x18] sm:$0xff]
      %v1552 = vld [vmem:[%s246 + $0x20] sm:$0xff]
      %v1553 = vld [vmem:[%s246 + $0x28] sm:$0xff]
      %v1554 = vld [vmem:[%s246 + $0x30] sm:$0xff]
      %v1555 = vld [vmem:[%s246 + $0x38] sm:$0xff]
      %v1556 = vld [vmem:[%s246 + $0x40] sm:$0xff]
      %v1557 = vld [vmem:[%s246 + $0x48] sm:$0xff]
      %1567 = vrot.lane.b32.xlu0 %v1549, 45
      %v1568 = vpop.permute.xlu0 %1567
      %1569 = vrot.lane.b32.xlu0 %v1550, 45
      %v1570 = vpop.permute.xlu0 %1569
      %1571 = vrot.lane.b32.xlu0 %v1551, 45
      %v1572 = vpop.permute.xlu0 %1571
      %1573 = vrot.lane.b32.xlu0 %v1552, 45
      %v1574 = vpop.permute.xlu0 %1573
      %1575 = vrot.lane.b32.xlu0 %v1553, 45
      %v1576 = vpop.permute.xlu0 %1575
      %1577 = vrot.lane.b32.xlu0 %v1554, 45
      %v1578 = vpop.permute.xlu0 %1577
      %1579 = vrot.lane.b32.xlu0 %v1555, 45
      %v1580 = vpop.permute.xlu0 %1579
      %1581 = vrot.lane.b32.xlu0 %v1556, 45
      %v1582 = vpop.permute.xlu0 %1581
      %1583 = vrot.lane.b32.xlu0 %v1557, 45
      %v1584 = vpop.permute.xlu0 %1583
      %vm1585 = vcmask 367616
      %v1586 = vsel %vm1585, %v1568, %v1570
      %v1587 = vsel %vm1585, %v1570, %v1572
      %v1588 = vsel %vm1585, %v1572, %v1574
      %v1589 = vsel %vm1585, %v1574, %v1576
      %v1590 = vsel %vm1585, %v1576, %v1578
      %v1591 = vsel %vm1585, %v1578, %v1580
      %v1592 = vsel %vm1585, %v1580, %v1582
      %v1593 = vsel %vm1585, %v1582, %v1584
      %1602 = vst [vmem:[#allocation2 + $0x580] sm:$0xff] %v1586
      %1603 = vst [vmem:[#allocation2 + $0x588] sm:$0xff] %v1587
      %1604 = vst [vmem:[#allocation2 + $0x590] sm:$0xff] %v1588
      %1605 = vst [vmem:[#allocation2 + $0x598] sm:$0xff] %v1589
      %1606 = vst [vmem:[#allocation2 + $0x5a0] sm:$0xff] %v1590
      %1607 = vst [vmem:[#allocation2 + $0x5a8] sm:$0xff] %v1591
      %1608 = vst [vmem:[#allocation2 + $0x5b0] sm:$0xff] %v1592
      %1609 = vst [vmem:[#allocation2 + $0x5b8] sm:$0xff] %v1593
      %v1610 = vld [vmem:[%s246 + $0x8] sm:$0xff]
      %v1611 = vld [vmem:[%s246 + $0x10] sm:$0xff]
      %v1612 = vld [vmem:[%s246 + $0x18] sm:$0xff]
      %v1613 = vld [vmem:[%s246 + $0x20] sm:$0xff]
      %v1614 = vld [vmem:[%s246 + $0x28] sm:$0xff]
      %v1615 = vld [vmem:[%s246 + $0x30] sm:$0xff]
      %v1616 = vld [vmem:[%s246 + $0x38] sm:$0xff]
      %v1617 = vld [vmem:[%s246 + $0x40] sm:$0xff]
      %v1618 = vld [vmem:[%s246 + $0x48] sm:$0xff]
      %1628 = vrot.lane.b32.xlu0 %v1610, 44
      %v1629 = vpop.permute.xlu0 %1628
      %1630 = vrot.lane.b32.xlu0 %v1611, 44
      %v1631 = vpop.permute.xlu0 %1630
      %1632 = vrot.lane.b32.xlu0 %v1612, 44
      %v1633 = vpop.permute.xlu0 %1632
      %1634 = vrot.lane.b32.xlu0 %v1613, 44
      %v1635 = vpop.permute.xlu0 %1634
      %1636 = vrot.lane.b32.xlu0 %v1614, 44
      %v1637 = vpop.permute.xlu0 %1636
      %1638 = vrot.lane.b32.xlu0 %v1615, 44
      %v1639 = vpop.permute.xlu0 %1638
      %1640 = vrot.lane.b32.xlu0 %v1616, 44
      %v1641 = vpop.permute.xlu0 %1640
      %1642 = vrot.lane.b32.xlu0 %v1617, 44
      %v1643 = vpop.permute.xlu0 %1642
      %1644 = vrot.lane.b32.xlu0 %v1618, 44
      %v1645 = vpop.permute.xlu0 %1644
      %vm1646 = vcmask 359424
      %v1647 = vsel %vm1646, %v1629, %v1631
      %v1648 = vsel %vm1646, %v1631, %v1633
      %v1649 = vsel %vm1646, %v1633, %v1635
      %v1650 = vsel %vm1646, %v1635, %v1637
      %v1651 = vsel %vm1646, %v1637, %v1639
      %v1652 = vsel %vm1646, %v1639, %v1641
      %v1653 = vsel %vm1646, %v1641, %v1643
      %v1654 = vsel %vm1646, %v1643, %v1645
      %1663 = vst [vmem:[#allocation2 + $0x5c0] sm:$0xff] %v1647
      %1664 = vst [vmem:[#allocation2 + $0x5c8] sm:$0xff] %v1648
      %1665 = vst [vmem:[#allocation2 + $0x5d0] sm:$0xff] %v1649
      %1666 = vst [vmem:[#allocation2 + $0x5d8] sm:$0xff] %v1650
      %1667 = vst [vmem:[#allocation2 + $0x5e0] sm:$0xff] %v1651
      %1668 = vst [vmem:[#allocation2 + $0x5e8] sm:$0xff] %v1652
      %1669 = vst [vmem:[#allocation2 + $0x5f0] sm:$0xff] %v1653
      %1670 = vst [vmem:[#allocation2 + $0x5f8] sm:$0xff] %v1654
      %v1671 = vld [vmem:[%s246 + $0x8] sm:$0xff]
      %v1672 = vld [vmem:[%s246 + $0x10] sm:$0xff]
      %v1673 = vld [vmem:[%s246 + $0x18] sm:$0xff]
      %v1674 = vld [vmem:[%s246 + $0x20] sm:$0xff]
      %v1675 = vld [vmem:[%s246 + $0x28] sm:$0xff]
      %v1676 = vld [vmem:[%s246 + $0x30] sm:$0xff]
      %v1677 = vld [vmem:[%s246 + $0x38] sm:$0xff]
      %v1678 = vld [vmem:[%s246 + $0x40] sm:$0xff]
      %v1679 = vld [vmem:[%s246 + $0x48] sm:$0xff]
      %1689 = vrot.lane.b32.xlu0 %v1671, 36
      %v1690 = vpop.permute.xlu0 %1689
      %1691 = vrot.lane.b32.xlu0 %v1672, 36
      %v1692 = vpop.permute.xlu0 %1691
      %1693 = vrot.lane.b32.xlu0 %v1673, 36
      %v1694 = vpop.permute.xlu0 %1693
      %1695 = vrot.lane.b32.xlu0 %v1674, 36
      %v1696 = vpop.permute.xlu0 %1695
      %1697 = vrot.lane.b32.xlu0 %v1675, 36
      %v1698 = vpop.permute.xlu0 %1697
      %1699 = vrot.lane.b32.xlu0 %v1676, 36
      %v1700 = vpop.permute.xlu0 %1699
      %1701 = vrot.lane.b32.xlu0 %v1677, 36
      %v1702 = vpop.permute.xlu0 %1701
      %1703 = vrot.lane.b32.xlu0 %v1678, 36
      %v1704 = vpop.permute.xlu0 %1703
      %1705 = vrot.lane.b32.xlu0 %v1679, 36
      %v1706 = vpop.permute.xlu0 %1705
      %vm1707 = vcmask 293888
      %v1708 = vsel %vm1707, %v1690, %v1692
      %v1709 = vsel %vm1707, %v1692, %v1694
      %v1710 = vsel %vm1707, %v1694, %v1696
      %v1711 = vsel %vm1707, %v1696, %v1698
      %v1712 = vsel %vm1707, %v1698, %v1700
      %v1713 = vsel %vm1707, %v1700, %v1702
      %v1714 = vsel %vm1707, %v1702, %v1704
      %v1715 = vsel %vm1707, %v1704, %v1706
      %1724 = vst [vmem:[#allocation2 + $0x600] sm:$0xff] %v1708
      %1725 = vst [vmem:[#allocation2 + $0x608] sm:$0xff] %v1709
      %1726 = vst [vmem:[#allocation2 + $0x610] sm:$0xff] %v1710
      %1727 = vst [vmem:[#allocation2 + $0x618] sm:$0xff] %v1711
      %1728 = vst [vmem:[#allocation2 + $0x620] sm:$0xff] %v1712
      %1729 = vst [vmem:[#allocation2 + $0x628] sm:$0xff] %v1713
      %1730 = vst [vmem:[#allocation2 + $0x630] sm:$0xff] %v1714
      %1731 = vst [vmem:[#allocation2 + $0x638] sm:$0xff] %v1715
      %v1732 = vld [vmem:[%s246 + $0x8] sm:$0xff]
      %v1733 = vld [vmem:[%s246 + $0x10] sm:$0xff]
      %v1734 = vld [vmem:[%s246 + $0x18] sm:$0xff]
      %v1735 = vld [vmem:[%s246 + $0x20] sm:$0xff]
      %v1736 = vld [vmem:[%s246 + $0x28] sm:$0xff]
      %v1737 = vld [vmem:[%s246 + $0x30] sm:$0xff]
      %v1738 = vld [vmem:[%s246 + $0x38] sm:$0xff]
      %v1739 = vld [vmem:[%s246 + $0x40] sm:$0xff]
      %v1740 = vld [vmem:[%s246 + $0x48] sm:$0xff]
      %1750 = vrot.lane.b32.xlu0 %v1732, 35
      %v1751 = vpop.permute.xlu0 %1750
      %1752 = vrot.lane.b32.xlu0 %v1733, 35
      %v1753 = vpop.permute.xlu0 %1752
      %1754 = vrot.lane.b32.xlu0 %v1734, 35
      %v1755 = vpop.permute.xlu0 %1754
      %1756 = vrot.lane.b32.xlu0 %v1735, 35
      %v1757 = vpop.permute.xlu0 %1756
      %1758 = vrot.lane.b32.xlu0 %v1736, 35
      %v1759 = vpop.permute.xlu0 %1758
      %1760 = vrot.lane.b32.xlu0 %v1737, 35
      %v1761 = vpop.permute.xlu0 %1760
      %1762 = vrot.lane.b32.xlu0 %v1738, 35
      %v1763 = vpop.permute.xlu0 %1762
      %1764 = vrot.lane.b32.xlu0 %v1739, 35
      %v1765 = vpop.permute.xlu0 %1764
      %1766 = vrot.lane.b32.xlu0 %v1740, 35
      %v1767 = vpop.permute.xlu0 %1766
      %vm1768 = vcmask 285696
      %v1769 = vsel %vm1768, %v1751, %v1753
      %v1770 = vsel %vm1768, %v1753, %v1755
      %v1771 = vsel %vm1768, %v1755, %v1757
      %v1772 = vsel %vm1768, %v1757, %v1759
      %v1773 = vsel %vm1768, %v1759, %v1761
      %v1774 = vsel %vm1768, %v1761, %v1763
      %v1775 = vsel %vm1768, %v1763, %v1765
      %v1776 = vsel %vm1768, %v1765, %v1767
      %1785 = vst [vmem:[#allocation2 + $0x640] sm:$0xff] %v1769
      %1786 = vst [vmem:[#allocation2 + $0x648] sm:$0xff] %v1770
      %1787 = vst [vmem:[#allocation2 + $0x650] sm:$0xff] %v1771
      %1788 = vst [vmem:[#allocation2 + $0x658] sm:$0xff] %v1772
      %1789 = vst [vmem:[#allocation2 + $0x660] sm:$0xff] %v1773
      %1790 = vst [vmem:[#allocation2 + $0x668] sm:$0xff] %v1774
      %1791 = vst [vmem:[#allocation2 + $0x670] sm:$0xff] %v1775
      %1792 = vst [vmem:[#allocation2 + $0x678] sm:$0xff] %v1776
      %v1793 = vld [vmem:[%s246 + $0x8] sm:$0xff]
      %v1794 = vld [vmem:[%s246 + $0x10] sm:$0xff]
      %v1795 = vld [vmem:[%s246 + $0x18] sm:$0xff]
      %v1796 = vld [vmem:[%s246 + $0x20] sm:$0xff]
      %v1797 = vld [vmem:[%s246 + $0x28] sm:$0xff]
      %v1798 = vld [vmem:[%s246 + $0x30] sm:$0xff]
      %v1799 = vld [vmem:[%s246 + $0x38] sm:$0xff]
      %v1800 = vld [vmem:[%s246 + $0x40] sm:$0xff]
      %v1801 = vld [vmem:[%s246 + $0x48] sm:$0xff]
      %1811 = vrot.lane.b32.xlu0 %v1793, 34
      %v1812 = vpop.permute.xlu0 %1811
      %1813 = vrot.lane.b32.xlu0 %v1794, 34
      %v1814 = vpop.permute.xlu0 %1813
      %1815 = vrot.lane.b32.xlu0 %v1795, 34
      %v1816 = vpop.permute.xlu0 %1815
      %1817 = vrot.lane.b32.xlu0 %v1796, 34
      %v1818 = vpop.permute.xlu0 %1817
      %1819 = vrot.lane.b32.xlu0 %v1797, 34
      %v1820 = vpop.permute.xlu0 %1819
      %1821 = vrot.lane.b32.xlu0 %v1798, 34
      %v1822 = vpop.permute.xlu0 %1821
      %1823 = vrot.lane.b32.xlu0 %v1799, 34
      %v1824 = vpop.permute.xlu0 %1823
      %1825 = vrot.lane.b32.xlu0 %v1800, 34
      %v1826 = vpop.permute.xlu0 %1825
      %1827 = vrot.lane.b32.xlu0 %v1801, 34
      %v1828 = vpop.permute.xlu0 %1827
      %vm1829 = vcmask 277504
      %v1830 = vsel %vm1829, %v1812, %v1814
      %v1831 = vsel %vm1829, %v1814, %v1816
      %v1832 = vsel %vm1829, %v1816, %v1818
      %v1833 = vsel %vm1829, %v1818, %v1820
      %v1834 = vsel %vm1829, %v1820, %v1822
      %v1835 = vsel %vm1829, %v1822, %v1824
      %v1836 = vsel %vm1829, %v1824, %v1826
      %v1837 = vsel %vm1829, %v1826, %v1828
      %1846 = vst [vmem:[#allocation2 + $0x680] sm:$0xff] %v1830
      %1847 = vst [vmem:[#allocation2 + $0x688] sm:$0xff] %v1831
      %1848 = vst [vmem:[#allocation2 + $0x690] sm:$0xff] %v1832
      %1849 = vst [vmem:[#allocation2 + $0x698] sm:$0xff] %v1833
      %1850 = vst [vmem:[#allocation2 + $0x6a0] sm:$0xff] %v1834
      %1851 = vst [vmem:[#allocation2 + $0x6a8] sm:$0xff] %v1835
      %1852 = vst [vmem:[#allocation2 + $0x6b0] sm:$0xff] %v1836
      %1853 = vst [vmem:[#allocation2 + $0x6b8] sm:$0xff] %v1837
      %v1854 = vld [vmem:[%s1] sm:$0xff]
      %v1855 = vld [vmem:[%s1 + $0x8] sm:$0xff]
      %v1856 = vld [vmem:[#allocation2] sm:$0xff]
      %v1857 = vld [vmem:[#allocation2 + $0x8] sm:$0xff]
      %v1858 = vld [vmem:[#allocation2 + $0x10] sm:$0xff]
      %v1859 = vld [vmem:[#allocation2 + $0x18] sm:$0xff]
      %v1860 = vld [vmem:[#allocation2 + $0x20] sm:$0xff]
      %v1861 = vld [vmem:[#allocation2 + $0x28] sm:$0xff]
      %v1862 = vld [vmem:[#allocation2 + $0x30] sm:$0xff]
      %v1863 = vld [vmem:[#allocation2 + $0x38] sm:$0xff]
      %v1864 = vld [vmem:[#allocation2 + $0x40] sm:$0xff]
      %v1865 = vld [vmem:[#allocation2 + $0x48] sm:$0xff]
      %v1866 = vld [vmem:[#allocation2 + $0x50] sm:$0xff]
      %v1867 = vld [vmem:[#allocation2 + $0x58] sm:$0xff]
      %v1868 = vld [vmem:[#allocation2 + $0x60] sm:$0xff]
      %v1869 = vld [vmem:[#allocation2 + $0x68] sm:$0xff]
      %v1870 = vld [vmem:[#allocation2 + $0x70] sm:$0xff]
      %v1871 = vld [vmem:[#allocation2 + $0x78] sm:$0xff]
      %v1872 = vld [vmem:[#allocation2 + $0x80] sm:$0xff]
      %v1873 = vld [vmem:[#allocation2 + $0x88] sm:$0xff]
      %v1874 = vld [vmem:[#allocation2 + $0x90] sm:$0xff]
      %v1875 = vld [vmem:[#allocation2 + $0x98] sm:$0xff]
      %v1876 = vld [vmem:[#allocation2 + $0xa0] sm:$0xff]
      %v1877 = vld [vmem:[#allocation2 + $0xa8] sm:$0xff]
      %v1878 = vld [vmem:[#allocation2 + $0xb0] sm:$0xff]
      %v1879 = vld [vmem:[#allocation2 + $0xb8] sm:$0xff]
      %v1880 = vld [vmem:[#allocation2 + $0xc0] sm:$0xff]
      %v1881 = vld [vmem:[#allocation2 + $0xc8] sm:$0xff]
      %v1882 = vld [vmem:[#allocation2 + $0xd0] sm:$0xff]
      %v1883 = vld [vmem:[#allocation2 + $0xd8] sm:$0xff]
      %v1884 = vld [vmem:[#allocation2 + $0xe0] sm:$0xff]
      %v1885 = vld [vmem:[#allocation2 + $0xe8] sm:$0xff]
      %v1886 = vld [vmem:[#allocation2 + $0xf0] sm:$0xff]
      %v1887 = vld [vmem:[#allocation2 + $0xf8] sm:$0xff]
      %v1888 = vld [vmem:[#allocation2 + $0x100] sm:$0xff]
      %v1889 = vld [vmem:[#allocation2 + $0x108] sm:$0xff]
      %v1890 = vld [vmem:[#allocation2 + $0x110] sm:$0xff]
      %v1891 = vld [vmem:[#allocation2 + $0x118] sm:$0xff]
      %v1892 = vld [vmem:[#allocation2 + $0x120] sm:$0xff]
      %v1893 = vld [vmem:[#allocation2 + $0x128] sm:$0xff]
      %v1894 = vld [vmem:[#allocation2 + $0x130] sm:$0xff]
      %v1895 = vld [vmem:[#allocation2 + $0x138] sm:$0xff]
      %v1896 = vld [vmem:[#allocation2 + $0x140] sm:$0xff]
      %v1897 = vld [vmem:[#allocation2 + $0x148] sm:$0xff]
      %v1898 = vld [vmem:[#allocation2 + $0x150] sm:$0xff]
      %v1899 = vld [vmem:[#allocation2 + $0x158] sm:$0xff]
      %v1900 = vld [vmem:[#allocation2 + $0x160] sm:$0xff]
      %v1901 = vld [vmem:[#allocation2 + $0x168] sm:$0xff]
      %v1902 = vld [vmem:[#allocation2 + $0x170] sm:$0xff]
      %v1903 = vld [vmem:[#allocation2 + $0x178] sm:$0xff]
      %v1904 = vld [vmem:[#allocation2 + $0x180] sm:$0xff]
      %v1905 = vld [vmem:[#allocation2 + $0x188] sm:$0xff]
      %v1906 = vld [vmem:[#allocation2 + $0x190] sm:$0xff]
      %v1907 = vld [vmem:[#allocation2 + $0x198] sm:$0xff]
      %v1908 = vld [vmem:[#allocation2 + $0x1a0] sm:$0xff]
      %v1909 = vld [vmem:[#allocation2 + $0x1a8] sm:$0xff]
      %v1910 = vld [vmem:[#allocation2 + $0x1b0] sm:$0xff]
      %v1911 = vld [vmem:[#allocation2 + $0x1b8] sm:$0xff]
      %v1912 = vld [vmem:[#allocation2 + $0x1c0] sm:$0xff]
      %v1913 = vld [vmem:[#allocation2 + $0x1c8] sm:$0xff]
      %v1914 = vld [vmem:[#allocation2 + $0x1d0] sm:$0xff]
      %v1915 = vld [vmem:[#allocation2 + $0x1d8] sm:$0xff]
      %v1916 = vld [vmem:[#allocation2 + $0x1e0] sm:$0xff]
      %v1917 = vld [vmem:[#allocation2 + $0x1e8] sm:$0xff]
      %v1918 = vld [vmem:[#allocation2 + $0x1f0] sm:$0xff]
      %v1919 = vld [vmem:[#allocation2 + $0x1f8] sm:$0xff]
      %v1920 = vld [vmem:[#allocation2 + $0x200] sm:$0xff]
      %v1921 = vld [vmem:[#allocation2 + $0x208] sm:$0xff]
      %v1922 = vld [vmem:[#allocation2 + $0x210] sm:$0xff]
      %v1923 = vld [vmem:[#allocation2 + $0x218] sm:$0xff]
      %v1924 = vld [vmem:[#allocation2 + $0x220] sm:$0xff]
      %v1925 = vld [vmem:[#allocation2 + $0x228] sm:$0xff]
      %v1926 = vld [vmem:[#allocation2 + $0x230] sm:$0xff]
      %v1927 = vld [vmem:[#allocation2 + $0x238] sm:$0xff]
      %v1928 = vld [vmem:[#allocation2 + $0x240] sm:$0xff]
      %v1929 = vld [vmem:[#allocation2 + $0x248] sm:$0xff]
      %v1930 = vld [vmem:[#allocation2 + $0x250] sm:$0xff]
      %v1931 = vld [vmem:[#allocation2 + $0x258] sm:$0xff]
      %v1932 = vld [vmem:[#allocation2 + $0x260] sm:$0xff]
      %v1933 = vld [vmem:[#allocation2 + $0x268] sm:$0xff]
      %v1934 = vld [vmem:[#allocation2 + $0x270] sm:$0xff]
      %v1935 = vld [vmem:[#allocation2 + $0x278] sm:$0xff]
      %v1936 = vld [vmem:[#allocation2 + $0x280] sm:$0xff]
      %v1937 = vld [vmem:[#allocation2 + $0x288] sm:$0xff]
      %v1938 = vld [vmem:[#allocation2 + $0x290] sm:$0xff]
      %v1939 = vld [vmem:[#allocation2 + $0x298] sm:$0xff]
      %v1940 = vld [vmem:[#allocation2 + $0x2a0] sm:$0xff]
      %v1941 = vld [vmem:[#allocation2 + $0x2a8] sm:$0xff]
      %v1942 = vld [vmem:[#allocation2 + $0x2b0] sm:$0xff]
      %v1943 = vld [vmem:[#allocation2 + $0x2b8] sm:$0xff]
      %v1944 = vld [vmem:[#allocation2 + $0x2c0] sm:$0xff]
      %v1945 = vld [vmem:[#allocation2 + $0x2c8] sm:$0xff]
      %v1946 = vld [vmem:[#allocation2 + $0x2d0] sm:$0xff]
      %v1947 = vld [vmem:[#allocation2 + $0x2d8] sm:$0xff]
      %v1948 = vld [vmem:[#allocation2 + $0x2e0] sm:$0xff]
      %v1949 = vld [vmem:[#allocation2 + $0x2e8] sm:$0xff]
      %v1950 = vld [vmem:[#allocation2 + $0x2f0] sm:$0xff]
      %v1951 = vld [vmem:[#allocation2 + $0x2f8] sm:$0xff]
      %v1952 = vld [vmem:[#allocation2 + $0x300] sm:$0xff]
      %v1953 = vld [vmem:[#allocation2 + $0x308] sm:$0xff]
      %v1954 = vld [vmem:[#allocation2 + $0x310] sm:$0xff]
      %v1955 = vld [vmem:[#allocation2 + $0x318] sm:$0xff]
      %v1956 = vld [vmem:[#allocation2 + $0x320] sm:$0xff]
      %v1957 = vld [vmem:[#allocation2 + $0x328] sm:$0xff]
      %v1958 = vld [vmem:[#allocation2 + $0x330] sm:$0xff]
      %v1959 = vld [vmem:[#allocation2 + $0x338] sm:$0xff]
      %v1960 = vld [vmem:[#allocation2 + $0x340] sm:$0xff]
      %v1961 = vld [vmem:[#allocation2 + $0x348] sm:$0xff]
      %v1962 = vld [vmem:[#allocation2 + $0x350] sm:$0xff]
      %v1963 = vld [vmem:[#allocation2 + $0x358] sm:$0xff]
      %v1964 = vld [vmem:[#allocation2 + $0x360] sm:$0xff]
      %v1965 = vld [vmem:[#allocation2 + $0x368] sm:$0xff]
      %v1966 = vld [vmem:[#allocation2 + $0x370] sm:$0xff]
      %v1967 = vld [vmem:[#allocation2 + $0x378] sm:$0xff]
      %v1968 = vld [vmem:[#allocation2 + $0x380] sm:$0xff]
      %v1969 = vld [vmem:[#allocation2 + $0x388] sm:$0xff]
      %v1970 = vld [vmem:[#allocation2 + $0x390] sm:$0xff]
      %v1971 = vld [vmem:[#allocation2 + $0x398] sm:$0xff]
      %v1972 = vld [vmem:[#allocation2 + $0x3a0] sm:$0xff]
      %v1973 = vld [vmem:[#allocation2 + $0x3a8] sm:$0xff]
      %v1974 = vld [vmem:[#allocation2 + $0x3b0] sm:$0xff]
      %v1975 = vld [vmem:[#allocation2 + $0x3b8] sm:$0xff]
      %v1976 = vld [vmem:[#allocation2 + $0x3c0] sm:$0xff]
      %v1977 = vld [vmem:[#allocation2 + $0x3c8] sm:$0xff]
      %v1978 = vld [vmem:[#allocation2 + $0x3d0] sm:$0xff]
      %v1979 = vld [vmem:[#allocation2 + $0x3d8] sm:$0xff]
      %v1980 = vld [vmem:[#allocation2 + $0x3e0] sm:$0xff]
      %v1981 = vld [vmem:[#allocation2 + $0x3e8] sm:$0xff]
      %v1982 = vld [vmem:[#allocation2 + $0x3f0] sm:$0xff]
      %v1983 = vld [vmem:[#allocation2 + $0x3f8] sm:$0xff]
      %v1984 = vld [vmem:[#allocation2 + $0x400] sm:$0xff]
      %v1985 = vld [vmem:[#allocation2 + $0x408] sm:$0xff]
      %v1986 = vld [vmem:[#allocation2 + $0x410] sm:$0xff]
      %v1987 = vld [vmem:[#allocation2 + $0x418] sm:$0xff]
      %v1988 = vld [vmem:[#allocation2 + $0x420] sm:$0xff]
      %v1989 = vld [vmem:[#allocation2 + $0x428] sm:$0xff]
      %v1990 = vld [vmem:[#allocation2 + $0x430] sm:$0xff]
      %v1991 = vld [vmem:[#allocation2 + $0x438] sm:$0xff]
      %v1992 = vld [vmem:[#allocation2 + $0x440] sm:$0xff]
      %v1993 = vld [vmem:[#allocation2 + $0x448] sm:$0xff]
      %v1994 = vld [vmem:[#allocation2 + $0x450] sm:$0xff]
      %v1995 = vld [vmem:[#allocation2 + $0x458] sm:$0xff]
      %v1996 = vld [vmem:[#allocation2 + $0x460] sm:$0xff]
      %v1997 = vld [vmem:[#allocation2 + $0x468] sm:$0xff]
      %v1998 = vld [vmem:[#allocation2 + $0x470] sm:$0xff]
      %v1999 = vld [vmem:[#allocation2 + $0x478] sm:$0xff]
      %v2000 = vld [vmem:[#allocation2 + $0x480] sm:$0xff]
      %v2001 = vld [vmem:[#allocation2 + $0x488] sm:$0xff]
      %v2002 = vld [vmem:[#allocation2 + $0x490] sm:$0xff]
      %v2003 = vld [vmem:[#allocation2 + $0x498] sm:$0xff]
      %v2004 = vld [vmem:[#allocation2 + $0x4a0] sm:$0xff]
      %v2005 = vld [vmem:[#allocation2 + $0x4a8] sm:$0xff]
      %v2006 = vld [vmem:[#allocation2 + $0x4b0] sm:$0xff]
      %v2007 = vld [vmem:[#allocation2 + $0x4b8] sm:$0xff]
      %v2008 = vld [vmem:[#allocation2 + $0x4c0] sm:$0xff]
      %v2009 = vld [vmem:[#allocation2 + $0x4c8] sm:$0xff]
      %v2010 = vld [vmem:[#allocation2 + $0x4d0] sm:$0xff]
      %v2011 = vld [vmem:[#allocation2 + $0x4d8] sm:$0xff]
      %v2012 = vld [vmem:[#allocation2 + $0x4e0] sm:$0xff]
      %v2013 = vld [vmem:[#allocation2 + $0x4e8] sm:$0xff]
      %v2014 = vld [vmem:[#allocation2 + $0x4f0] sm:$0xff]
      %v2015 = vld [vmem:[#allocation2 + $0x4f8] sm:$0xff]
      %v2016 = vld [vmem:[#allocation2 + $0x500] sm:$0xff]
      %v2017 = vld [vmem:[#allocation2 + $0x508] sm:$0xff]
      %v2018 = vld [vmem:[#allocation2 + $0x510] sm:$0xff]
      %v2019 = vld [vmem:[#allocation2 + $0x518] sm:$0xff]
      %v2020 = vld [vmem:[#allocation2 + $0x520] sm:$0xff]
      %v2021 = vld [vmem:[#allocation2 + $0x528] sm:$0xff]
      %v2022 = vld [vmem:[#allocation2 + $0x530] sm:$0xff]
      %v2023 = vld [vmem:[#allocation2 + $0x538] sm:$0xff]
      %v2024 = vld [vmem:[#allocation2 + $0x540] sm:$0xff]
      %v2025 = vld [vmem:[#allocation2 + $0x548] sm:$0xff]
      %v2026 = vld [vmem:[#allocation2 + $0x550] sm:$0xff]
      %v2027 = vld [vmem:[#allocation2 + $0x558] sm:$0xff]
      %v2028 = vld [vmem:[#allocation2 + $0x560] sm:$0xff]
      %v2029 = vld [vmem:[#allocation2 + $0x568] sm:$0xff]
      %v2030 = vld [vmem:[#allocation2 + $0x570] sm:$0xff]
      %v2031 = vld [vmem:[#allocation2 + $0x578] sm:$0xff]
      %v2032 = vld [vmem:[#allocation2 + $0x580] sm:$0xff]
      %v2033 = vld [vmem:[#allocation2 + $0x588] sm:$0xff]
      %v2034 = vld [vmem:[#allocation2 + $0x590] sm:$0xff]
      %v2035 = vld [vmem:[#allocation2 + $0x598] sm:$0xff]
      %v2036 = vld [vmem:[#allocation2 + $0x5a0] sm:$0xff]
      %v2037 = vld [vmem:[#allocation2 + $0x5a8] sm:$0xff]
      %v2038 = vld [vmem:[#allocation2 + $0x5b0] sm:$0xff]
      %v2039 = vld [vmem:[#allocation2 + $0x5b8] sm:$0xff]
      %v2040 = vld [vmem:[#allocation2 + $0x5c0] sm:$0xff]
      %v2041 = vld [vmem:[#allocation2 + $0x5c8] sm:$0xff]
      %v2042 = vld [vmem:[#allocation2 + $0x5d0] sm:$0xff]
      %v2043 = vld [vmem:[#allocation2 + $0x5d8] sm:$0xff]
      %v2044 = vld [vmem:[#allocation2 + $0x5e0] sm:$0xff]
      %v2045 = vld [vmem:[#allocation2 + $0x5e8] sm:$0xff]
      %v2046 = vld [vmem:[#allocation2 + $0x5f0] sm:$0xff]
      %v2047 = vld [vmem:[#allocation2 + $0x5f8] sm:$0xff]
      %v2048 = vld [vmem:[#allocation2 + $0x600] sm:$0xff]
      %v2049 = vld [vmem:[#allocation2 + $0x608] sm:$0xff]
      %v2050 = vld [vmem:[#allocation2 + $0x610] sm:$0xff]
      %v2051 = vld [vmem:[#allocation2 + $0x618] sm:$0xff]
      %v2052 = vld [vmem:[#allocation2 + $0x620] sm:$0xff]
      %v2053 = vld [vmem:[#allocation2 + $0x628] sm:$0xff]
      %v2054 = vld [vmem:[#allocation2 + $0x630] sm:$0xff]
      %v2055 = vld [vmem:[#allocation2 + $0x638] sm:$0xff]
      %v2056 = vld [vmem:[#allocation2 + $0x640] sm:$0xff]
      %v2057 = vld [vmem:[#allocation2 + $0x648] sm:$0xff]
      %v2058 = vld [vmem:[#allocation2 + $0x650] sm:$0xff]
      %v2059 = vld [vmem:[#allocation2 + $0x658] sm:$0xff]
      %v2060 = vld [vmem:[#allocation2 + $0x660] sm:$0xff]
      %v2061 = vld [vmem:[#allocation2 + $0x668] sm:$0xff]
      %v2062 = vld [vmem:[#allocation2 + $0x670] sm:$0xff]
      %v2063 = vld [vmem:[#allocation2 + $0x678] sm:$0xff]
      %v2064 = vld [vmem:[#allocation2 + $0x680] sm:$0xff]
      %v2065 = vld [vmem:[#allocation2 + $0x688] sm:$0xff]
      %v2066 = vld [vmem:[#allocation2 + $0x690] sm:$0xff]
      %v2067 = vld [vmem:[#allocation2 + $0x698] sm:$0xff]
      %v2068 = vld [vmem:[#allocation2 + $0x6a0] sm:$0xff]
      %v2069 = vld [vmem:[#allocation2 + $0x6a8] sm:$0xff]
      %v2070 = vld [vmem:[#allocation2 + $0x6b0] sm:$0xff]
      %v2071 = vld [vmem:[#allocation2 + $0x6b8] sm:$0xff]
      %v2072 = vld [vmem:[%s2] sm:$0xff]
      %2074 = vset.pattern.permute.xlu0 0
      %2075 = vperm.xlu0 %2074, %v2072
      %v2076 = vpop.permute.xlu0 %2075
      %vm2078 = vcmask 719872
      %v2080 = vsel %vm2078, %v1855, 0
      %2082 = vmatprep.subr.mxu0 %v1857
      %2083 = vmatpush1.msra.mxu0 %v1856
      %2084 = vmatprep.subr.mxu0 %v1865
      %2085 = vmatpush1.msra.mxu0 %v1864
      %2086 = vmatprep.subr.mxu0 %v1873
      %2087 = vmatpush1.msra.mxu0 %v1872
      %2088 = vmatprep.subr.mxu0 %v1881
      %2089 = vmatpush1.msra.mxu0 %v1880
      %2090 = vmatprep.subr.mxu0 %v1889
      %2091 = vmatpush1.msra.mxu0 %v1888
      %2092 = vmatprep.subr.mxu0 %v1897
      %2093 = vmatpush1.msra.mxu0 %v1896
      %2094 = vmatprep.subr.mxu0 %v1905
      %2095 = vmatpush1.msra.mxu0 %v1904
      %2096 = vmatprep.subr.mxu0 %v1913
      %2097 = vmatpush1.msra.mxu0 %v1912
      %2098 = vmatprep.subr.mxu0 %v1921
      %2099 = vmatpush1.msra.mxu0 %v1920
      %2100 = vmatprep.subr.mxu0 %v1929
      %2101 = vmatpush1.msra.mxu0 %v1928
      %2102 = vmatprep.subr.mxu0 %v1937
      %2103 = vmatpush1.msra.mxu0 %v1936
      %2104 = vmatprep.subr.mxu0 %v1945
      %2105 = vmatpush1.msra.mxu0 %v1944
      %2106 = vmatprep.subr.mxu0 %v1953
      %2107 = vmatpush1.msra.mxu0 %v1952
      %2108 = vmatprep.subr.mxu0 %v1961
      %2109 = vmatpush1.msra.mxu0 %v1960
      %2110 = vmatprep.subr.mxu0 %v1969
      %2111 = vmatpush1.msra.mxu0 %v1968
      %2112 = vmatprep.subr.mxu0 %v1977
      %2113 = vmatpush1.msra.mxu0 %v1976
      %2114 = vmatprep.subr.mxu0 %v1985
      %2115 = vmatpush1.msra.mxu0 %v1984
      %2116 = vmatprep.subr.mxu0 %v1993
      %2117 = vmatpush1.msra.mxu0 %v1992
      %2118 = vmatprep.subr.mxu0 %v2001
      %2119 = vmatpush1.msra.mxu0 %v2000
      %2120 = vmatprep.subr.mxu0 %v2009
      %2121 = vmatpush1.msra.mxu0 %v2008
      %2122 = vmatprep.subr.mxu0 %v2017
      %2123 = vmatpush1.msra.mxu0 %v2016
      %2124 = vmatprep.subr.mxu0 %v2025
      %2125 = vmatpush1.msra.mxu0 %v2024
      %2126 = vmatprep.subr.mxu0 %v2033
      %2127 = vmatpush1.msra.mxu0 %v2032
      %2128 = vmatprep.subr.mxu0 %v2041
      %2129 = vmatpush1.msra.mxu0 %v2040
      %2130 = vmatprep.subr.mxu0 %v2049
      %2131 = vmatpush1.msra.mxu0 %v2048
      %2132 = vmatprep.subr.mxu0 %v2057
      %2133 = vmatpush1.msra.mxu0 %v2056
      %2134 = vmatprep.subr.mxu0 %v2065
      %2135 = vmatpush1.msra.mxu0 %v2064
      %2136 = vmatprep.subr.mxu0 0.0
      %2137 = vmatpush1.msra.mxu0 0.0
      %2138 = vmatprep.subr.mxu0 0.0
      %2139 = vmatpush1.msra.mxu0 0.0
      %2140 = vmatprep.subr.mxu0 0.0
      %2141 = vmatpush1.msra.mxu0 0.0
      %2142 = vmatprep.subr.mxu0 0.0
      %2143 = vmatpush1.msra.mxu0 0.0
      %2144 = vmatprep.subr.mxu0 0.0
      %2145 = vmatpush1.msra.mxu0 0.0
      %2146 = vmatprep.mubr.f32.mxu0 %v2080
      %2147 = vmatmul.mubr.f32.gmra.mrb[0].mxu0 %v1854
      %v2148 = vpop.f32.mrb[0].mxu0
      %v2149 = vadd.f32 %v2076, %v2148
      %v2150 = vpop.f32.mrb[0].mxu0
      %v2151 = vadd.f32 %v2076, %v2150
      %2152 = vdwg.mxu0
      %2153 = vmatprep.subr.mxu0 %v1859
      %2154 = vmatpush1.msra.mxu0 %v1858
      %2155 = vmatprep.subr.mxu0 %v1867
      %2156 = vmatpush1.msra.mxu0 %v1866
      %2157 = vmatprep.subr.mxu0 %v1875
      %2158 = vmatpush1.msra.mxu0 %v1874
      %2159 = vmatprep.subr.mxu0 %v1883
      %2160 = vmatpush1.msra.mxu0 %v1882
      %2161 = vmatprep.subr.mxu0 %v1891
      %2162 = vmatpush1.msra.mxu0 %v1890
      %2163 = vmatprep.subr.mxu0 %v1899
      %2164 = vmatpush1.msra.mxu0 %v1898
      %2165 = vmatprep.subr.mxu0 %v1907
      %2166 = vmatpush1.msra.mxu0 %v1906
      %2167 = vmatprep.subr.mxu0 %v1915
      %2168 = vmatpush1.msra.mxu0 %v1914
      %2169 = vmatprep.subr.mxu0 %v1923
      %2170 = vmatpush1.msra.mxu0 %v1922
      %2171 = vmatprep.subr.mxu0 %v1931
      %2172 = vmatpush1.msra.mxu0 %v1930
      %2173 = vmatprep.subr.mxu0 %v1939
      %2174 = vmatpush1.msra.mxu0 %v1938
      %2175 = vmatprep.subr.mxu0 %v1947
      %2176 = vmatpush1.msra.mxu0 %v1946
      %2177 = vmatprep.subr.mxu0 %v1955
      %2178 = vmatpush1.msra.mxu0 %v1954
      %2179 = vmatprep.subr.mxu0 %v1963
      %2180 = vmatpush1.msra.mxu0 %v1962
      %2181 = vmatprep.subr.mxu0 %v1971
      %2182 = vmatpush1.msra.mxu0 %v1970
      %2183 = vmatprep.subr.mxu0 %v1979
      %2184 = vmatpush1.msra.mxu0 %v1978
      %2185 = vmatprep.subr.mxu0 %v1987
      %2186 = vmatpush1.msra.mxu0 %v1986
      %2187 = vmatprep.subr.mxu0 %v1995
      %2188 = vmatpush1.msra.mxu0 %v1994
      %2189 = vmatprep.subr.mxu0 %v2003
      %2190 = vmatpush1.msra.mxu0 %v2002
      %2191 = vmatprep.subr.mxu0 %v2011
      %2192 = vmatpush1.msra.mxu0 %v2010
      %2193 = vmatprep.subr.mxu0 %v2019
      %2194 = vmatpush1.msra.mxu0 %v2018
      %2195 = vmatprep.subr.mxu0 %v2027
      %2196 = vmatpush1.msra.mxu0 %v2026
      %2197 = vmatprep.subr.mxu0 %v2035
      %2198 = vmatpush1.msra.mxu0 %v2034
      %2199 = vmatprep.subr.mxu0 %v2043
      %2200 = vmatpush1.msra.mxu0 %v2042
      %2201 = vmatprep.subr.mxu0 %v2051
      %2202 = vmatpush1.msra.mxu0 %v2050
      %2203 = vmatprep.subr.mxu0 %v2059
      %2204 = vmatpush1.msra.mxu0 %v2058
      %2205 = vmatprep.subr.mxu0 %v2067
      %2206 = vmatpush1.msra.mxu0 %v2066
      %2207 = vmatprep.subr.mxu0 0.0
      %2208 = vmatpush1.msra.mxu0 0.0
      %2209 = vmatprep.subr.mxu0 0.0
      %2210 = vmatpush1.msra.mxu0 0.0
      %2211 = vmatprep.subr.mxu0 0.0
      %2212 = vmatpush1.msra.mxu0 0.0
      %2213 = vmatprep.subr.mxu0 0.0
      %2214 = vmatpush1.msra.mxu0 0.0
      %2215 = vmatprep.subr.mxu0 0.0
      %2216 = vmatpush1.msra.mxu0 0.0
      %2217 = vmatprep.mubr.f32.mxu0 %v2080
      %2218 = vmatmul.mubr.f32.gmra.mrb[0].mxu0 %v1854
      %v2219 = vpop.f32.mrb[0].mxu0
      %v2220 = vadd.f32 %v2076, %v2219
      %v2221 = vpop.f32.mrb[0].mxu0
      %v2222 = vadd.f32 %v2076, %v2221
      %2223 = vdwg.mxu0
      %2224 = vmatprep.subr.mxu0 %v1861
      %2225 = vmatpush1.msra.mxu0 %v1860
      %2226 = vmatprep.subr.mxu0 %v1869
      %2227 = vmatpush1.msra.mxu0 %v1868
      %2228 = vmatprep.subr.mxu0 %v1877
      %2229 = vmatpush1.msra.mxu0 %v1876
      %2230 = vmatprep.subr.mxu0 %v1885
      %2231 = vmatpush1.msra.mxu0 %v1884
      %2232 = vmatprep.subr.mxu0 %v1893
      %2233 = vmatpush1.msra.mxu0 %v1892
      %2234 = vmatprep.subr.mxu0 %v1901
      %2235 = vmatpush1.msra.mxu0 %v1900
      %2236 = vmatprep.subr.mxu0 %v1909
      %2237 = vmatpush1.msra.mxu0 %v1908
      %2238 = vmatprep.subr.mxu0 %v1917
      %2239 = vmatpush1.msra.mxu0 %v1916
      %2240 = vmatprep.subr.mxu0 %v1925
      %2241 = vmatpush1.msra.mxu0 %v1924
      %2242 = vmatprep.subr.mxu0 %v1933
      %2243 = vmatpush1.msra.mxu0 %v1932
      %2244 = vmatprep.subr.mxu0 %v1941
      %2245 = vmatpush1.msra.mxu0 %v1940
      %2246 = vmatprep.subr.mxu0 %v1949
      %2247 = vmatpush1.msra.mxu0 %v1948
      %2248 = vmatprep.subr.mxu0 %v1957
      %2249 = vmatpush1.msra.mxu0 %v1956
      %2250 = vmatprep.subr.mxu0 %v1965
      %2251 = vmatpush1.msra.mxu0 %v1964
      %2252 = vmatprep.subr.mxu0 %v1973
      %2253 = vmatpush1.msra.mxu0 %v1972
      %2254 = vmatprep.subr.mxu0 %v1981
      %2255 = vmatpush1.msra.mxu0 %v1980
      %2256 = vmatprep.subr.mxu0 %v1989
      %2257 = vmatpush1.msra.mxu0 %v1988
      %2258 = vmatprep.subr.mxu0 %v1997
      %2259 = vmatpush1.msra.mxu0 %v1996
      %2260 = vmatprep.subr.mxu0 %v2005
      %2261 = vmatpush1.msra.mxu0 %v2004
      %2262 = vmatprep.subr.mxu0 %v2013
      %2263 = vmatpush1.msra.mxu0 %v2012
      %2264 = vmatprep.subr.mxu0 %v2021
      %2265 = vmatpush1.msra.mxu0 %v2020
      %2266 = vmatprep.subr.mxu0 %v2029
      %2267 = vmatpush1.msra.mxu0 %v2028
      %2268 = vmatprep.subr.mxu0 %v2037
      %2269 = vmatpush1.msra.mxu0 %v2036
      %2270 = vmatprep.subr.mxu0 %v2045
      %2271 = vmatpush1.msra.mxu0 %v2044
      %2272 = vmatprep.subr.mxu0 %v2053
      %2273 = vmatpush1.msra.mxu0 %v2052
      %2274 = vmatprep.subr.mxu0 %v2061
      %2275 = vmatpush1.msra.mxu0 %v2060
      %2276 = vmatprep.subr.mxu0 %v2069
      %2277 = vmatpush1.msra.mxu0 %v2068
      %2278 = vmatprep.subr.mxu0 0.0
      %2279 = vmatpush1.msra.mxu0 0.0
      %2280 = vmatprep.subr.mxu0 0.0
      %2281 = vmatpush1.msra.mxu0 0.0
      %2282 = vmatprep.subr.mxu0 0.0
      %2283 = vmatpush1.msra.mxu0 0.0
      %2284 = vmatprep.subr.mxu0 0.0
      %2285 = vmatpush1.msra.mxu0 0.0
      %2286 = vmatprep.subr.mxu0 0.0
      %2287 = vmatpush1.msra.mxu0 0.0
      %2288 = vmatprep.mubr.f32.mxu0 %v2080
      %2289 = vmatmul.mubr.f32.gmra.mrb[0].mxu0 %v1854
      %v2290 = vpop.f32.mrb[0].mxu0
      %v2291 = vadd.f32 %v2076, %v2290
      %v2292 = vpop.f32.mrb[0].mxu0
      %v2293 = vadd.f32 %v2076, %v2292
      %2294 = vdwg.mxu0
      %2295 = vmatprep.subr.mxu0 %v1863
      %2296 = vmatpush1.msra.mxu0 %v1862
      %2297 = vmatprep.subr.mxu0 %v1871
      %2298 = vmatpush1.msra.mxu0 %v1870
      %2299 = vmatprep.subr.mxu0 %v1879
      %2300 = vmatpush1.msra.mxu0 %v1878
      %2301 = vmatprep.subr.mxu0 %v1887
      %2302 = vmatpush1.msra.mxu0 %v1886
      %2303 = vmatprep.subr.mxu0 %v1895
      %2304 = vmatpush1.msra.mxu0 %v1894
      %2305 = vmatprep.subr.mxu0 %v1903
      %2306 = vmatpush1.msra.mxu0 %v1902
      %2307 = vmatprep.subr.mxu0 %v1911
      %2308 = vmatpush1.msra.mxu0 %v1910
      %2309 = vmatprep.subr.mxu0 %v1919
      %2310 = vmatpush1.msra.mxu0 %v1918
      %2311 = vmatprep.subr.mxu0 %v1927
      %2312 = vmatpush1.msra.mxu0 %v1926
      %2313 = vmatprep.subr.mxu0 %v1935
      %2314 = vmatpush1.msra.mxu0 %v1934
      %2315 = vmatprep.subr.mxu0 %v1943
      %2316 = vmatpush1.msra.mxu0 %v1942
      %2317 = vmatprep.subr.mxu0 %v1951
      %2318 = vmatpush1.msra.mxu0 %v1950
      %2319 = vmatprep.subr.mxu0 %v1959
      %2320 = vmatpush1.msra.mxu0 %v1958
      %2321 = vmatprep.subr.mxu0 %v1967
      %2322 = vmatpush1.msra.mxu0 %v1966
      %2323 = vmatprep.subr.mxu0 %v1975
      %2324 = vmatpush1.msra.mxu0 %v1974
      %2325 = vmatprep.subr.mxu0 %v1983
      %2326 = vmatpush1.msra.mxu0 %v1982
      %2327 = vmatprep.subr.mxu0 %v1991
      %2328 = vmatpush1.msra.mxu0 %v1990
      %2329 = vmatprep.subr.mxu0 %v1999
      %2330 = vmatpush1.msra.mxu0 %v1998
      %2331 = vmatprep.subr.mxu0 %v2007
      %2332 = vmatpush1.msra.mxu0 %v2006
      %2333 = vmatprep.subr.mxu0 %v2015
      %2334 = vmatpush1.msra.mxu0 %v2014
      %2335 = vmatprep.subr.mxu0 %v2023
      %2336 = vmatpush1.msra.mxu0 %v2022
      %2337 = vmatprep.subr.mxu0 %v2031
      %2338 = vmatpush1.msra.mxu0 %v2030
      %2339 = vmatprep.subr.mxu0 %v2039
      %2340 = vmatpush1.msra.mxu0 %v2038
      %2341 = vmatprep.subr.mxu0 %v2047
      %2342 = vmatpush1.msra.mxu0 %v2046
      %2343 = vmatprep.subr.mxu0 %v2055
      %2344 = vmatpush1.msra.mxu0 %v2054
      %2345 = vmatprep.subr.mxu0 %v2063
      %2346 = vmatpush1.msra.mxu0 %v2062
      %2347 = vmatprep.subr.mxu0 %v2071
      %2348 = vmatpush1.msra.mxu0 %v2070
      %2349 = vmatprep.subr.mxu0 0.0
      %2350 = vmatpush1.msra.mxu0 0.0
      %2351 = vmatprep.subr.mxu0 0.0
      %2352 = vmatpush1.msra.mxu0 0.0
      %2353 = vmatprep.subr.mxu0 0.0
      %2354 = vmatpush1.msra.mxu0 0.0
      %2355 = vmatprep.subr.mxu0 0.0
      %2356 = vmatpush1.msra.mxu0 0.0
      %2357 = vmatprep.subr.mxu0 0.0
      %2358 = vmatpush1.msra.mxu0 0.0
      %2359 = vmatprep.mubr.f32.mxu0 %v2080
      %2360 = vmatmul.mubr.f32.gmra.mrb[0].mxu0 %v1854
      %v2361 = vpop.f32.mrb[0].mxu0
      %v2362 = vadd.f32 %v2076, %v2361
      %v2363 = vpop.f32.mrb[0].mxu0
      %v2364 = vadd.f32 %v2076, %v2363
      %2365 = vdwg.mxu0
      %v2366 = vld [vmem:[%s5] sm:$0xff]
      %v2368 = vlaneseq
      %v2369 = vshrl.u32 %v2368, 7
      %v2370 = vsub.s32 0, %v2369
      %v2371 = vrot.slane %v2366, %v2370
      %v2372 = vlaneseq
      %v2373 = vshrl.u32 %v2372, 7
      %v2374 = vsub.s32 1, %v2373
      %v2375 = vrot.slane %v2366, %v2374
      %v2376 = vlaneseq
      %v2377 = vshrl.u32 %v2376, 7
      %v2378 = vsub.s32 2, %v2377
      %v2379 = vrot.slane %v2366, %v2378
      %v2380 = vlaneseq
      %v2381 = vshrl.u32 %v2380, 7
      %v2382 = vsub.s32 3, %v2381
      %v2383 = vrot.slane %v2366, %v2382
      %v2384 = vlaneseq
      %v2385 = vshrl.u32 %v2384, 7
      %v2386 = vsub.s32 4, %v2385
      %v2387 = vrot.slane %v2366, %v2386
      %v2388 = vlaneseq
      %v2389 = vshrl.u32 %v2388, 7
      %v2390 = vsub.s32 5, %v2389
      %v2391 = vrot.slane %v2366, %v2390
      %v2392 = vlaneseq
      %v2393 = vshrl.u32 %v2392, 7
      %v2394 = vsub.s32 6, %v2393
      %v2395 = vrot.slane %v2366, %v2394
      %v2396 = vlaneseq
      %v2397 = vshrl.u32 %v2396, 7
      %v2398 = vsub.s32 7, %v2397
      %v2399 = vrot.slane %v2366, %v2398
      %v2408 = vmul.f32 %v2149, %v2371
      %v2409 = vmul.f32 %v2151, %v2375
      %v2410 = vmul.f32 %v2220, %v2379
      %v2411 = vmul.f32 %v2222, %v2383
      %v2412 = vmul.f32 %v2291, %v2387
      %v2413 = vmul.f32 %v2293, %v2391
      %v2414 = vmul.f32 %v2362, %v2395
      %v2415 = vmul.f32 %v2364, %v2399
      %v2416 = vadd.f32 %v2408, %v2409
      %v2417 = vadd.f32 %v2416, %v2410
      %v2418 = vadd.f32 %v2417, %v2411
      %v2419 = vadd.f32 %v2418, %v2412
      %v2420 = vadd.f32 %v2419, %v2413
      %v2421 = vadd.f32 %v2420, %v2414
      %v2422 = vadd.f32 %v2421, %v2415
      %2423 = vadd.xlane.f32.xlu0 %v2422
      %v2424 = vpop.xlane.xlu0 %2423
      %v2425 = vmul.f32 %v2424, 0.001953125
      %v2426 = vsub.f32 %v2149, %v2425
      %v2427 = vsub.f32 %v2151, %v2425
      %v2428 = vsub.f32 %v2220, %v2425
      %v2429 = vsub.f32 %v2222, %v2425
      %v2430 = vsub.f32 %v2291, %v2425
      %v2431 = vsub.f32 %v2293, %v2425
      %v2432 = vsub.f32 %v2362, %v2425
      %v2433 = vsub.f32 %v2364, %v2425
      %v2434 = vmul.f32 %v2426, %v2426
      %v2435 = vmul.f32 %v2427, %v2427
      %v2436 = vmul.f32 %v2428, %v2428
      %v2437 = vmul.f32 %v2429, %v2429
      %v2438 = vmul.f32 %v2430, %v2430
      %v2439 = vmul.f32 %v2431, %v2431
      %v2440 = vmul.f32 %v2432, %v2432
      %v2441 = vmul.f32 %v2433, %v2433
      %v2442 = vmul.f32 %v2434, %v2371
      %v2443 = vmul.f32 %v2435, %v2375
      %v2444 = vmul.f32 %v2436, %v2379
      %v2445 = vmul.f32 %v2437, %v2383
      %v2446 = vmul.f32 %v2438, %v2387
      %v2447 = vmul.f32 %v2439, %v2391
      %v2448 = vmul.f32 %v2440, %v2395
      %v2449 = vmul.f32 %v2441, %v2399
      %v2450 = vadd.f32 %v2442, %v2443
      %v2451 = vadd.f32 %v2450, %v2444
      %v2452 = vadd.f32 %v2451, %v2445
      %v2453 = vadd.f32 %v2452, %v2446
      %v2454 = vadd.f32 %v2453, %v2447
      %v2455 = vadd.f32 %v2454, %v2448
      %v2456 = vadd.f32 %v2455, %v2449
      %2457 = vadd.xlane.f32.xlu0 %v2456
      %v2458 = vpop.xlane.xlu0 %2457
      %v2459 = vmul.f32 %v2458, 0.001953125
      %v2460 = vadd.f32 %v2459, 1e-05
      %v2461 = vrsqrt.pop %v2460
      %v2462 = vmul.f32 %v2426, %v2461
      %v2463 = vmul.f32 %v2427, %v2461
      %v2464 = vmul.f32 %v2428, %v2461
      %v2465 = vmul.f32 %v2429, %v2461
      %v2466 = vmul.f32 %v2430, %v2461
      %v2467 = vmul.f32 %v2431, %v2461
      %v2468 = vmul.f32 %v2432, %v2461
      %v2469 = vmul.f32 %v2433, %v2461
      %v2470 = vld [vmem:[%s3] sm:$0xff]
      %2472 = vset.pattern.permute.xlu0 0
      %2473 = vperm.xlu0 %2472, %v2470
      %v2474 = vpop.permute.xlu0 %2473
      %v2476 = vmul.f32 %v2462, %v2474
      %v2477 = vmul.f32 %v2463, %v2474
      %v2478 = vmul.f32 %v2464, %v2474
      %v2479 = vmul.f32 %v2465, %v2474
      %v2480 = vmul.f32 %v2466, %v2474
      %v2481 = vmul.f32 %v2467, %v2474
      %v2482 = vmul.f32 %v2468, %v2474
      %v2483 = vmul.f32 %v2469, %v2474
      %v2484 = vld [vmem:[%s4] sm:$0xff]
      %2486 = vset.pattern.permute.xlu0 0
      %2487 = vperm.xlu0 %2486, %v2484
      %v2488 = vpop.permute.xlu0 %2487
      %v2490 = vadd.f32 %v2476, %v2488
      %v2491 = vadd.f32 %v2477, %v2488
      %v2492 = vadd.f32 %v2478, %v2488
      %v2493 = vadd.f32 %v2479, %v2488
      %v2494 = vadd.f32 %v2480, %v2488
      %v2495 = vadd.f32 %v2481, %v2488
      %v2496 = vadd.f32 %v2482, %v2488
      %v2497 = vadd.f32 %v2483, %v2488
      %vm2498 = vcmp.ge.f32.partialorder %v2490, 0.0
      %vm2499 = vcmp.ge.f32.partialorder %v2491, 0.0
      %vm2500 = vcmp.ge.f32.partialorder %v2492, 0.0
      %vm2501 = vcmp.ge.f32.partialorder %v2493, 0.0
      %vm2502 = vcmp.ge.f32.partialorder %v2494, 0.0
      %vm2503 = vcmp.ge.f32.partialorder %v2495, 0.0
      %vm2504 = vcmp.ge.f32.partialorder %v2496, 0.0
      %vm2505 = vcmp.ge.f32.partialorder %v2497, 0.0
      %v2506 = vmul.f32 %v2490, 0.01
      %v2507 = vmul.f32 %v2491, 0.01
      %v2508 = vmul.f32 %v2492, 0.01
      %v2509 = vmul.f32 %v2493, 0.01
      %v2510 = vmul.f32 %v2494, 0.01
      %v2511 = vmul.f32 %v2495, 0.01
      %v2512 = vmul.f32 %v2496, 0.01
      %v2513 = vmul.f32 %v2497, 0.01
      %v2514 = vsel %vm2498, %v2490, %v2506
      %v2515 = vsel %vm2499, %v2491, %v2507
      %v2516 = vsel %vm2500, %v2492, %v2508
      %v2517 = vsel %vm2501, %v2493, %v2509
      %v2518 = vsel %vm2502, %v2494, %v2510
      %v2519 = vsel %vm2503, %v2495, %v2511
      %v2520 = vsel %vm2504, %v2496, %v2512
      %v2521 = vsel %vm2505, %v2497, %v2513
      %2522 = vst [vmem:[%s251] sm:$0xff] %v2514
      %2523 = vst [vmem:[%s251 + $0x8] sm:$0xff] %v2515
      %2524 = vst [vmem:[%s251 + $0x10] sm:$0xff] %v2516
      %2525 = vst [vmem:[%s251 + $0x18] sm:$0xff] %v2517
      %2526 = vst [vmem:[%s251 + $0x20] sm:$0xff] %v2518
      %2527 = vst [vmem:[%s251 + $0x28] sm:$0xff] %v2519
      %2528 = vst [vmem:[%s251 + $0x30] sm:$0xff] %v2520
      %2529 = vst [vmem:[%s251 + $0x38] sm:$0xff] %v2521
      %p2530 = scmp.lt.s32.totalorder %s17, 1
      %s2531 = scalar_select %p2530, %s17, 1
      %s2532 = smul.addr %s2531, 8
      %s2533 = smul.addr %s2532, 8
      %s2534 = scalar_lea.vmem %s6, %s2533
      // Predicated region
      $region45: #{bottleneck_forward.3} parent=43 // pred_check
        %p2535 = pneg %p166
      $region46: #{bottleneck_forward.3} parent=43 // pred_check_branch
        %2537 = sbr.rel (%p2535) target = $region48
      $region47: #{bottleneck_forward.3} parent=43 // pred_region
        _
      $region48: #{bottleneck_forward.3} parent=43 // pred_fallthru
        _
    $region44: #{bottleneck_forward.3} parent=5 // pred_fallthru
      _
    %p2538 = scmp.le.s32.totalorder 2, %s12
    // Predicated region
    $region49: #{bottleneck_forward.3} parent=5 // pred_check
      %p2539 = pneg %p2538
    $region50: #{bottleneck_forward.3} parent=5 // pred_check_branch
      %2541 = sbr.rel (%p2539) target = $region52
    $region51: #{bottleneck_forward.3} parent=5 // pred_region
      %s2542 = ssub.s32 %s12, 2
      // Predicated region
      $region53: #{bottleneck_forward.3} parent=51 // pred_check
        %p2543 = pneg %p172
      $region54: #{bottleneck_forward.3} parent=51 // pred_check_branch
        %2545 = sbr.rel (%p2543) target = $region56
      $region55: #{bottleneck_forward.3} parent=51 // pred_region
        %p2546 = scmp.lt.s32.totalorder %s18, 1
        %s2547 = scalar_select %p2546, %s18, 1
        %s2548 = smul.addr %s2547, 8
        %s2549 = smul.addr %s2548, 8
        %s2550 = scalar_lea.vmem %s6, %s2549
      $region56: #{bottleneck_forward.3} parent=51 // pred_fallthru
        _
    $region52: #{bottleneck_forward.3} parent=5 // pred_fallthru
      _
  $region6: #{bottleneck_forward.3} parent=0 // loop_footer
    %s16 = sadd.s32 1, %s12
  $region7: #{bottleneck_forward.3} parent=0 // loop_footer_branch
    %11 = sbr.rel target = $region3
  $region8: #{bottleneck_forward.3} parent=0 // loop_exit
    _

</llo_original>
